<compile_context>
chip_gen: v5e
topology: v5e:2x2
jax: 0.10.0
libtpu: 0.0.40
codegen_flags: <defaults>
</compile_context>

<pallas_src>
import functools

import numpy as np
import jax
import jax.numpy as jnp
from jax.experimental import pallas as pl
from jax.experimental.pallas import tpu as pltpu

# ---------------- model hyper-parameters (small, synthetic) ----------------
PATCH = 8          # encoder.patch_size
C_IN = 3           # image channels
D_MODEL = 32       # encoder hidden dim
HEADS = 2
HEAD_DIM = D_MODEL // HEADS
DEPTH = 2          # transformer blocks
MLP_DIM = 4 * D_MODEL
N_CLS = 4
DISTILLED = 0      # encoder.distilled -> num_extra_tokens = 1
LN_EPS = 1e-6


# ------------------------------ fused Pallas kernel ------------------------------
def _segmenter_kernel(patches_ref, patch_w_ref, pos_bias_ref,
                      ln1_g_ref, ln1_b_ref, qkv_w_ref, qkv_b_ref,
                      proj_w_ref, proj_b_ref, ln2_g_ref, ln2_b_ref,
                      fc1_w_ref, fc1_b_ref, fc2_w_ref, fc2_b_ref,
                      lnf_g_ref, lnf_b_ref, head_wt_ref, head_bt_ref,
                      interp_ref, out_ref, *, n_real, n_pad):
    """One grid step == one image: full encoder + decoder, everything VMEM-resident."""
    f32 = jnp.float32

    def layernorm(x, g, b):
        mu = jnp.mean(x, axis=-1, keepdims=True)
        xc = x - mu
        var = jnp.mean(xc * xc, axis=-1, keepdims=True)
        return xc * jax.lax.rsqrt(var + LN_EPS) * g + b

    # --- patch embedding + cls token + positional embedding, as one matmul + add ---
    # patches_ref row layout: [cls slot (zeros)] [gh*gw patch rows] [pad rows (zeros)]
    # pos_bias rows:          [cls + pos[0]]     [patch_b + pos[i]] [zeros]
    x = jnp.dot(patches_ref[0], patch_w_ref[...], preferred_element_type=f32)
    x = x + pos_bias_ref[...]                                    # (n_pad, D)

    # attention mask: pad tokens must never act as keys
    key_mask = jax.lax.broadcasted_iota(jnp.int32, (n_pad, n_pad), 1) < n_real

    scale = HEAD_DIM ** -0.5
    for d in range(DEPTH):                                       # DEPTH=2, statically unrolled
        # ---------------- MHSA (pre-LN) ----------------
        h = layernorm(x, ln1_g_ref[d], ln1_b_ref[d])
        qkv = jnp.dot(h, qkv_w_ref[d], preferred_element_type=f32) + qkv_b_ref[d]
        proj_w = proj_w_ref[d]
        o = None
        for hd in range(HEADS):
            lo = hd * HEAD_DIM
            q = qkv[:, lo:lo + HEAD_DIM]
            k = qkv[:, D_MODEL + lo:D_MODEL + lo + HEAD_DIM]
            v = qkv[:, 2 * D_MODEL + lo:2 * D_MODEL + lo + HEAD_DIM]
            s = jax.lax.dot_general(q, k, (((1,), (1,)), ((), ())),
                                    preferred_element_type=f32) * scale
            s = jnp.where(key_mask, s, -1e30)
            s = s - jnp.max(s, axis=-1, keepdims=True)
            p = jnp.exp(s)
            p = p * pl.reciprocal(jnp.sum(p, axis=-1, keepdims=True), approx=True)
            attn = jnp.dot(p, v, preferred_element_type=f32)      # (n_pad, HEAD_DIM)
            # fold the output projection in per head (== concat(heads) @ proj_w)
            contrib = jnp.dot(attn, proj_w[lo:lo + HEAD_DIM, :],
                              preferred_element_type=f32)
            o = contrib if o is None else o + contrib
        x = x + o + proj_b_ref[d]                                 # residual

        # ---------------- MLP (pre-LN) ----------------
        h = layernorm(x, ln2_g_ref[d], ln2_b_ref[d])
        h = jnp.dot(h, fc1_w_ref[d], preferred_element_type=f32) + fc1_b_ref[d]
        # TODO(synk): PyTorch nn.GELU uses the exact erf form; the tanh approximation is
        # used here because it lowers cleanly to the TPU EUP.
        c = 0.7978845608028654  # sqrt(2/pi)
        h = 0.5 * h * (1.0 + jnp.tanh(c * (h + 0.044715 * h * h * h)))
        h = jnp.dot(h, fc2_w_ref[d], preferred_element_type=f32) + fc2_b_ref[d]
        x = x + h                                                 # residual

    xf = layernorm(x, lnf_g_ref[...], lnf_b_ref[...])

    # --- decoder (DecoderLinear) + bilinear upsample (align_corners=True) ---
    feats = xf[1:n_real, :]                                       # drop cls + pad rows -> (NP, D)
    grid_cls = jax.lax.dot_general(head_wt_ref[...], feats, (((1,), (1,)), ((), ())),
                                   preferred_element_type=f32) + head_bt_ref[...]  # (n_cls, NP)
    # out[cls, h*W + w] = sum_{gi,gj} grid_cls[cls, gi*gw+gj] * Wh[h,gi] * Ww[w,gj]
    out_ref[0] = jnp.dot(grid_cls, interp_ref[...], preferred_element_type=f32)    # (n_cls, H*W)


# ------------------------------ parameter init ------------------------------
def init_params(key, num_patches):
    keys = iter(jax.random.split(key, 16))

    def w(shape, scale=0.02):
        return scale * jax.random.normal(next(keys), shape, jnp.float32)

    d3 = 3 * D_MODEL
    return {
        "patch_w": w((C_IN * PATCH * PATCH, D_MODEL)),   # Conv2d(C, D, P, stride=P) flattened
        "patch_b": jnp.zeros((D_MODEL,), jnp.float32),
        "cls_token": w((1, 1, D_MODEL)),
        "pos_embed": w((1, 1 + num_patches, D_MODEL)),
        # per-block weights stacked along a leading DEPTH axis (indexed statically in-kernel)
        "ln1_g": jnp.ones((DEPTH, 1, D_MODEL), jnp.float32),
        "ln1_b": jnp.zeros((DEPTH, 1, D_MODEL), jnp.float32),
        "qkv_w": w((DEPTH, D_MODEL, d3)),
        "qkv_b": jnp.zeros((DEPTH, 1, d3), jnp.float32),
        "proj_w": w((DEPTH, D_MODEL, D_MODEL)),
        "proj_b": jnp.zeros((DEPTH, 1, D_MODEL), jnp.float32),
        "ln2_g": jnp.ones((DEPTH, 1, D_MODEL), jnp.float32),
        "ln2_b": jnp.zeros((DEPTH, 1, D_MODEL), jnp.float32),
        "fc1_w": w((DEPTH, D_MODEL, MLP_DIM)),
        "fc1_b": jnp.zeros((DEPTH, 1, MLP_DIM), jnp.float32),
        "fc2_w": w((DEPTH, MLP_DIM, D_MODEL)),
        "fc2_b": jnp.zeros((DEPTH, 1, D_MODEL), jnp.float32),
        "ln_g": jnp.ones((D_MODEL,), jnp.float32),
        "ln_b": jnp.zeros((D_MODEL,), jnp.float32),
        "head_w": w((D_MODEL, N_CLS)),                   # DecoderLinear head
        "head_b": jnp.zeros((N_CLS,), jnp.float32),
    }


# -------------------- bilinear interpolation (align_corners=True) -----------
def _interp_matrix(n_in, n_out):
    """Row-stochastic numpy matrix W s.t. out = W @ in reproduces 1-D linear interp."""
    if n_in == 1:
        return np.ones((n_out, 1), np.float32)
    src = np.arange(n_out, dtype=np.float64) * (n_in - 1) / (n_out - 1)
    lo = np.clip(np.floor(src).astype(np.int64), 0, n_in - 1)
    hi = np.clip(lo + 1, 0, n_in - 1)
    frac = (src - lo).astype(np.float32)
    m = np.zeros((n_out, n_in), np.float32)
    m[np.arange(n_out), lo] += 1.0 - frac
    m[np.arange(n_out), hi] += frac
    return m


def _full_spec(arr):
    z = (0,) * arr.ndim
    return pl.BlockSpec(arr.shape, lambda b, z=z: z)


# ------------------------------- forward pass -------------------------------
def segmenter_forward(params, im):
    B, C, H_ori, W_ori = im.shape
    P = PATCH
    # padding(im, patch_size): zero-pad bottom/right to multiples of patch size
    pad_h = (P - H_ori % P) % P
    pad_w = (P - W_ori % P) % P
    im = jnp.pad(im, ((0, 0), (0, 0), (0, pad_h), (0, pad_w)))
    H, W = im.shape[2], im.shape[3]
    gh, gw = H // P, W // P
    num_patches = gh * gw
    n_real = 1 + num_patches                     # cls + patch tokens (distilled = 0)
    n_pad = ((n_real + 7) // 8) * 8              # pad token rows to a multiple of 8 sublanes

    # Conv2d(k=P, s=P) == unfold + matmul; pre-pad rows to the in-kernel token layout
    patches = (im.reshape(B, C, gh, P, gw, P)
                 .transpose(0, 2, 4, 1, 3, 5)
                 .reshape(B, num_patches, C * P * P))
    patches_pad = jnp.pad(patches, ((0, 0), (1, n_pad - n_real), (0, 0)))

    # row 0: cls + pos[0]; rows 1..NP: patch bias + pos[i]; pad rows: 0
    pos = params["pos_embed"][0]                                   # (1+NP, D)
    pos_bias = jnp.concatenate(
        [params["cls_token"].reshape(1, D_MODEL) + pos[:1],
         pos[1:] + params["patch_b"][None, :],
         jnp.zeros((n_pad - n_real, D_MODEL), jnp.float32)], axis=0)

    # F.interpolate(bilinear, align_corners=True) folded into a single (NP, H*W) matrix
    Wh = _interp_matrix(gh, H)                                     # (H, gh)
    Ww = _interp_matrix(gw, W)                                     # (W, gw)
    interp = jnp.asarray(
        np.einsum("hi,wj->ijhw", Wh, Ww).reshape(num_patches, H * W).astype(np.float32))

    head_wt = params["head_w"].T                                   # (n_cls, D)
    head_bt = params["head_b"].reshape(N_CLS, 1)

    weight_args = [
        params["patch_w"], pos_bias,
        params["ln1_g"], params["ln1_b"],
        params["qkv_w"], params["qkv_b"],
        params["proj_w"], params["proj_b"],
        params["ln2_g"], params["ln2_b"],
        params["fc1_w"], params["fc1_b"],
        params["fc2_w"], params["fc2_b"],
        params["ln_g"].reshape(1, D_MODEL), params["ln_b"].reshape(1, D_MODEL),
        head_wt, head_bt, interp,
    ]

    out = pl.pallas_call(
        functools.partial(_segmenter_kernel, n_real=n_real, n_pad=n_pad),
        out_shape=jax.ShapeDtypeStruct((B, N_CLS, H * W), jnp.float32),
        grid=(B,),
        in_specs=[pl.BlockSpec((1, n_pad, C * P * P), lambda b: (b, 0, 0))]
                 + [_full_spec(a) for a in weight_args],
        out_specs=pl.BlockSpec((1, N_CLS, H * W), lambda b: (b, 0, 0)),
        compiler_params=pltpu.CompilerParams(
            dimension_semantics=("parallel",)),            # batch -> both TCs on v7x
    )(patches_pad, *weight_args)

    # lane-dense [B, n_cls, H*W] -> NCHW, then unpadding: crop back to original size
    masks = out.reshape(B, N_CLS, H, W)[:, :, :H_ori, :W_ori]
    return masks


# ------------------------------------ main -----------------------------------
if __name__ == "__main__":
    key = jax.random.PRNGKey(0)
    pkey, xkey = jax.random.split(key)

    B, H_ori, W_ori = 2, 28, 28                    # not a multiple of PATCH -> exercises pad/unpad
    H_pad = ((H_ori + PATCH - 1) // PATCH) * PATCH
    W_pad = ((W_ori + PATCH - 1) // PATCH) * PATCH
    num_patches = (H_pad // PATCH) * (W_pad // PATCH)

    params = init_params(pkey, num_patches)
    im = jax.random.normal(xkey, (B, C_IN, H_ori, W_ori), jnp.float32)

    out = jax.jit(segmenter_forward)(params, im)
    out = jax.block_until_ready(out)

    assert out.shape == (B, N_CLS, H_ori, W_ori), out.shape
    assert out.dtype == jnp.float32
    assert bool(jnp.all(jnp.isfinite(out)))
    print("KERNEL_OK")
</pallas_src>

<mosaic_0001>
module attributes {stable_mosaic.version = 11 : i64} {
  func.func @_segmenter_kernel(%arg0: i32, %arg1: memref<1x24x192xf32, #tpu.memory_space<vmem>>, %arg2: memref<192x32xf32, #tpu.memory_space<vmem>>, %arg3: memref<24x32xf32, #tpu.memory_space<vmem>>, %arg4: memref<2x1x32xf32, #tpu.memory_space<vmem>>, %arg5: memref<2x1x32xf32, #tpu.memory_space<vmem>>, %arg6: memref<2x32x96xf32, #tpu.memory_space<vmem>>, %arg7: memref<2x1x96xf32, #tpu.memory_space<vmem>>, %arg8: memref<2x32x32xf32, #tpu.memory_space<vmem>>, %arg9: memref<2x1x32xf32, #tpu.memory_space<vmem>>, %arg10: memref<2x1x32xf32, #tpu.memory_space<vmem>>, %arg11: memref<2x1x32xf32, #tpu.memory_space<vmem>>, %arg12: memref<2x32x128xf32, #tpu.memory_space<vmem>>, %arg13: memref<2x1x128xf32, #tpu.memory_space<vmem>>, %arg14: memref<2x128x32xf32, #tpu.memory_space<vmem>>, %arg15: memref<2x1x32xf32, #tpu.memory_space<vmem>>, %arg16: memref<1x32xf32, #tpu.memory_space<vmem>>, %arg17: memref<1x32xf32, #tpu.memory_space<vmem>>, %arg18: memref<4x32xf32, #tpu.memory_space<vmem>>, %arg19: memref<4x1xf32, #tpu.memory_space<vmem>>, %arg20: memref<16x1024xf32, #tpu.memory_space<vmem>>, %arg21: memref<1x4x1024xf32, #tpu.memory_space<vmem>>) attributes {dimension_semantics = [#tpu.dimension_semantics<parallel>], iteration_bounds = array<i64: 2>, scalar_prefetch = 0 : i64, scratch_operands = 0 : i64, tpu.core_type = #tpu.core_type<tc>, window_params = [{transform_indices = @transform_0, window_bounds = array<i64: 1, 24, 192>}, {pipeline_mode = #tpu.pipeline_mode<synchronous>, transform_indices = @transform_1, window_bounds = array<i64: 192, 32>}, {pipeline_mode = #tpu.pipeline_mode<synchronous>, transform_indices = @transform_2, window_bounds = array<i64: 24, 32>}, {pipeline_mode = #tpu.pipeline_mode<synchronous>, transform_indices = @transform_3, window_bounds = array<i64: 2, 1, 32>}, {pipeline_mode = #tpu.pipeline_mode<synchronous>, transform_indices = @transform_4, window_bounds = array<i64: 2, 1, 32>}, {pipeline_mode = #tpu.pipeline_mode<synchronous>, transform_indices = @transform_5, window_bounds = array<i64: 2, 32, 96>}, {pipeline_mode = #tpu.pipeline_mode<synchronous>, transform_indices = @transform_6, window_bounds = array<i64: 2, 1, 96>}, {pipeline_mode = #tpu.pipeline_mode<synchronous>, transform_indices = @transform_7, window_bounds = array<i64: 2, 32, 32>}, {pipeline_mode = #tpu.pipeline_mode<synchronous>, transform_indices = @transform_8, window_bounds = array<i64: 2, 1, 32>}, {pipeline_mode = #tpu.pipeline_mode<synchronous>, transform_indices = @transform_9, window_bounds = array<i64: 2, 1, 32>}, {pipeline_mode = #tpu.pipeline_mode<synchronous>, transform_indices = @transform_10, window_bounds = array<i64: 2, 1, 32>}, {pipeline_mode = #tpu.pipeline_mode<synchronous>, transform_indices = @transform_11, window_bounds = array<i64: 2, 32, 128>}, {pipeline_mode = #tpu.pipeline_mode<synchronous>, transform_indices = @transform_12, window_bounds = array<i64: 2, 1, 128>}, {pipeline_mode = #tpu.pipeline_mode<synchronous>, transform_indices = @transform_13, window_bounds = array<i64: 2, 128, 32>}, {pipeline_mode = #tpu.pipeline_mode<synchronous>, transform_indices = @transform_14, window_bounds = array<i64: 2, 1, 32>}, {pipeline_mode = #tpu.pipeline_mode<synchronous>, transform_indices = @transform_15, window_bounds = array<i64: 1, 32>}, {pipeline_mode = #tpu.pipeline_mode<synchronous>, transform_indices = @transform_16, window_bounds = array<i64: 1, 32>}, {pipeline_mode = #tpu.pipeline_mode<synchronous>, transform_indices = @transform_17, window_bounds = array<i64: 4, 32>}, {pipeline_mode = #tpu.pipeline_mode<synchronous>, transform_indices = @transform_18, window_bounds = array<i64: 4, 1>}, {pipeline_mode = #tpu.pipeline_mode<synchronous>, transform_indices = @transform_19, window_bounds = array<i64: 16, 1024>}, {transform_indices = @transform_20, window_bounds = array<i64: 1, 4, 1024>}]} {
    %c0 = arith.constant 0 : index
    %c0_0 = arith.constant 0 : index
    %c0_1 = arith.constant 0 : index
    %0 = vector.load %arg1[%c0, %c0_0, %c0_1] : memref<1x24x192xf32, #tpu.memory_space<vmem>>, vector<1x24x192xf32>
    %1 = vector.shape_cast %0 : vector<1x24x192xf32> to vector<24x192xf32>
    %c0_2 = arith.constant 0 : index
    %c0_3 = arith.constant 0 : index
    %2 = vector.load %arg2[%c0_2, %c0_3] : memref<192x32xf32, #tpu.memory_space<vmem>>, vector<192x32xf32>
    %cst = arith.constant dense<0.000000e+00> : vector<24x32xf32>
    %3 = tpu.matmul %1, %2, %cst {dimension_numbers = #tpu.dot_dimension_numbers<[1], [0], [0], [1], [0, 0, 1, 1], [], []>} : vector<24x192xf32>, vector<192x32xf32>, vector<24x32xf32> -> vector<24x32xf32>
    %c0_4 = arith.constant 0 : index
    %c0_5 = arith.constant 0 : index
    %4 = vector.load %arg3[%c0_4, %c0_5] : memref<24x32xf32, #tpu.memory_space<vmem>>, vector<24x32xf32>
    %5 = arith.addf %3, %4 : vector<24x32xf32>
    %6 = tpu.iota {dimensions = array<i32: 1>} : vector<24x24xi32>
    %c17_i32 = arith.constant 17 : i32
    %7 = vector.broadcast %c17_i32 : i32 to vector<24x24xi32>
    %8 = arith.cmpi slt, %6, %7 : vector<24x24xi32>
    %c0_6 = arith.constant 0 : index
    %c0_7 = arith.constant 0 : index
    %c0_8 = arith.constant 0 : index
    %9 = vector.load %arg4[%c0_6, %c0_7, %c0_8] : memref<2x1x32xf32, #tpu.memory_space<vmem>>, vector<1x1x32xf32>
    %10 = vector.shape_cast %9 : vector<1x1x32xf32> to vector<1x32xf32>
    %c0_9 = arith.constant 0 : index
    %c0_10 = arith.constant 0 : index
    %c0_11 = arith.constant 0 : index
    %11 = vector.load %arg5[%c0_9, %c0_10, %c0_11] : memref<2x1x32xf32, #tpu.memory_space<vmem>>, vector<1x1x32xf32>
    %12 = vector.shape_cast %11 : vector<1x1x32xf32> to vector<1x32xf32>
    %cst_12 = arith.constant dense<0.000000e+00> : vector<24xf32>
    %13 = vector.multi_reduction <add>, %5, %cst_12 [1] : vector<24x32xf32> to vector<24xf32>
    %14 = vector.shape_cast %13 : vector<24xf32> to vector<24x1xf32>
    %cst_13 = arith.constant 3.200000e+01 : f32
    %15 = vector.broadcast %cst_13 : f32 to vector<24x1xf32>
    %16 = arith.divf %14, %15 : vector<24x1xf32>
    %17 = vector.broadcast %16 : vector<24x1xf32> to vector<24x32xf32>
    %18 = arith.subf %5, %17 : vector<24x32xf32>
    %19 = arith.mulf %18, %18 : vector<24x32xf32>
    %cst_14 = arith.constant dense<0.000000e+00> : vector<24xf32>
    %20 = vector.multi_reduction <add>, %19, %cst_14 [1] : vector<24x32xf32> to vector<24xf32>
    %21 = vector.shape_cast %20 : vector<24xf32> to vector<24x1xf32>
    %cst_15 = arith.constant 3.200000e+01 : f32
    %22 = vector.broadcast %cst_15 : f32 to vector<24x1xf32>
    %23 = arith.divf %21, %22 : vector<24x1xf32>
    %cst_16 = arith.constant 9.99999997E-7 : f32
    %24 = vector.broadcast %cst_16 : f32 to vector<24x1xf32>
    %25 = arith.addf %23, %24 : vector<24x1xf32>
    %26 = math.rsqrt %25 : vector<24x1xf32>
    %27 = vector.broadcast %26 : vector<24x1xf32> to vector<24x32xf32>
    %28 = arith.mulf %18, %27 : vector<24x32xf32>
    %29 = vector.broadcast %10 : vector<1x32xf32> to vector<24x32xf32>
    %30 = arith.mulf %28, %29 : vector<24x32xf32>
    %31 = vector.broadcast %12 : vector<1x32xf32> to vector<24x32xf32>
    %32 = arith.addf %30, %31 : vector<24x32xf32>
    %c0_17 = arith.constant 0 : index
    %c0_18 = arith.constant 0 : index
    %c0_19 = arith.constant 0 : index
    %33 = vector.load %arg6[%c0_17, %c0_18, %c0_19] : memref<2x32x96xf32, #tpu.memory_space<vmem>>, vector<1x32x96xf32>
    %34 = vector.shape_cast %33 : vector<1x32x96xf32> to vector<32x96xf32>
    %cst_20 = arith.constant dense<0.000000e+00> : vector<24x96xf32>
    %35 = tpu.matmul %32, %34, %cst_20 {dimension_numbers = #tpu.dot_dimension_numbers<[1], [0], [0], [1], [0, 0, 1, 1], [], []>} : vector<24x32xf32>, vector<32x96xf32>, vector<24x96xf32> -> vector<24x96xf32>
    %c0_21 = arith.constant 0 : index
    %c0_22 = arith.constant 0 : index
    %c0_23 = arith.constant 0 : index
    %36 = vector.load %arg7[%c0_21, %c0_22, %c0_23] : memref<2x1x96xf32, #tpu.memory_space<vmem>>, vector<1x1x96xf32>
    %37 = vector.shape_cast %36 : vector<1x1x96xf32> to vector<1x96xf32>
    %38 = vector.broadcast %37 : vector<1x96xf32> to vector<24x96xf32>
    %39 = arith.addf %35, %38 : vector<24x96xf32>
    %c0_24 = arith.constant 0 : index
    %c0_25 = arith.constant 0 : index
    %c0_26 = arith.constant 0 : index
    %40 = vector.load %arg8[%c0_24, %c0_25, %c0_26] : memref<2x32x32xf32, #tpu.memory_space<vmem>>, vector<1x32x32xf32>
    %41 = vector.shape_cast %40 : vector<1x32x32xf32> to vector<32x32xf32>
    %42 = vector.extract_strided_slice %39 {offsets = [0, 0], sizes = [24, 16], strides = [1, 1]} : vector<24x96xf32> to vector<24x16xf32>
    %43 = vector.extract_strided_slice %39 {offsets = [0, 32], sizes = [24, 16], strides = [1, 1]} : vector<24x96xf32> to vector<24x16xf32>
    %44 = vector.extract_strided_slice %39 {offsets = [0, 64], sizes = [24, 16], strides = [1, 1]} : vector<24x96xf32> to vector<24x16xf32>
    %cst_27 = arith.constant dense<0.000000e+00> : vector<24x24xf32>
    %45 = tpu.matmul %42, %43, %cst_27 {dimension_numbers = #tpu.dot_dimension_numbers<[1], [1], [0], [0], [0, 0, 1, 0], [], []>} : vector<24x16xf32>, vector<24x16xf32>, vector<24x24xf32> -> vector<24x24xf32>
    %cst_28 = arith.constant 2.500000e-01 : f32
    %46 = vector.broadcast %cst_28 : f32 to vector<24x24xf32>
    %47 = arith.mulf %45, %46 : vector<24x24xf32>
    %cst_29 = arith.constant -1.000000e+30 : f32
    %48 = vector.broadcast %cst_29 : f32 to vector<24x24xf32>
    %49 = arith.select %8, %47, %48 : vector<24x24xi1>, vector<24x24xf32>
    %cst_30 = arith.constant dense<0xFF800000> : vector<24xf32>
    %50 = vector.multi_reduction <maximumf>, %49, %cst_30 [1] : vector<24x24xf32> to vector<24xf32>
    %51 = vector.shape_cast %50 : vector<24xf32> to vector<24x1xf32>
    %52 = vector.broadcast %51 : vector<24x1xf32> to vector<24x24xf32>
    %53 = arith.subf %49, %52 : vector<24x24xf32>
    %54 = math.exp %53 : vector<24x24xf32>
    %cst_31 = arith.constant dense<0.000000e+00> : vector<24xf32>
    %55 = vector.multi_reduction <add>, %54, %cst_31 [1] : vector<24x24xf32> to vector<24xf32>
    %56 = vector.shape_cast %55 : vector<24xf32> to vector<24x1xf32>
    %57 = tpu.reciprocal %56 {approx = true} : vector<24x1xf32> -> vector<24x1xf32>
    %58 = vector.broadcast %57 : vector<24x1xf32> to vector<24x24xf32>
    %59 = arith.mulf %54, %58 : vector<24x24xf32>
    %cst_32 = arith.constant dense<0.000000e+00> : vector<24x16xf32>
    %60 = tpu.matmul %59, %44, %cst_32 {dimension_numbers = #tpu.dot_dimension_numbers<[1], [0], [0], [1], [0, 0, 1, 1], [], []>} : vector<24x24xf32>, vector<24x16xf32>, vector<24x16xf32> -> vector<24x16xf32>
    %61 = vector.extract_strided_slice %41 {offsets = [0, 0], sizes = [16, 32], strides = [1, 1]} : vector<32x32xf32> to vector<16x32xf32>
    %cst_33 = arith.constant dense<0.000000e+00> : vector<24x32xf32>
    %62 = tpu.matmul %60, %61, %cst_33 {dimension_numbers = #tpu.dot_dimension_numbers<[1], [0], [0], [1], [0, 0, 1, 1], [], []>} : vector<24x16xf32>, vector<16x32xf32>, vector<24x32xf32> -> vector<24x32xf32>
    %63 = vector.extract_strided_slice %39 {offsets = [0, 16], sizes = [24, 16], strides = [1, 1]} : vector<24x96xf32> to vector<24x16xf32>
    %64 = vector.extract_strided_slice %39 {offsets = [0, 48], sizes = [24, 16], strides = [1, 1]} : vector<24x96xf32> to vector<24x16xf32>
    %65 = vector.extract_strided_slice %39 {offsets = [0, 80], sizes = [24, 16], strides = [1, 1]} : vector<24x96xf32> to vector<24x16xf32>
    %cst_34 = arith.constant dense<0.000000e+00> : vector<24x24xf32>
    %66 = tpu.matmul %63, %64, %cst_34 {dimension_numbers = #tpu.dot_dimension_numbers<[1], [1], [0], [0], [0, 0, 1, 0], [], []>} : vector<24x16xf32>, vector<24x16xf32>, vector<24x24xf32> -> vector<24x24xf32>
    %cst_35 = arith.constant 2.500000e-01 : f32
    %67 = vector.broadcast %cst_35 : f32 to vector<24x24xf32>
    %68 = arith.mulf %66, %67 : vector<24x24xf32>
    %cst_36 = arith.constant -1.000000e+30 : f32
    %69 = vector.broadcast %cst_36 : f32 to vector<24x24xf32>
    %70 = arith.select %8, %68, %69 : vector<24x24xi1>, vector<24x24xf32>
    %cst_37 = arith.constant dense<0xFF800000> : vector<24xf32>
    %71 = vector.multi_reduction <maximumf>, %70, %cst_37 [1] : vector<24x24xf32> to vector<24xf32>
    %72 = vector.shape_cast %71 : vector<24xf32> to vector<24x1xf32>
    %73 = vector.broadcast %72 : vector<24x1xf32> to vector<24x24xf32>
    %74 = arith.subf %70, %73 : vector<24x24xf32>
    %75 = math.exp %74 : vector<24x24xf32>
    %cst_38 = arith.constant dense<0.000000e+00> : vector<24xf32>
    %76 = vector.multi_reduction <add>, %75, %cst_38 [1] : vector<24x24xf32> to vector<24xf32>
    %77 = vector.shape_cast %76 : vector<24xf32> to vector<24x1xf32>
    %78 = tpu.reciprocal %77 {approx = true} : vector<24x1xf32> -> vector<24x1xf32>
    %79 = vector.broadcast %78 : vector<24x1xf32> to vector<24x24xf32>
    %80 = arith.mulf %75, %79 : vector<24x24xf32>
    %cst_39 = arith.constant dense<0.000000e+00> : vector<24x16xf32>
    %81 = tpu.matmul %80, %65, %cst_39 {dimension_numbers = #tpu.dot_dimension_numbers<[1], [0], [0], [1], [0, 0, 1, 1], [], []>} : vector<24x24xf32>, vector<24x16xf32>, vector<24x16xf32> -> vector<24x16xf32>
    %82 = vector.extract_strided_slice %41 {offsets = [16, 0], sizes = [16, 32], strides = [1, 1]} : vector<32x32xf32> to vector<16x32xf32>
    %cst_40 = arith.constant dense<0.000000e+00> : vector<24x32xf32>
    %83 = tpu.matmul %81, %82, %cst_40 {dimension_numbers = #tpu.dot_dimension_numbers<[1], [0], [0], [1], [0, 0, 1, 1], [], []>} : vector<24x16xf32>, vector<16x32xf32>, vector<24x32xf32> -> vector<24x32xf32>
    %84 = arith.addf %62, %83 : vector<24x32xf32>
    %85 = arith.addf %5, %84 : vector<24x32xf32>
    %c0_41 = arith.constant 0 : index
    %c0_42 = arith.constant 0 : index
    %c0_43 = arith.constant 0 : index
    %86 = vector.load %arg9[%c0_41, %c0_42, %c0_43] : memref<2x1x32xf32, #tpu.memory_space<vmem>>, vector<1x1x32xf32>
    %87 = vector.shape_cast %86 : vector<1x1x32xf32> to vector<1x32xf32>
    %88 = vector.broadcast %87 : vector<1x32xf32> to vector<24x32xf32>
    %89 = arith.addf %85, %88 : vector<24x32xf32>
    %c0_44 = arith.constant 0 : index
    %c0_45 = arith.constant 0 : index
    %c0_46 = arith.constant 0 : index
    %90 = vector.load %arg10[%c0_44, %c0_45, %c0_46] : memref<2x1x32xf32, #tpu.memory_space<vmem>>, vector<1x1x32xf32>
    %91 = vector.shape_cast %90 : vector<1x1x32xf32> to vector<1x32xf32>
    %c0_47 = arith.constant 0 : index
    %c0_48 = arith.constant 0 : index
    %c0_49 = arith.constant 0 : index
    %92 = vector.load %arg11[%c0_47, %c0_48, %c0_49] : memref<2x1x32xf32, #tpu.memory_space<vmem>>, vector<1x1x32xf32>
    %93 = vector.shape_cast %92 : vector<1x1x32xf32> to vector<1x32xf32>
    %cst_50 = arith.constant dense<0.000000e+00> : vector<24xf32>
    %94 = vector.multi_reduction <add>, %89, %cst_50 [1] : vector<24x32xf32> to vector<24xf32>
    %95 = vector.shape_cast %94 : vector<24xf32> to vector<24x1xf32>
    %cst_51 = arith.constant 3.200000e+01 : f32
    %96 = vector.broadcast %cst_51 : f32 to vector<24x1xf32>
    %97 = arith.divf %95, %96 : vector<24x1xf32>
    %98 = vector.broadcast %97 : vector<24x1xf32> to vector<24x32xf32>
    %99 = arith.subf %89, %98 : vector<24x32xf32>
    %100 = arith.mulf %99, %99 : vector<24x32xf32>
    %cst_52 = arith.constant dense<0.000000e+00> : vector<24xf32>
    %101 = vector.multi_reduction <add>, %100, %cst_52 [1] : vector<24x32xf32> to vector<24xf32>
    %102 = vector.shape_cast %101 : vector<24xf32> to vector<24x1xf32>
    %cst_53 = arith.constant 3.200000e+01 : f32
    %103 = vector.broadcast %cst_53 : f32 to vector<24x1xf32>
    %104 = arith.divf %102, %103 : vector<24x1xf32>
    %cst_54 = arith.constant 9.99999997E-7 : f32
    %105 = vector.broadcast %cst_54 : f32 to vector<24x1xf32>
    %106 = arith.addf %104, %105 : vector<24x1xf32>
    %107 = math.rsqrt %106 : vector<24x1xf32>
    %108 = vector.broadcast %107 : vector<24x1xf32> to vector<24x32xf32>
    %109 = arith.mulf %99, %108 : vector<24x32xf32>
    %110 = vector.broadcast %91 : vector<1x32xf32> to vector<24x32xf32>
    %111 = arith.mulf %109, %110 : vector<24x32xf32>
    %112 = vector.broadcast %93 : vector<1x32xf32> to vector<24x32xf32>
    %113 = arith.addf %111, %112 : vector<24x32xf32>
    %c0_55 = arith.constant 0 : index
    %c0_56 = arith.constant 0 : index
    %c0_57 = arith.constant 0 : index
    %114 = vector.load %arg12[%c0_55, %c0_56, %c0_57] : memref<2x32x128xf32, #tpu.memory_space<vmem>>, vector<1x32x128xf32>
    %115 = vector.shape_cast %114 : vector<1x32x128xf32> to vector<32x128xf32>
    %cst_58 = arith.constant dense<0.000000e+00> : vector<24x128xf32>
    %116 = tpu.matmul %113, %115, %cst_58 {dimension_numbers = #tpu.dot_dimension_numbers<[1], [0], [0], [1], [0, 0, 1, 1], [], []>} : vector<24x32xf32>, vector<32x128xf32>, vector<24x128xf32> -> vector<24x128xf32>
    %c0_59 = arith.constant 0 : index
    %c0_60 = arith.constant 0 : index
    %c0_61 = arith.constant 0 : index
    %117 = vector.load %arg13[%c0_59, %c0_60, %c0_61] : memref<2x1x128xf32, #tpu.memory_space<vmem>>, vector<1x1x128xf32>
    %118 = vector.shape_cast %117 : vector<1x1x128xf32> to vector<1x128xf32>
    %119 = vector.broadcast %118 : vector<1x128xf32> to vector<24x128xf32>
    %120 = arith.addf %116, %119 : vector<24x128xf32>
    %cst_62 = arith.constant 5.000000e-01 : f32
    %121 = vector.broadcast %cst_62 : f32 to vector<24x128xf32>
    %122 = arith.mulf %121, %120 : vector<24x128xf32>
    %cst_63 = arith.constant 4.471500e-02 : f32
    %123 = vector.broadcast %cst_63 : f32 to vector<24x128xf32>
    %124 = arith.mulf %123, %120 : vector<24x128xf32>
    %125 = arith.mulf %124, %120 : vector<24x128xf32>
    %126 = arith.mulf %125, %120 : vector<24x128xf32>
    %127 = arith.addf %120, %126 : vector<24x128xf32>
    %cst_64 = arith.constant 0.797884583 : f32
    %128 = vector.broadcast %cst_64 : f32 to vector<24x128xf32>
    %129 = arith.mulf %128, %127 : vector<24x128xf32>
    %130 = math.tanh %129 : vector<24x128xf32>
    %cst_65 = arith.constant 1.000000e+00 : f32
    %131 = vector.broadcast %cst_65 : f32 to vector<24x128xf32>
    %132 = arith.addf %131, %130 : vector<24x128xf32>
    %133 = arith.mulf %122, %132 : vector<24x128xf32>
    %c0_66 = arith.constant 0 : index
    %c0_67 = arith.constant 0 : index
    %c0_68 = arith.constant 0 : index
    %134 = vector.load %arg14[%c0_66, %c0_67, %c0_68] : memref<2x128x32xf32, #tpu.memory_space<vmem>>, vector<1x128x32xf32>
    %135 = vector.shape_cast %134 : vector<1x128x32xf32> to vector<128x32xf32>
    %cst_69 = arith.constant dense<0.000000e+00> : vector<24x32xf32>
    %136 = tpu.matmul %133, %135, %cst_69 {dimension_numbers = #tpu.dot_dimension_numbers<[1], [0], [0], [1], [0, 0, 1, 1], [], []>} : vector<24x128xf32>, vector<128x32xf32>, vector<24x32xf32> -> vector<24x32xf32>
    %c0_70 = arith.constant 0 : index
    %c0_71 = arith.constant 0 : index
    %c0_72 = arith.constant 0 : index
    %137 = vector.load %arg15[%c0_70, %c0_71, %c0_72] : memref<2x1x32xf32, #tpu.memory_space<vmem>>, vector<1x1x32xf32>
    %138 = vector.shape_cast %137 : vector<1x1x32xf32> to vector<1x32xf32>
    %139 = vector.broadcast %138 : vector<1x32xf32> to vector<24x32xf32>
    %140 = arith.addf %136, %139 : vector<24x32xf32>
    %141 = arith.addf %89, %140 : vector<24x32xf32>
    %c1 = arith.constant 1 : index
    %c0_73 = arith.constant 0 : index
    %c0_74 = arith.constant 0 : index
    %142 = vector.load %arg4[%c1, %c0_73, %c0_74] : memref<2x1x32xf32, #tpu.memory_space<vmem>>, vector<1x1x32xf32>
    %143 = vector.shape_cast %142 : vector<1x1x32xf32> to vector<1x32xf32>
    %c1_75 = arith.constant 1 : index
    %c0_76 = arith.constant 0 : index
    %c0_77 = arith.constant 0 : index
    %144 = vector.load %arg5[%c1_75, %c0_76, %c0_77] : memref<2x1x32xf32, #tpu.memory_space<vmem>>, vector<1x1x32xf32>
    %145 = vector.shape_cast %144 : vector<1x1x32xf32> to vector<1x32xf32>
    %cst_78 = arith.constant dense<0.000000e+00> : vector<24xf32>
    %146 = vector.multi_reduction <add>, %141, %cst_78 [1] : vector<24x32xf32> to vector<24xf32>
    %147 = vector.shape_cast %146 : vector<24xf32> to vector<24x1xf32>
    %cst_79 = arith.constant 3.200000e+01 : f32
    %148 = vector.broadcast %cst_79 : f32 to vector<24x1xf32>
    %149 = arith.divf %147, %148 : vector<24x1xf32>
    %150 = vector.broadcast %149 : vector<24x1xf32> to vector<24x32xf32>
    %151 = arith.subf %141, %150 : vector<24x32xf32>
    %152 = arith.mulf %151, %151 : vector<24x32xf32>
    %cst_80 = arith.constant dense<0.000000e+00> : vector<24xf32>
    %153 = vector.multi_reduction <add>, %152, %cst_80 [1] : vector<24x32xf32> to vector<24xf32>
    %154 = vector.shape_cast %153 : vector<24xf32> to vector<24x1xf32>
    %cst_81 = arith.constant 3.200000e+01 : f32
    %155 = vector.broadcast %cst_81 : f32 to vector<24x1xf32>
    %156 = arith.divf %154, %155 : vector<24x1xf32>
    %cst_82 = arith.constant 9.99999997E-7 : f32
    %157 = vector.broadcast %cst_82 : f32 to vector<24x1xf32>
    %158 = arith.addf %156, %157 : vector<24x1xf32>
    %159 = math.rsqrt %158 : vector<24x1xf32>
    %160 = vector.broadcast %159 : vector<24x1xf32> to vector<24x32xf32>
    %161 = arith.mulf %151, %160 : vector<24x32xf32>
    %162 = vector.broadcast %143 : vector<1x32xf32> to vector<24x32xf32>
    %163 = arith.mulf %161, %162 : vector<24x32xf32>
    %164 = vector.broadcast %145 : vector<1x32xf32> to vector<24x32xf32>
    %165 = arith.addf %163, %164 : vector<24x32xf32>
    %c1_83 = arith.constant 1 : index
    %c0_84 = arith.constant 0 : index
    %c0_85 = arith.constant 0 : index
    %166 = vector.load %arg6[%c1_83, %c0_84, %c0_85] : memref<2x32x96xf32, #tpu.memory_space<vmem>>, vector<1x32x96xf32>
    %167 = vector.shape_cast %166 : vector<1x32x96xf32> to vector<32x96xf32>
    %cst_86 = arith.constant dense<0.000000e+00> : vector<24x96xf32>
    %168 = tpu.matmul %165, %167, %cst_86 {dimension_numbers = #tpu.dot_dimension_numbers<[1], [0], [0], [1], [0, 0, 1, 1], [], []>} : vector<24x32xf32>, vector<32x96xf32>, vector<24x96xf32> -> vector<24x96xf32>
    %c1_87 = arith.constant 1 : index
    %c0_88 = arith.constant 0 : index
    %c0_89 = arith.constant 0 : index
    %169 = vector.load %arg7[%c1_87, %c0_88, %c0_89] : memref<2x1x96xf32, #tpu.memory_space<vmem>>, vector<1x1x96xf32>
    %170 = vector.shape_cast %169 : vector<1x1x96xf32> to vector<1x96xf32>
    %171 = vector.broadcast %170 : vector<1x96xf32> to vector<24x96xf32>
    %172 = arith.addf %168, %171 : vector<24x96xf32>
    %c1_90 = arith.constant 1 : index
    %c0_91 = arith.constant 0 : index
    %c0_92 = arith.constant 0 : index
    %173 = vector.load %arg8[%c1_90, %c0_91, %c0_92] : memref<2x32x32xf32, #tpu.memory_space<vmem>>, vector<1x32x32xf32>
    %174 = vector.shape_cast %173 : vector<1x32x32xf32> to vector<32x32xf32>
    %175 = vector.extract_strided_slice %172 {offsets = [0, 0], sizes = [24, 16], strides = [1, 1]} : vector<24x96xf32> to vector<24x16xf32>
    %176 = vector.extract_strided_slice %172 {offsets = [0, 32], sizes = [24, 16], strides = [1, 1]} : vector<24x96xf32> to vector<24x16xf32>
    %177 = vector.extract_strided_slice %172 {offsets = [0, 64], sizes = [24, 16], strides = [1, 1]} : vector<24x96xf32> to vector<24x16xf32>
    %cst_93 = arith.constant dense<0.000000e+00> : vector<24x24xf32>
    %178 = tpu.matmul %175, %176, %cst_93 {dimension_numbers = #tpu.dot_dimension_numbers<[1], [1], [0], [0], [0, 0, 1, 0], [], []>} : vector<24x16xf32>, vector<24x16xf32>, vector<24x24xf32> -> vector<24x24xf32>
    %cst_94 = arith.constant 2.500000e-01 : f32
    %179 = vector.broadcast %cst_94 : f32 to vector<24x24xf32>
    %180 = arith.mulf %178, %179 : vector<24x24xf32>
    %cst_95 = arith.constant -1.000000e+30 : f32
    %181 = vector.broadcast %cst_95 : f32 to vector<24x24xf32>
    %182 = arith.select %8, %180, %181 : vector<24x24xi1>, vector<24x24xf32>
    %cst_96 = arith.constant dense<0xFF800000> : vector<24xf32>
    %183 = vector.multi_reduction <maximumf>, %182, %cst_96 [1] : vector<24x24xf32> to vector<24xf32>
    %184 = vector.shape_cast %183 : vector<24xf32> to vector<24x1xf32>
    %185 = vector.broadcast %184 : vector<24x1xf32> to vector<24x24xf32>
    %186 = arith.subf %182, %185 : vector<24x24xf32>
    %187 = math.exp %186 : vector<24x24xf32>
    %cst_97 = arith.constant dense<0.000000e+00> : vector<24xf32>
    %188 = vector.multi_reduction <add>, %187, %cst_97 [1] : vector<24x24xf32> to vector<24xf32>
    %189 = vector.shape_cast %188 : vector<24xf32> to vector<24x1xf32>
    %190 = tpu.reciprocal %189 {approx = true} : vector<24x1xf32> -> vector<24x1xf32>
    %191 = vector.broadcast %190 : vector<24x1xf32> to vector<24x24xf32>
    %192 = arith.mulf %187, %191 : vector<24x24xf32>
    %cst_98 = arith.constant dense<0.000000e+00> : vector<24x16xf32>
    %193 = tpu.matmul %192, %177, %cst_98 {dimension_numbers = #tpu.dot_dimension_numbers<[1], [0], [0], [1], [0, 0, 1, 1], [], []>} : vector<24x24xf32>, vector<24x16xf32>, vector<24x16xf32> -> vector<24x16xf32>
    %194 = vector.extract_strided_slice %174 {offsets = [0, 0], sizes = [16, 32], strides = [1, 1]} : vector<32x32xf32> to vector<16x32xf32>
    %cst_99 = arith.constant dense<0.000000e+00> : vector<24x32xf32>
    %195 = tpu.matmul %193, %194, %cst_99 {dimension_numbers = #tpu.dot_dimension_numbers<[1], [0], [0], [1], [0, 0, 1, 1], [], []>} : vector<24x16xf32>, vector<16x32xf32>, vector<24x32xf32> -> vector<24x32xf32>
    %196 = vector.extract_strided_slice %172 {offsets = [0, 16], sizes = [24, 16], strides = [1, 1]} : vector<24x96xf32> to vector<24x16xf32>
    %197 = vector.extract_strided_slice %172 {offsets = [0, 48], sizes = [24, 16], strides = [1, 1]} : vector<24x96xf32> to vector<24x16xf32>
    %198 = vector.extract_strided_slice %172 {offsets = [0, 80], sizes = [24, 16], strides = [1, 1]} : vector<24x96xf32> to vector<24x16xf32>
    %cst_100 = arith.constant dense<0.000000e+00> : vector<24x24xf32>
    %199 = tpu.matmul %196, %197, %cst_100 {dimension_numbers = #tpu.dot_dimension_numbers<[1], [1], [0], [0], [0, 0, 1, 0], [], []>} : vector<24x16xf32>, vector<24x16xf32>, vector<24x24xf32> -> vector<24x24xf32>
    %cst_101 = arith.constant 2.500000e-01 : f32
    %200 = vector.broadcast %cst_101 : f32 to vector<24x24xf32>
    %201 = arith.mulf %199, %200 : vector<24x24xf32>
    %cst_102 = arith.constant -1.000000e+30 : f32
    %202 = vector.broadcast %cst_102 : f32 to vector<24x24xf32>
    %203 = arith.select %8, %201, %202 : vector<24x24xi1>, vector<24x24xf32>
    %cst_103 = arith.constant dense<0xFF800000> : vector<24xf32>
    %204 = vector.multi_reduction <maximumf>, %203, %cst_103 [1] : vector<24x24xf32> to vector<24xf32>
    %205 = vector.shape_cast %204 : vector<24xf32> to vector<24x1xf32>
    %206 = vector.broadcast %205 : vector<24x1xf32> to vector<24x24xf32>
    %207 = arith.subf %203, %206 : vector<24x24xf32>
    %208 = math.exp %207 : vector<24x24xf32>
    %cst_104 = arith.constant dense<0.000000e+00> : vector<24xf32>
    %209 = vector.multi_reduction <add>, %208, %cst_104 [1] : vector<24x24xf32> to vector<24xf32>
    %210 = vector.shape_cast %209 : vector<24xf32> to vector<24x1xf32>
    %211 = tpu.reciprocal %210 {approx = true} : vector<24x1xf32> -> vector<24x1xf32>
    %212 = vector.broadcast %211 : vector<24x1xf32> to vector<24x24xf32>
    %213 = arith.mulf %208, %212 : vector<24x24xf32>
    %cst_105 = arith.constant dense<0.000000e+00> : vector<24x16xf32>
    %214 = tpu.matmul %213, %198, %cst_105 {dimension_numbers = #tpu.dot_dimension_numbers<[1], [0], [0], [1], [0, 0, 1, 1], [], []>} : vector<24x24xf32>, vector<24x16xf32>, vector<24x16xf32> -> vector<24x16xf32>
    %215 = vector.extract_strided_slice %174 {offsets = [16, 0], sizes = [16, 32], strides = [1, 1]} : vector<32x32xf32> to vector<16x32xf32>
    %cst_106 = arith.constant dense<0.000000e+00> : vector<24x32xf32>
    %216 = tpu.matmul %214, %215, %cst_106 {dimension_numbers = #tpu.dot_dimension_numbers<[1], [0], [0], [1], [0, 0, 1, 1], [], []>} : vector<24x16xf32>, vector<16x32xf32>, vector<24x32xf32> -> vector<24x32xf32>
    %217 = arith.addf %195, %216 : vector<24x32xf32>
    %218 = arith.addf %141, %217 : vector<24x32xf32>
    %c1_107 = arith.constant 1 : index
    %c0_108 = arith.constant 0 : index
    %c0_109 = arith.constant 0 : index
    %219 = vector.load %arg9[%c1_107, %c0_108, %c0_109] : memref<2x1x32xf32, #tpu.memory_space<vmem>>, vector<1x1x32xf32>
    %220 = vector.shape_cast %219 : vector<1x1x32xf32> to vector<1x32xf32>
    %221 = vector.broadcast %220 : vector<1x32xf32> to vector<24x32xf32>
    %222 = arith.addf %218, %221 : vector<24x32xf32>
    %c1_110 = arith.constant 1 : index
    %c0_111 = arith.constant 0 : index
    %c0_112 = arith.constant 0 : index
    %223 = vector.load %arg10[%c1_110, %c0_111, %c0_112] : memref<2x1x32xf32, #tpu.memory_space<vmem>>, vector<1x1x32xf32>
    %224 = vector.shape_cast %223 : vector<1x1x32xf32> to vector<1x32xf32>
    %c1_113 = arith.constant 1 : index
    %c0_114 = arith.constant 0 : index
    %c0_115 = arith.constant 0 : index
    %225 = vector.load %arg11[%c1_113, %c0_114, %c0_115] : memref<2x1x32xf32, #tpu.memory_space<vmem>>, vector<1x1x32xf32>
    %226 = vector.shape_cast %225 : vector<1x1x32xf32> to vector<1x32xf32>
    %cst_116 = arith.constant dense<0.000000e+00> : vector<24xf32>
    %227 = vector.multi_reduction <add>, %222, %cst_116 [1] : vector<24x32xf32> to vector<24xf32>
    %228 = vector.shape_cast %227 : vector<24xf32> to vector<24x1xf32>
    %cst_117 = arith.constant 3.200000e+01 : f32
    %229 = vector.broadcast %cst_117 : f32 to vector<24x1xf32>
    %230 = arith.divf %228, %229 : vector<24x1xf32>
    %231 = vector.broadcast %230 : vector<24x1xf32> to vector<24x32xf32>
    %232 = arith.subf %222, %231 : vector<24x32xf32>
    %233 = arith.mulf %232, %232 : vector<24x32xf32>
    %cst_118 = arith.constant dense<0.000000e+00> : vector<24xf32>
    %234 = vector.multi_reduction <add>, %233, %cst_118 [1] : vector<24x32xf32> to vector<24xf32>
    %235 = vector.shape_cast %234 : vector<24xf32> to vector<24x1xf32>
    %cst_119 = arith.constant 3.200000e+01 : f32
    %236 = vector.broadcast %cst_119 : f32 to vector<24x1xf32>
    %237 = arith.divf %235, %236 : vector<24x1xf32>
    %cst_120 = arith.constant 9.99999997E-7 : f32
    %238 = vector.broadcast %cst_120 : f32 to vector<24x1xf32>
    %239 = arith.addf %237, %238 : vector<24x1xf32>
    %240 = math.rsqrt %239 : vector<24x1xf32>
    %241 = vector.broadcast %240 : vector<24x1xf32> to vector<24x32xf32>
    %242 = arith.mulf %232, %241 : vector<24x32xf32>
    %243 = vector.broadcast %224 : vector<1x32xf32> to vector<24x32xf32>
    %244 = arith.mulf %242, %243 : vector<24x32xf32>
    %245 = vector.broadcast %226 : vector<1x32xf32> to vector<24x32xf32>
    %246 = arith.addf %244, %245 : vector<24x32xf32>
    %c1_121 = arith.constant 1 : index
    %c0_122 = arith.constant 0 : index
    %c0_123 = arith.constant 0 : index
    %247 = vector.load %arg12[%c1_121, %c0_122, %c0_123] : memref<2x32x128xf32, #tpu.memory_space<vmem>>, vector<1x32x128xf32>
    %248 = vector.shape_cast %247 : vector<1x32x128xf32> to vector<32x128xf32>
    %cst_124 = arith.constant dense<0.000000e+00> : vector<24x128xf32>
    %249 = tpu.matmul %246, %248, %cst_124 {dimension_numbers = #tpu.dot_dimension_numbers<[1], [0], [0], [1], [0, 0, 1, 1], [], []>} : vector<24x32xf32>, vector<32x128xf32>, vector<24x128xf32> -> vector<24x128xf32>
    %c1_125 = arith.constant 1 : index
    %c0_126 = arith.constant 0 : index
    %c0_127 = arith.constant 0 : index
    %250 = vector.load %arg13[%c1_125, %c0_126, %c0_127] : memref<2x1x128xf32, #tpu.memory_space<vmem>>, vector<1x1x128xf32>
    %251 = vector.shape_cast %250 : vector<1x1x128xf32> to vector<1x128xf32>
    %252 = vector.broadcast %251 : vector<1x128xf32> to vector<24x128xf32>
    %253 = arith.addf %249, %252 : vector<24x128xf32>
    %cst_128 = arith.constant 5.000000e-01 : f32
    %254 = vector.broadcast %cst_128 : f32 to vector<24x128xf32>
    %255 = arith.mulf %254, %253 : vector<24x128xf32>
    %cst_129 = arith.constant 4.471500e-02 : f32
    %256 = vector.broadcast %cst_129 : f32 to vector<24x128xf32>
    %257 = arith.mulf %256, %253 : vector<24x128xf32>
    %258 = arith.mulf %257, %253 : vector<24x128xf32>
    %259 = arith.mulf %258, %253 : vector<24x128xf32>
    %260 = arith.addf %253, %259 : vector<24x128xf32>
    %cst_130 = arith.constant 0.797884583 : f32
    %261 = vector.broadcast %cst_130 : f32 to vector<24x128xf32>
    %262 = arith.mulf %261, %260 : vector<24x128xf32>
    %263 = math.tanh %262 : vector<24x128xf32>
    %cst_131 = arith.constant 1.000000e+00 : f32
    %264 = vector.broadcast %cst_131 : f32 to vector<24x128xf32>
    %265 = arith.addf %264, %263 : vector<24x128xf32>
    %266 = arith.mulf %255, %265 : vector<24x128xf32>
    %c1_132 = arith.constant 1 : index
    %c0_133 = arith.constant 0 : index
    %c0_134 = arith.constant 0 : index
    %267 = vector.load %arg14[%c1_132, %c0_133, %c0_134] : memref<2x128x32xf32, #tpu.memory_space<vmem>>, vector<1x128x32xf32>
    %268 = vector.shape_cast %267 : vector<1x128x32xf32> to vector<128x32xf32>
    %cst_135 = arith.constant dense<0.000000e+00> : vector<24x32xf32>
    %269 = tpu.matmul %266, %268, %cst_135 {dimension_numbers = #tpu.dot_dimension_numbers<[1], [0], [0], [1], [0, 0, 1, 1], [], []>} : vector<24x128xf32>, vector<128x32xf32>, vector<24x32xf32> -> vector<24x32xf32>
    %c1_136 = arith.constant 1 : index
    %c0_137 = arith.constant 0 : index
    %c0_138 = arith.constant 0 : index
    %270 = vector.load %arg15[%c1_136, %c0_137, %c0_138] : memref<2x1x32xf32, #tpu.memory_space<vmem>>, vector<1x1x32xf32>
    %271 = vector.shape_cast %270 : vector<1x1x32xf32> to vector<1x32xf32>
    %272 = vector.broadcast %271 : vector<1x32xf32> to vector<24x32xf32>
    %273 = arith.addf %269, %272 : vector<24x32xf32>
    %274 = arith.addf %222, %273 : vector<24x32xf32>
    %c0_139 = arith.constant 0 : index
    %c0_140 = arith.constant 0 : index
    %275 = vector.load %arg16[%c0_139, %c0_140] : memref<1x32xf32, #tpu.memory_space<vmem>>, vector<1x32xf32>
    %c0_141 = arith.constant 0 : index
    %c0_142 = arith.constant 0 : index
    %276 = vector.load %arg17[%c0_141, %c0_142] : memref<1x32xf32, #tpu.memory_space<vmem>>, vector<1x32xf32>
    %cst_143 = arith.constant dense<0.000000e+00> : vector<24xf32>
    %277 = vector.multi_reduction <add>, %274, %cst_143 [1] : vector<24x32xf32> to vector<24xf32>
    %278 = vector.shape_cast %277 : vector<24xf32> to vector<24x1xf32>
    %cst_144 = arith.constant 3.200000e+01 : f32
    %279 = vector.broadcast %cst_144 : f32 to vector<24x1xf32>
    %280 = arith.divf %278, %279 : vector<24x1xf32>
    %281 = vector.broadcast %280 : vector<24x1xf32> to vector<24x32xf32>
    %282 = arith.subf %274, %281 : vector<24x32xf32>
    %283 = arith.mulf %282, %282 : vector<24x32xf32>
    %cst_145 = arith.constant dense<0.000000e+00> : vector<24xf32>
    %284 = vector.multi_reduction <add>, %283, %cst_145 [1] : vector<24x32xf32> to vector<24xf32>
    %285 = vector.shape_cast %284 : vector<24xf32> to vector<24x1xf32>
    %cst_146 = arith.constant 3.200000e+01 : f32
    %286 = vector.broadcast %cst_146 : f32 to vector<24x1xf32>
    %287 = arith.divf %285, %286 : vector<24x1xf32>
    %cst_147 = arith.constant 9.99999997E-7 : f32
    %288 = vector.broadcast %cst_147 : f32 to vector<24x1xf32>
    %289 = arith.addf %287, %288 : vector<24x1xf32>
    %290 = math.rsqrt %289 : vector<24x1xf32>
    %291 = vector.broadcast %290 : vector<24x1xf32> to vector<24x32xf32>
    %292 = arith.mulf %282, %291 : vector<24x32xf32>
    %293 = vector.broadcast %275 : vector<1x32xf32> to vector<24x32xf32>
    %294 = arith.mulf %292, %293 : vector<24x32xf32>
    %295 = vector.broadcast %276 : vector<1x32xf32> to vector<24x32xf32>
    %296 = arith.addf %294, %295 : vector<24x32xf32>
    %297 = vector.extract_strided_slice %296 {offsets = [1, 0], sizes = [16, 32], strides = [1, 1]} : vector<24x32xf32> to vector<16x32xf32>
    %c0_148 = arith.constant 0 : index
    %c0_149 = arith.constant 0 : index
    %298 = vector.load %arg18[%c0_148, %c0_149] : memref<4x32xf32, #tpu.memory_space<vmem>>, vector<4x32xf32>
    %cst_150 = arith.constant dense<0.000000e+00> : vector<4x16xf32>
    %299 = tpu.matmul %298, %297, %cst_150 {dimension_numbers = #tpu.dot_dimension_numbers<[1], [1], [0], [0], [0, 0, 1, 0], [], []>} : vector<4x32xf32>, vector<16x32xf32>, vector<4x16xf32> -> vector<4x16xf32>
    %c0_151 = arith.constant 0 : index
    %c0_152 = arith.constant 0 : index
    %300 = vector.load %arg19[%c0_151, %c0_152] : memref<4x1xf32, #tpu.memory_space<vmem>>, vector<4x1xf32>
    %301 = vector.broadcast %300 : vector<4x1xf32> to vector<4x16xf32>
    %302 = arith.addf %299, %301 : vector<4x16xf32>
    %c0_153 = arith.constant 0 : index
    %c0_154 = arith.constant 0 : index
    %303 = vector.load %arg20[%c0_153, %c0_154] : memref<16x1024xf32, #tpu.memory_space<vmem>>, vector<16x1024xf32>
    %cst_155 = arith.constant dense<0.000000e+00> : vector<4x1024xf32>
    %304 = tpu.matmul %302, %303, %cst_155 {dimension_numbers = #tpu.dot_dimension_numbers<[1], [0], [0], [1], [0, 0, 1, 1], [], []>} : vector<4x16xf32>, vector<16x1024xf32>, vector<4x1024xf32> -> vector<4x1024xf32>
    %c0_156 = arith.constant 0 : index
    %c0_157 = arith.constant 0 : index
    %c0_158 = arith.constant 0 : index
    %305 = vector.load %arg21[%c0_156, %c0_157, %c0_158] : memref<1x4x1024xf32, #tpu.memory_space<vmem>>, vector<1x4x1024xf32>
    %306 = vector.shape_cast %305 : vector<1x4x1024xf32> to vector<4x1024xf32>
    %307 = vector.shape_cast %304 : vector<4x1024xf32> to vector<1x4x1024xf32>
    tpu.vector_store %arg21[%c0_156, %c0_157, %c0_158], %307 {strides = array<i32>} : memref<1x4x1024xf32, #tpu.memory_space<vmem>>, vector<1x4x1024xf32>,
    return
  }
  func.func @transform_0(%arg0: i32) -> (i32, i32, i32) {
    %c0_i32 = arith.constant 0 : i32
    %c0_i32_0 = arith.constant 0 : i32
    %c0_i32_1 = arith.constant 0 : i32
    return %arg0, %c0_i32, %c0_i32_0 : i32, i32, i32
  }
  func.func @transform_1(%arg0: i32) -> (i32, i32) {
    %c0_i32 = arith.constant 0 : i32
    %c0_i32_0 = arith.constant 0 : i32
    %c0_i32_1 = arith.constant 0 : i32
    return %c0_i32, %c0_i32_0 : i32, i32
  }
  func.func @transform_2(%arg0: i32) -> (i32, i32) {
    %c0_i32 = arith.constant 0 : i32
    %c0_i32_0 = arith.constant 0 : i32
    %c0_i32_1 = arith.constant 0 : i32
    return %c0_i32, %c0_i32_0 : i32, i32
  }
  func.func @transform_3(%arg0: i32) -> (i32, i32, i32) {
    %c0_i32 = arith.constant 0 : i32
    %c0_i32_0 = arith.constant 0 : i32
    %c0_i32_1 = arith.constant 0 : i32
    %c0_i32_2 = arith.constant 0 : i32
    return %c0_i32, %c0_i32_0, %c0_i32_1 : i32, i32, i32
  }
  func.func @transform_4(%arg0: i32) -> (i32, i32, i32) {
    %c0_i32 = arith.constant 0 : i32
    %c0_i32_0 = arith.constant 0 : i32
    %c0_i32_1 = arith.constant 0 : i32
    %c0_i32_2 = arith.constant 0 : i32
    return %c0_i32, %c0_i32_0, %c0_i32_1 : i32, i32, i32
  }
  func.func @transform_5(%arg0: i32) -> (i32, i32, i32) {
    %c0_i32 = arith.constant 0 : i32
    %c0_i32_0 = arith.constant 0 : i32
    %c0_i32_1 = arith.constant 0 : i32
    %c0_i32_2 = arith.constant 0 : i32
    return %c0_i32, %c0_i32_0, %c0_i32_1 : i32, i32, i32
  }
  func.func @transform_6(%arg0: i32) -> (i32, i32, i32) {
    %c0_i32 = arith.constant 0 : i32
    %c0_i32_0 = arith.constant 0 : i32
    %c0_i32_1 = arith.constant 0 : i32
    %c0_i32_2 = arith.constant 0 : i32
    return %c0_i32, %c0_i32_0, %c0_i32_1 : i32, i32, i32
  }
  func.func @transform_7(%arg0: i32) -> (i32, i32, i32) {
    %c0_i32 = arith.constant 0 : i32
    %c0_i32_0 = arith.constant 0 : i32
    %c0_i32_1 = arith.constant 0 : i32
    %c0_i32_2 = arith.constant 0 : i32
    return %c0_i32, %c0_i32_0, %c0_i32_1 : i32, i32, i32
  }
  func.func @transform_8(%arg0: i32) -> (i32, i32, i32) {
    %c0_i32 = arith.constant 0 : i32
    %c0_i32_0 = arith.constant 0 : i32
    %c0_i32_1 = arith.constant 0 : i32
    %c0_i32_2 = arith.constant 0 : i32
    return %c0_i32, %c0_i32_0, %c0_i32_1 : i32, i32, i32
  }
  func.func @transform_9(%arg0: i32) -> (i32, i32, i32) {
    %c0_i32 = arith.constant 0 : i32
    %c0_i32_0 = arith.constant 0 : i32
    %c0_i32_1 = arith.constant 0 : i32
    %c0_i32_2 = arith.constant 0 : i32
    return %c0_i32, %c0_i32_0, %c0_i32_1 : i32, i32, i32
  }
  func.func @transform_10(%arg0: i32) -> (i32, i32, i32) {
    %c0_i32 = arith.constant 0 : i32
    %c0_i32_0 = arith.constant 0 : i32
    %c0_i32_1 = arith.constant 0 : i32
    %c0_i32_2 = arith.constant 0 : i32
    return %c0_i32, %c0_i32_0, %c0_i32_1 : i32, i32, i32
  }
  func.func @transform_11(%arg0: i32) -> (i32, i32, i32) {
    %c0_i32 = arith.constant 0 : i32
    %c0_i32_0 = arith.constant 0 : i32
    %c0_i32_1 = arith.constant 0 : i32
    %c0_i32_2 = arith.constant 0 : i32
    return %c0_i32, %c0_i32_0, %c0_i32_1 : i32, i32, i32
  }
  func.func @transform_12(%arg0: i32) -> (i32, i32, i32) {
    %c0_i32 = arith.constant 0 : i32
    %c0_i32_0 = arith.constant 0 : i32
    %c0_i32_1 = arith.constant 0 : i32
    %c0_i32_2 = arith.constant 0 : i32
    return %c0_i32, %c0_i32_0, %c0_i32_1 : i32, i32, i32
  }
  func.func @transform_13(%arg0: i32) -> (i32, i32, i32) {
    %c0_i32 = arith.constant 0 : i32
    %c0_i32_0 = arith.constant 0 : i32
    %c0_i32_1 = arith.constant 0 : i32
    %c0_i32_2 = arith.constant 0 : i32
    return %c0_i32, %c0_i32_0, %c0_i32_1 : i32, i32, i32
  }
  func.func @transform_14(%arg0: i32) -> (i32, i32, i32) {
    %c0_i32 = arith.constant 0 : i32
    %c0_i32_0 = arith.constant 0 : i32
    %c0_i32_1 = arith.constant 0 : i32
    %c0_i32_2 = arith.constant 0 : i32
    return %c0_i32, %c0_i32_0, %c0_i32_1 : i32, i32, i32
  }
  func.func @transform_15(%arg0: i32) -> (i32, i32) {
    %c0_i32 = arith.constant 0 : i32
    %c0_i32_0 = arith.constant 0 : i32
    %c0_i32_1 = arith.constant 0 : i32
    return %c0_i32, %c0_i32_0 : i32, i32
  }
  func.func @transform_16(%arg0: i32) -> (i32, i32) {
    %c0_i32 = arith.constant 0 : i32
    %c0_i32_0 = arith.constant 0 : i32
    %c0_i32_1 = arith.constant 0 : i32
    return %c0_i32, %c0_i32_0 : i32, i32
  }
  func.func @transform_17(%arg0: i32) -> (i32, i32) {
    %c0_i32 = arith.constant 0 : i32
    %c0_i32_0 = arith.constant 0 : i32
    %c0_i32_1 = arith.constant 0 : i32
    return %c0_i32, %c0_i32_0 : i32, i32
  }
  func.func @transform_18(%arg0: i32) -> (i32, i32) {
    %c0_i32 = arith.constant 0 : i32
    %c0_i32_0 = arith.constant 0 : i32
    %c0_i32_1 = arith.constant 0 : i32
    return %c0_i32, %c0_i32_0 : i32, i32
  }
  func.func @transform_19(%arg0: i32) -> (i32, i32) {
    %c0_i32 = arith.constant 0 : i32
    %c0_i32_0 = arith.constant 0 : i32
    %c0_i32_1 = arith.constant 0 : i32
    return %c0_i32, %c0_i32_0 : i32, i32
  }
  func.func @transform_20(%arg0: i32) -> (i32, i32, i32) {
    %c0_i32 = arith.constant 0 : i32
    %c0_i32_0 = arith.constant 0 : i32
    %c0_i32_1 = arith.constant 0 : i32
    return %arg0, %c0_i32, %c0_i32_0 : i32, i32, i32
  }
}

</mosaic_0001>

<llo_original>
// kernel: segmenter_forward.1
$region0: #{segmenter_forward.1}
  #allocation0 [shape = 'u32[]', space=smem, size = 0x4, offset = 0x4, fixed_abs, tag = 'smem constant byte address 0x4 - core index']
  #allocation1 [shape = 'u32[72,128]{1,0:T(1,128)}', space=vmem, size = 0x9000, scoped, tag = 'internal scratch']
  %s0 = inlined_call_operand.vmem [shape: f32[2,24,192], index: 0, kind: input, shape index: {}]
  %s1 = inlined_call_operand.vmem [shape: f32[192,32], index: 1, kind: input, shape index: {}]
  %s2 = inlined_call_operand.vmem [shape: f32[24,32], index: 2, kind: input, shape index: {}]
  %s3 = inlined_call_operand.vmem [shape: f32[2,1,32], index: 3, kind: input, shape index: {}]
  %s4 = inlined_call_operand.vmem [shape: f32[2,1,32], index: 4, kind: input, shape index: {}]
  %s5 = inlined_call_operand.vmem [shape: f32[2,32,96], index: 5, kind: input, shape index: {}]
  %s6 = inlined_call_operand.vmem [shape: f32[2,1,96], index: 6, kind: input, shape index: {}]
  %s7 = inlined_call_operand.vmem [shape: f32[2,32,32], index: 7, kind: input, shape index: {}]
  %s8 = inlined_call_operand.vmem [shape: f32[2,1,32], index: 8, kind: input, shape index: {}]
  %s9 = inlined_call_operand.vmem [shape: f32[2,1,32], index: 9, kind: input, shape index: {}]
  %s10 = inlined_call_operand.vmem [shape: f32[2,1,32], index: 10, kind: input, shape index: {}]
  %s11 = inlined_call_operand.vmem [shape: f32[2,32,128], index: 11, kind: input, shape index: {}]
  %s12 = inlined_call_operand.vmem [shape: f32[2,1,128], index: 12, kind: input, shape index: {}]
  %s13 = inlined_call_operand.vmem [shape: f32[2,128,32], index: 13, kind: input, shape index: {}]
  %s14 = inlined_call_operand.vmem [shape: f32[2,1,32], index: 14, kind: input, shape index: {}]
  %s15 = inlined_call_operand.vmem [shape: f32[1,32], index: 15, kind: input, shape index: {}]
  %s16 = inlined_call_operand.vmem [shape: f32[1,32], index: 16, kind: input, shape index: {}]
  %s17 = inlined_call_operand.vmem [shape: f32[4,32], index: 17, kind: input, shape index: {}]
  %s18 = inlined_call_operand.vmem [shape: f32[4,1], index: 18, kind: input, shape index: {}]
  %s19 = inlined_call_operand.vmem [shape: f32[16,1024], index: 19, kind: input, shape index: {}]
  %s20 = inlined_call_operand.vmem [shape: f32[2,4,1024], index: 20, kind: output, shape index: {}]
  %s21 = sld [smem:[#allocation0]]
  $region113: #{segmenter_forward.1} parent=0
    _
  %s23 = ssub.s32 1, %s21
  %s24 = scalar_select 0, %s23, %s21
  loop: start=0, step=1, limit=4
  $region2: #{segmenter_forward.1} parent=0 // loop_pre_header
    _
  $region3: #{segmenter_forward.1} parent=0 // loop_header
    %s26 = sphi 0, %s30
    %p27 = scmp.ge.s32.totalorder %s26, 4
    %s36 = sphi 0, %s38
    %s39 = sphi 0, %s36
    %s40 = sphi 0, %s39
    %s56 = sphi 0, %s40
    %s60 = sphi 0, %s60
    %s62 = sphi 0, %s60
    %s63 = sphi 0, %s62
    %s77 = sphi 0, %s63
    %s81 = sphi 0, %s81
    %s83 = sphi 0, %s81
    %s84 = sphi 0, %s83
    %s98 = sphi 0, %s84
    %s102 = sphi 0, %s102
    %s104 = sphi 0, %s102
    %s105 = sphi 0, %s104
    %s119 = sphi 0, %s105
    %s123 = sphi 0, %s123
    %s125 = sphi 0, %s123
    %s126 = sphi 0, %s125
    %s140 = sphi 0, %s126
    %s144 = sphi 0, %s144
    %s146 = sphi 0, %s144
    %s147 = sphi 0, %s146
    %s161 = sphi 0, %s147
    %s165 = sphi 0, %s165
    %s167 = sphi 0, %s165
    %s168 = sphi 0, %s167
    %s182 = sphi 0, %s168
    %s186 = sphi 0, %s186
    %s188 = sphi 0, %s186
    %s189 = sphi 0, %s188
    %s203 = sphi 0, %s189
    %s207 = sphi 0, %s207
    %s209 = sphi 0, %s207
    %s210 = sphi 0, %s209
    %s224 = sphi 0, %s210
    %s228 = sphi 0, %s228
    %s230 = sphi 0, %s228
    %s231 = sphi 0, %s230
    %s245 = sphi 0, %s231
    %s249 = sphi 0, %s249
    %s251 = sphi 0, %s249
    %s252 = sphi 0, %s251
    %s266 = sphi 0, %s252
    %s270 = sphi 0, %s270
    %s272 = sphi 0, %s270
    %s273 = sphi 0, %s272
    %s287 = sphi 0, %s273
    %s291 = sphi 0, %s291
    %s293 = sphi 0, %s291
    %s294 = sphi 0, %s293
    %s308 = sphi 0, %s294
    %s312 = sphi 0, %s312
    %s314 = sphi 0, %s312
    %s315 = sphi 0, %s314
    %s329 = sphi 0, %s315
    %s333 = sphi 0, %s333
    %s335 = sphi 0, %s333
    %s336 = sphi 0, %s335
    %s350 = sphi 0, %s336
    %s354 = sphi 0, %s354
    %s356 = sphi 0, %s354
    %s357 = sphi 0, %s356
    %s371 = sphi 0, %s357
    %s375 = sphi 0, %s375
    %s377 = sphi 0, %s375
    %s378 = sphi 0, %s377
    %s392 = sphi 0, %s378
    %s396 = sphi 0, %s396
    %s398 = sphi 0, %s396
    %s399 = sphi 0, %s398
    %s413 = sphi 0, %s399
    %s417 = sphi 0, %s417
    %s419 = sphi 0, %s417
    %s420 = sphi 0, %s419
    %s434 = sphi 0, %s420
    %s438 = sphi 0, %s438
    %s440 = sphi 0, %s438
    %s441 = sphi 0, %s440
    %s455 = sphi 0, %s441
    %s461 = sphi 0, %s463
    %s464 = sphi 0, %s461
    %s465 = sphi 0, %s464
    %s481 = sphi 0, %s465
  $region4: #{segmenter_forward.1} parent=0 // loop_header_branch
    %29 = sbr.rel (%p27) target = $region8
  $region5: #{segmenter_forward.1} parent=0 // loop_body
    %s31 = ssub.s32 %s26, 1
    %s32 = ssub.s32 %s26, 2
    %s33 = sadd.s32 %s26, 1
    %s34 = ssub.s32 %s26, %s33
    %p35 = scmp.eq.s32.totalorder %s34, 0
    %s37 = sadd.s32 %s36, 1
    %s38 = scalar_select %p35, %s36, %s37
    %p41 = pneg %p35
    %p42 = scmp.eq.s32.totalorder %s26, 1
    %p43 = por %p41, %p42
    %p44 = scmp.ne.s32.totalorder %s36, %s39
    %p45 = scmp.eq.s32.totalorder %s26, 0
    %p46 = por %p44, %p45
    %p47 = scmp.ne.s32.totalorder %s36, %s39
    %p48 = scmp.eq.s32.totalorder %s31, 1
    %p49 = por %p47, %p48
    %p50 = scmp.ne.s32.totalorder %s39, %s40
    %p51 = scmp.eq.s32.totalorder %s31, 0
    %p52 = por %p50, %p51
    %p53 = scmp.ne.s32.totalorder %s39, %s40
    %p54 = scmp.eq.s32.totalorder %s32, 1
    %p55 = por %p53, %p54
    %p57 = scmp.ne.s32.totalorder %s40, %s56
    %p58 = scmp.eq.s32.totalorder %s32, 0
    %p59 = por %p57, %p58
    %s61 = sadd.s32 %s60, 1
    %p64 = scmp.eq.s32.totalorder %s26, 1
    %p65 = scmp.ne.s32.totalorder %s60, %s62
    %p66 = scmp.eq.s32.totalorder %s26, 0
    %p67 = por %p65, %p66
    %p68 = scmp.ne.s32.totalorder %s60, %s62
    %p69 = scmp.eq.s32.totalorder %s31, 1
    %p70 = por %p68, %p69
    %p71 = scmp.ne.s32.totalorder %s62, %s63
    %p72 = scmp.eq.s32.totalorder %s31, 0
    %p73 = por %p71, %p72
    %p74 = scmp.ne.s32.totalorder %s62, %s63
    %p75 = scmp.eq.s32.totalorder %s32, 1
    %p76 = por %p74, %p75
    %p78 = scmp.ne.s32.totalorder %s63, %s77
    %p79 = scmp.eq.s32.totalorder %s32, 0
    %p80 = por %p78, %p79
    %s82 = sadd.s32 %s81, 1
    %p85 = scmp.eq.s32.totalorder %s26, 1
    %p86 = scmp.ne.s32.totalorder %s81, %s83
    %p87 = scmp.eq.s32.totalorder %s26, 0
    %p88 = por %p86, %p87
    %p89 = scmp.ne.s32.totalorder %s81, %s83
    %p90 = scmp.eq.s32.totalorder %s31, 1
    %p91 = por %p89, %p90
    %p92 = scmp.ne.s32.totalorder %s83, %s84
    %p93 = scmp.eq.s32.totalorder %s31, 0
    %p94 = por %p92, %p93
    %p95 = scmp.ne.s32.totalorder %s83, %s84
    %p96 = scmp.eq.s32.totalorder %s32, 1
    %p97 = por %p95, %p96
    %p99 = scmp.ne.s32.totalorder %s84, %s98
    %p100 = scmp.eq.s32.totalorder %s32, 0
    %p101 = por %p99, %p100
    %s103 = sadd.s32 %s102, 1
    %p106 = scmp.eq.s32.totalorder %s26, 1
    %p107 = scmp.ne.s32.totalorder %s102, %s104
    %p108 = scmp.eq.s32.totalorder %s26, 0
    %p109 = por %p107, %p108
    %p110 = scmp.ne.s32.totalorder %s102, %s104
    %p111 = scmp.eq.s32.totalorder %s31, 1
    %p112 = por %p110, %p111
    %p113 = scmp.ne.s32.totalorder %s104, %s105
    %p114 = scmp.eq.s32.totalorder %s31, 0
    %p115 = por %p113, %p114
    %p116 = scmp.ne.s32.totalorder %s104, %s105
    %p117 = scmp.eq.s32.totalorder %s32, 1
    %p118 = por %p116, %p117
    %p120 = scmp.ne.s32.totalorder %s105, %s119
    %p121 = scmp.eq.s32.totalorder %s32, 0
    %p122 = por %p120, %p121
    %s124 = sadd.s32 %s123, 1
    %p127 = scmp.eq.s32.totalorder %s26, 1
    %p128 = scmp.ne.s32.totalorder %s123, %s125
    %p129 = scmp.eq.s32.totalorder %s26, 0
    %p130 = por %p128, %p129
    %p131 = scmp.ne.s32.totalorder %s123, %s125
    %p132 = scmp.eq.s32.totalorder %s31, 1
    %p133 = por %p131, %p132
    %p134 = scmp.ne.s32.totalorder %s125, %s126
    %p135 = scmp.eq.s32.totalorder %s31, 0
    %p136 = por %p134, %p135
    %p137 = scmp.ne.s32.totalorder %s125, %s126
    %p138 = scmp.eq.s32.totalorder %s32, 1
    %p139 = por %p137, %p138
    %p141 = scmp.ne.s32.totalorder %s126, %s140
    %p142 = scmp.eq.s32.totalorder %s32, 0
    %p143 = por %p141, %p142
    %s145 = sadd.s32 %s144, 1
    %p148 = scmp.eq.s32.totalorder %s26, 1
    %p149 = scmp.ne.s32.totalorder %s144, %s146
    %p150 = scmp.eq.s32.totalorder %s26, 0
    %p151 = por %p149, %p150
    %p152 = scmp.ne.s32.totalorder %s144, %s146
    %p153 = scmp.eq.s32.totalorder %s31, 1
    %p154 = por %p152, %p153
    %p155 = scmp.ne.s32.totalorder %s146, %s147
    %p156 = scmp.eq.s32.totalorder %s31, 0
    %p157 = por %p155, %p156
    %p158 = scmp.ne.s32.totalorder %s146, %s147
    %p159 = scmp.eq.s32.totalorder %s32, 1
    %p160 = por %p158, %p159
    %p162 = scmp.ne.s32.totalorder %s147, %s161
    %p163 = scmp.eq.s32.totalorder %s32, 0
    %p164 = por %p162, %p163
    %s166 = sadd.s32 %s165, 1
    %p169 = scmp.eq.s32.totalorder %s26, 1
    %p170 = scmp.ne.s32.totalorder %s165, %s167
    %p171 = scmp.eq.s32.totalorder %s26, 0
    %p172 = por %p170, %p171
    %p173 = scmp.ne.s32.totalorder %s165, %s167
    %p174 = scmp.eq.s32.totalorder %s31, 1
    %p175 = por %p173, %p174
    %p176 = scmp.ne.s32.totalorder %s167, %s168
    %p177 = scmp.eq.s32.totalorder %s31, 0
    %p178 = por %p176, %p177
    %p179 = scmp.ne.s32.totalorder %s167, %s168
    %p180 = scmp.eq.s32.totalorder %s32, 1
    %p181 = por %p179, %p180
    %p183 = scmp.ne.s32.totalorder %s168, %s182
    %p184 = scmp.eq.s32.totalorder %s32, 0
    %p185 = por %p183, %p184
    %s187 = sadd.s32 %s186, 1
    %p190 = scmp.eq.s32.totalorder %s26, 1
    %p191 = scmp.ne.s32.totalorder %s186, %s188
    %p192 = scmp.eq.s32.totalorder %s26, 0
    %p193 = por %p191, %p192
    %p194 = scmp.ne.s32.totalorder %s186, %s188
    %p195 = scmp.eq.s32.totalorder %s31, 1
    %p196 = por %p194, %p195
    %p197 = scmp.ne.s32.totalorder %s188, %s189
    %p198 = scmp.eq.s32.totalorder %s31, 0
    %p199 = por %p197, %p198
    %p200 = scmp.ne.s32.totalorder %s188, %s189
    %p201 = scmp.eq.s32.totalorder %s32, 1
    %p202 = por %p200, %p201
    %p204 = scmp.ne.s32.totalorder %s189, %s203
    %p205 = scmp.eq.s32.totalorder %s32, 0
    %p206 = por %p204, %p205
    %s208 = sadd.s32 %s207, 1
    %p211 = scmp.eq.s32.totalorder %s26, 1
    %p212 = scmp.ne.s32.totalorder %s207, %s209
    %p213 = scmp.eq.s32.totalorder %s26, 0
    %p214 = por %p212, %p213
    %p215 = scmp.ne.s32.totalorder %s207, %s209
    %p216 = scmp.eq.s32.totalorder %s31, 1
    %p217 = por %p215, %p216
    %p218 = scmp.ne.s32.totalorder %s209, %s210
    %p219 = scmp.eq.s32.totalorder %s31, 0
    %p220 = por %p218, %p219
    %p221 = scmp.ne.s32.totalorder %s209, %s210
    %p222 = scmp.eq.s32.totalorder %s32, 1
    %p223 = por %p221, %p222
    %p225 = scmp.ne.s32.totalorder %s210, %s224
    %p226 = scmp.eq.s32.totalorder %s32, 0
    %p227 = por %p225, %p226
    %s229 = sadd.s32 %s228, 1
    %p232 = scmp.eq.s32.totalorder %s26, 1
    %p233 = scmp.ne.s32.totalorder %s228, %s230
    %p234 = scmp.eq.s32.totalorder %s26, 0
    %p235 = por %p233, %p234
    %p236 = scmp.ne.s32.totalorder %s228, %s230
    %p237 = scmp.eq.s32.totalorder %s31, 1
    %p238 = por %p236, %p237
    %p239 = scmp.ne.s32.totalorder %s230, %s231
    %p240 = scmp.eq.s32.totalorder %s31, 0
    %p241 = por %p239, %p240
    %p242 = scmp.ne.s32.totalorder %s230, %s231
    %p243 = scmp.eq.s32.totalorder %s32, 1
    %p244 = por %p242, %p243
    %p246 = scmp.ne.s32.totalorder %s231, %s245
    %p247 = scmp.eq.s32.totalorder %s32, 0
    %p248 = por %p246, %p247
    %s250 = sadd.s32 %s249, 1
    %p253 = scmp.eq.s32.totalorder %s26, 1
    %p254 = scmp.ne.s32.totalorder %s249, %s251
    %p255 = scmp.eq.s32.totalorder %s26, 0
    %p256 = por %p254, %p255
    %p257 = scmp.ne.s32.totalorder %s249, %s251
    %p258 = scmp.eq.s32.totalorder %s31, 1
    %p259 = por %p257, %p258
    %p260 = scmp.ne.s32.totalorder %s251, %s252
    %p261 = scmp.eq.s32.totalorder %s31, 0
    %p262 = por %p260, %p261
    %p263 = scmp.ne.s32.totalorder %s251, %s252
    %p264 = scmp.eq.s32.totalorder %s32, 1
    %p265 = por %p263, %p264
    %p267 = scmp.ne.s32.totalorder %s252, %s266
    %p268 = scmp.eq.s32.totalorder %s32, 0
    %p269 = por %p267, %p268
    %s271 = sadd.s32 %s270, 1
    %p274 = scmp.eq.s32.totalorder %s26, 1
    %p275 = scmp.ne.s32.totalorder %s270, %s272
    %p276 = scmp.eq.s32.totalorder %s26, 0
    %p277 = por %p275, %p276
    %p278 = scmp.ne.s32.totalorder %s270, %s272
    %p279 = scmp.eq.s32.totalorder %s31, 1
    %p280 = por %p278, %p279
    %p281 = scmp.ne.s32.totalorder %s272, %s273
    %p282 = scmp.eq.s32.totalorder %s31, 0
    %p283 = por %p281, %p282
    %p284 = scmp.ne.s32.totalorder %s272, %s273
    %p285 = scmp.eq.s32.totalorder %s32, 1
    %p286 = por %p284, %p285
    %p288 = scmp.ne.s32.totalorder %s273, %s287
    %p289 = scmp.eq.s32.totalorder %s32, 0
    %p290 = por %p288, %p289
    %s292 = sadd.s32 %s291, 1
    %p295 = scmp.eq.s32.totalorder %s26, 1
    %p296 = scmp.ne.s32.totalorder %s291, %s293
    %p297 = scmp.eq.s32.totalorder %s26, 0
    %p298 = por %p296, %p297
    %p299 = scmp.ne.s32.totalorder %s291, %s293
    %p300 = scmp.eq.s32.totalorder %s31, 1
    %p301 = por %p299, %p300
    %p302 = scmp.ne.s32.totalorder %s293, %s294
    %p303 = scmp.eq.s32.totalorder %s31, 0
    %p304 = por %p302, %p303
    %p305 = scmp.ne.s32.totalorder %s293, %s294
    %p306 = scmp.eq.s32.totalorder %s32, 1
    %p307 = por %p305, %p306
    %p309 = scmp.ne.s32.totalorder %s294, %s308
    %p310 = scmp.eq.s32.totalorder %s32, 0
    %p311 = por %p309, %p310
    %s313 = sadd.s32 %s312, 1
    %p316 = scmp.eq.s32.totalorder %s26, 1
    %p317 = scmp.ne.s32.totalorder %s312, %s314
    %p318 = scmp.eq.s32.totalorder %s26, 0
    %p319 = por %p317, %p318
    %p320 = scmp.ne.s32.totalorder %s312, %s314
    %p321 = scmp.eq.s32.totalorder %s31, 1
    %p322 = por %p320, %p321
    %p323 = scmp.ne.s32.totalorder %s314, %s315
    %p324 = scmp.eq.s32.totalorder %s31, 0
    %p325 = por %p323, %p324
    %p326 = scmp.ne.s32.totalorder %s314, %s315
    %p327 = scmp.eq.s32.totalorder %s32, 1
    %p328 = por %p326, %p327
    %p330 = scmp.ne.s32.totalorder %s315, %s329
    %p331 = scmp.eq.s32.totalorder %s32, 0
    %p332 = por %p330, %p331
    %s334 = sadd.s32 %s333, 1
    %p337 = scmp.eq.s32.totalorder %s26, 1
    %p338 = scmp.ne.s32.totalorder %s333, %s335
    %p339 = scmp.eq.s32.totalorder %s26, 0
    %p340 = por %p338, %p339
    %p341 = scmp.ne.s32.totalorder %s333, %s335
    %p342 = scmp.eq.s32.totalorder %s31, 1
    %p343 = por %p341, %p342
    %p344 = scmp.ne.s32.totalorder %s335, %s336
    %p345 = scmp.eq.s32.totalorder %s31, 0
    %p346 = por %p344, %p345
    %p347 = scmp.ne.s32.totalorder %s335, %s336
    %p348 = scmp.eq.s32.totalorder %s32, 1
    %p349 = por %p347, %p348
    %p351 = scmp.ne.s32.totalorder %s336, %s350
    %p352 = scmp.eq.s32.totalorder %s32, 0
    %p353 = por %p351, %p352
    %s355 = sadd.s32 %s354, 1
    %p358 = scmp.eq.s32.totalorder %s26, 1
    %p359 = scmp.ne.s32.totalorder %s354, %s356
    %p360 = scmp.eq.s32.totalorder %s26, 0
    %p361 = por %p359, %p360
    %p362 = scmp.ne.s32.totalorder %s354, %s356
    %p363 = scmp.eq.s32.totalorder %s31, 1
    %p364 = por %p362, %p363
    %p365 = scmp.ne.s32.totalorder %s356, %s357
    %p366 = scmp.eq.s32.totalorder %s31, 0
    %p367 = por %p365, %p366
    %p368 = scmp.ne.s32.totalorder %s356, %s357
    %p369 = scmp.eq.s32.totalorder %s32, 1
    %p370 = por %p368, %p369
    %p372 = scmp.ne.s32.totalorder %s357, %s371
    %p373 = scmp.eq.s32.totalorder %s32, 0
    %p374 = por %p372, %p373
    %s376 = sadd.s32 %s375, 1
    %p379 = scmp.eq.s32.totalorder %s26, 1
    %p380 = scmp.ne.s32.totalorder %s375, %s377
    %p381 = scmp.eq.s32.totalorder %s26, 0
    %p382 = por %p380, %p381
    %p383 = scmp.ne.s32.totalorder %s375, %s377
    %p384 = scmp.eq.s32.totalorder %s31, 1
    %p385 = por %p383, %p384
    %p386 = scmp.ne.s32.totalorder %s377, %s378
    %p387 = scmp.eq.s32.totalorder %s31, 0
    %p388 = por %p386, %p387
    %p389 = scmp.ne.s32.totalorder %s377, %s378
    %p390 = scmp.eq.s32.totalorder %s32, 1
    %p391 = por %p389, %p390
    %p393 = scmp.ne.s32.totalorder %s378, %s392
    %p394 = scmp.eq.s32.totalorder %s32, 0
    %p395 = por %p393, %p394
    %s397 = sadd.s32 %s396, 1
    %p400 = scmp.eq.s32.totalorder %s26, 1
    %p401 = scmp.ne.s32.totalorder %s396, %s398
    %p402 = scmp.eq.s32.totalorder %s26, 0
    %p403 = por %p401, %p402
    %p404 = scmp.ne.s32.totalorder %s396, %s398
    %p405 = scmp.eq.s32.totalorder %s31, 1
    %p406 = por %p404, %p405
    %p407 = scmp.ne.s32.totalorder %s398, %s399
    %p408 = scmp.eq.s32.totalorder %s31, 0
    %p409 = por %p407, %p408
    %p410 = scmp.ne.s32.totalorder %s398, %s399
    %p411 = scmp.eq.s32.totalorder %s32, 1
    %p412 = por %p410, %p411
    %p414 = scmp.ne.s32.totalorder %s399, %s413
    %p415 = scmp.eq.s32.totalorder %s32, 0
    %p416 = por %p414, %p415
    %s418 = sadd.s32 %s417, 1
    %p421 = scmp.eq.s32.totalorder %s26, 1
    %p422 = scmp.ne.s32.totalorder %s417, %s419
    %p423 = scmp.eq.s32.totalorder %s26, 0
    %p424 = por %p422, %p423
    %p425 = scmp.ne.s32.totalorder %s417, %s419
    %p426 = scmp.eq.s32.totalorder %s31, 1
    %p427 = por %p425, %p426
    %p428 = scmp.ne.s32.totalorder %s419, %s420
    %p429 = scmp.eq.s32.totalorder %s31, 0
    %p430 = por %p428, %p429
    %p431 = scmp.ne.s32.totalorder %s419, %s420
    %p432 = scmp.eq.s32.totalorder %s32, 1
    %p433 = por %p431, %p432
    %p435 = scmp.ne.s32.totalorder %s420, %s434
    %p436 = scmp.eq.s32.totalorder %s32, 0
    %p437 = por %p435, %p436
    %s439 = sadd.s32 %s438, 1
    %p442 = scmp.eq.s32.totalorder %s26, 1
    %p443 = scmp.ne.s32.totalorder %s438, %s440
    %p444 = scmp.eq.s32.totalorder %s26, 0
    %p445 = por %p443, %p444
    %p446 = scmp.ne.s32.totalorder %s438, %s440
    %p447 = scmp.eq.s32.totalorder %s31, 1
    %p448 = por %p446, %p447
    %p449 = scmp.ne.s32.totalorder %s440, %s441
    %p450 = scmp.eq.s32.totalorder %s31, 0
    %p451 = por %p449, %p450
    %p452 = scmp.ne.s32.totalorder %s440, %s441
    %p453 = scmp.eq.s32.totalorder %s32, 1
    %p454 = por %p452, %p453
    %p456 = scmp.ne.s32.totalorder %s441, %s455
    %p457 = scmp.eq.s32.totalorder %s32, 0
    %p458 = por %p456, %p457
    %s459 = ssub.s32 %s26, %s33
    %p460 = scmp.eq.s32.totalorder %s459, 0
    %s462 = sadd.s32 %s461, 1
    %s463 = scalar_select %p460, %s461, %s462
    %p466 = pneg %p460
    %p467 = scmp.eq.s32.totalorder %s26, 1
    %p468 = por %p466, %p467
    %p469 = scmp.ne.s32.totalorder %s461, %s464
    %p470 = scmp.eq.s32.totalorder %s26, 0
    %p471 = por %p469, %p470
    %p472 = scmp.ne.s32.totalorder %s461, %s464
    %p473 = scmp.eq.s32.totalorder %s31, 1
    %p474 = por %p472, %p473
    %p475 = scmp.ne.s32.totalorder %s464, %s465
    %p476 = scmp.eq.s32.totalorder %s31, 0
    %p477 = por %p475, %p476
    %p478 = scmp.ne.s32.totalorder %s464, %s465
    %p479 = scmp.eq.s32.totalorder %s32, 1
    %p480 = por %p478, %p479
    %p482 = scmp.ne.s32.totalorder %s465, %s481
    %p483 = scmp.eq.s32.totalorder %s32, 0
    %p484 = por %p482, %p483
    %p485 = scmp.le.s32.totalorder 1, %s26
    %p486 = scmp.lt.s32.totalorder %s26, 3
    %p487 = pnand %p485, %p486
    %p488 = pneg %p487
    // Predicated region
    $region9: #{segmenter_forward.1} parent=5 // pred_check
      _
    $region10: #{segmenter_forward.1} parent=5 // pred_check_branch
      %490 = sbr.rel (%p487) target = $region12
    $region11: #{segmenter_forward.1} parent=5 // pred_region
      %s491 = ssub.s32 %s26, 1
      // Predicated region
      $region13: #{segmenter_forward.1} parent=11 // pred_check
        %p492 = pneg %p73
      $region14: #{segmenter_forward.1} parent=11 // pred_check_branch
        %494 = sbr.rel (%p492) target = $region16
      $region15: #{segmenter_forward.1} parent=11 // pred_region
        _
      $region16: #{segmenter_forward.1} parent=11 // pred_fallthru
        _
      // Predicated region
      $region17: #{segmenter_forward.1} parent=11 // pred_check
        %p495 = pneg %p94
      $region18: #{segmenter_forward.1} parent=11 // pred_check_branch
        %497 = sbr.rel (%p495) target = $region20
      $region19: #{segmenter_forward.1} parent=11 // pred_region
        _
      $region20: #{segmenter_forward.1} parent=11 // pred_fallthru
        _
      // Predicated region
      $region21: #{segmenter_forward.1} parent=11 // pred_check
        %p498 = pneg %p115
      $region22: #{segmenter_forward.1} parent=11 // pred_check_branch
        %500 = sbr.rel (%p498) target = $region24
      $region23: #{segmenter_forward.1} parent=11 // pred_region
        _
      $region24: #{segmenter_forward.1} parent=11 // pred_fallthru
        _
      // Predicated region
      $region25: #{segmenter_forward.1} parent=11 // pred_check
        %p501 = pneg %p136
      $region26: #{segmenter_forward.1} parent=11 // pred_check_branch
        %503 = sbr.rel (%p501) target = $region28
      $region27: #{segmenter_forward.1} parent=11 // pred_region
        _
      $region28: #{segmenter_forward.1} parent=11 // pred_fallthru
        _
      // Predicated region
      $region29: #{segmenter_forward.1} parent=11 // pred_check
        %p504 = pneg %p157
      $region30: #{segmenter_forward.1} parent=11 // pred_check_branch
        %506 = sbr.rel (%p504) target = $region32
      $region31: #{segmenter_forward.1} parent=11 // pred_region
        _
      $region32: #{segmenter_forward.1} parent=11 // pred_fallthru
        _
      // Predicated region
      $region33: #{segmenter_forward.1} parent=11 // pred_check
        %p507 = pneg %p178
      $region34: #{segmenter_forward.1} parent=11 // pred_check_branch
        %509 = sbr.rel (%p507) target = $region36
      $region35: #{segmenter_forward.1} parent=11 // pred_region
        _
      $region36: #{segmenter_forward.1} parent=11 // pred_fallthru
        _
      // Predicated region
      $region37: #{segmenter_forward.1} parent=11 // pred_check
        %p510 = pneg %p199
      $region38: #{segmenter_forward.1} parent=11 // pred_check_branch
        %512 = sbr.rel (%p510) target = $region40
      $region39: #{segmenter_forward.1} parent=11 // pred_region
        _
      $region40: #{segmenter_forward.1} parent=11 // pred_fallthru
        _
      // Predicated region
      $region41: #{segmenter_forward.1} parent=11 // pred_check
        %p513 = pneg %p220
      $region42: #{segmenter_forward.1} parent=11 // pred_check_branch
        %515 = sbr.rel (%p513) target = $region44
      $region43: #{segmenter_forward.1} parent=11 // pred_region
        _
      $region44: #{segmenter_forward.1} parent=11 // pred_fallthru
        _
      // Predicated region
      $region45: #{segmenter_forward.1} parent=11 // pred_check
        %p516 = pneg %p241
      $region46: #{segmenter_forward.1} parent=11 // pred_check_branch
        %518 = sbr.rel (%p516) target = $region48
      $region47: #{segmenter_forward.1} parent=11 // pred_region
        _
      $region48: #{segmenter_forward.1} parent=11 // pred_fallthru
        _
      // Predicated region
      $region49: #{segmenter_forward.1} parent=11 // pred_check
        %p519 = pneg %p262
      $region50: #{segmenter_forward.1} parent=11 // pred_check_branch
        %521 = sbr.rel (%p519) target = $region52
      $region51: #{segmenter_forward.1} parent=11 // pred_region
        _
      $region52: #{segmenter_forward.1} parent=11 // pred_fallthru
        _
      // Predicated region
      $region53: #{segmenter_forward.1} parent=11 // pred_check
        %p522 = pneg %p283
      $region54: #{segmenter_forward.1} parent=11 // pred_check_branch
        %524 = sbr.rel (%p522) target = $region56
      $region55: #{segmenter_forward.1} parent=11 // pred_region
        _
      $region56: #{segmenter_forward.1} parent=11 // pred_fallthru
        _
      // Predicated region
      $region57: #{segmenter_forward.1} parent=11 // pred_check
        %p525 = pneg %p304
      $region58: #{segmenter_forward.1} parent=11 // pred_check_branch
        %527 = sbr.rel (%p525) target = $region60
      $region59: #{segmenter_forward.1} parent=11 // pred_region
        _
      $region60: #{segmenter_forward.1} parent=11 // pred_fallthru
        _
      // Predicated region
      $region61: #{segmenter_forward.1} parent=11 // pred_check
        %p528 = pneg %p325
      $region62: #{segmenter_forward.1} parent=11 // pred_check_branch
        %530 = sbr.rel (%p528) target = $region64
      $region63: #{segmenter_forward.1} parent=11 // pred_region
        _
      $region64: #{segmenter_forward.1} parent=11 // pred_fallthru
        _
      // Predicated region
      $region65: #{segmenter_forward.1} parent=11 // pred_check
        %p531 = pneg %p346
      $region66: #{segmenter_forward.1} parent=11 // pred_check_branch
        %533 = sbr.rel (%p531) target = $region68
      $region67: #{segmenter_forward.1} parent=11 // pred_region
        _
      $region68: #{segmenter_forward.1} parent=11 // pred_fallthru
        _
      // Predicated region
      $region69: #{segmenter_forward.1} parent=11 // pred_check
        %p534 = pneg %p367
      $region70: #{segmenter_forward.1} parent=11 // pred_check_branch
        %536 = sbr.rel (%p534) target = $region72
      $region71: #{segmenter_forward.1} parent=11 // pred_region
        _
      $region72: #{segmenter_forward.1} parent=11 // pred_fallthru
        _
      // Predicated region
      $region73: #{segmenter_forward.1} parent=11 // pred_check
        %p537 = pneg %p388
      $region74: #{segmenter_forward.1} parent=11 // pred_check_branch
        %539 = sbr.rel (%p537) target = $region76
      $region75: #{segmenter_forward.1} parent=11 // pred_region
        _
      $region76: #{segmenter_forward.1} parent=11 // pred_fallthru
        _
      // Predicated region
      $region77: #{segmenter_forward.1} parent=11 // pred_check
        %p540 = pneg %p409
      $region78: #{segmenter_forward.1} parent=11 // pred_check_branch
        %542 = sbr.rel (%p540) target = $region80
      $region79: #{segmenter_forward.1} parent=11 // pred_region
        _
      $region80: #{segmenter_forward.1} parent=11 // pred_fallthru
        _
      // Predicated region
      $region81: #{segmenter_forward.1} parent=11 // pred_check
        %p543 = pneg %p430
      $region82: #{segmenter_forward.1} parent=11 // pred_check_branch
        %545 = sbr.rel (%p543) target = $region84
      $region83: #{segmenter_forward.1} parent=11 // pred_region
        _
      $region84: #{segmenter_forward.1} parent=11 // pred_fallthru
        _
      // Predicated region
      $region85: #{segmenter_forward.1} parent=11 // pred_check
        %p546 = pneg %p451
      $region86: #{segmenter_forward.1} parent=11 // pred_check_branch
        %548 = sbr.rel (%p546) target = $region88
      $region87: #{segmenter_forward.1} parent=11 // pred_region
        _
      $region88: #{segmenter_forward.1} parent=11 // pred_fallthru
        _
    $region12: #{segmenter_forward.1} parent=5 // pred_fallthru
      _
    %p549 = scmp.lt.s32.totalorder %s26, 2
    // Predicated region
    $region89: #{segmenter_forward.1} parent=5 // pred_check
      %p550 = pneg %p549
    $region90: #{segmenter_forward.1} parent=5 // pred_check_branch
      %552 = sbr.rel (%p550) target = $region92
    $region91: #{segmenter_forward.1} parent=5 // pred_region
      // Predicated region
      $region93: #{segmenter_forward.1} parent=91 // pred_check
        %p553 = pneg %p46
      $region94: #{segmenter_forward.1} parent=91 // pred_check_branch
        %555 = sbr.rel (%p553) target = $region96
      $region95: #{segmenter_forward.1} parent=91 // pred_region
        %p556 = scmp.lt.s32.totalorder %s26, 1
        %s557 = scalar_select %p556, %s26, 1
        %s558 = smul.addr %s557, 6
        %s559 = smul.addr %s558, 8
        %s560 = scalar_lea.vmem %s0, %s559
      $region96: #{segmenter_forward.1} parent=91 // pred_fallthru
        _
    $region92: #{segmenter_forward.1} parent=5 // pred_fallthru
      _
    %p561 = scmp.le.s32.totalorder 1, %s26
    %p562 = scmp.lt.s32.totalorder %s26, 3
    %p563 = pnand %p561, %p562
    %p564 = pneg %p563
    // Predicated region
    $region97: #{segmenter_forward.1} parent=5 // pred_check
      _
    $region98: #{segmenter_forward.1} parent=5 // pred_check_branch
      %566 = sbr.rel (%p563) target = $region100
    $region99: #{segmenter_forward.1} parent=5 // pred_region
      %s567 = ssub.s32 %s26, 1
      %p568 = scmp.lt.s32.totalorder %s31, 1
      %s569 = scalar_select %p568, %s31, 1
      %s570 = smul.addr %s569, 6
      %s571 = smul.addr %s570, 8
      %s572 = scalar_lea.vmem %s0, %s571
      %p573 = pneg %p52
      %p574 = pneg %p49
      %p575 = pneg %p73
      %p576 = pneg %p70
      %p577 = pneg %p94
      %p578 = pneg %p91
      %p579 = pneg %p115
      %p580 = pneg %p112
      %p581 = pneg %p136
      %p582 = pneg %p133
      %p583 = pneg %p157
      %p584 = pneg %p154
      %p585 = pneg %p178
      %p586 = pneg %p175
      %p587 = pneg %p199
      %p588 = pneg %p196
      %p589 = pneg %p220
      %p590 = pneg %p217
      %p591 = pneg %p241
      %p592 = pneg %p238
      %p593 = pneg %p262
      %p594 = pneg %p259
      %p595 = pneg %p283
      %p596 = pneg %p280
      %p597 = pneg %p304
      %p598 = pneg %p301
      %p599 = pneg %p325
      %p600 = pneg %p322
      %p601 = pneg %p346
      %p602 = pneg %p343
      %p603 = pneg %p367
      %p604 = pneg %p364
      %p605 = pneg %p388
      %p606 = pneg %p385
      %p607 = pneg %p409
      %p608 = pneg %p406
      %p609 = pneg %p430
      %p610 = pneg %p427
      %p611 = pneg %p451
      %p612 = pneg %p448
      %p613 = pneg %p477
      %p614 = pneg %p474
      %p615 = scmp.lt.s32.totalorder %s31, 1
      %s616 = scalar_select %p615, %s31, 1
      %s617 = smul.addr %s616, 8
      %s618 = smul.addr %s617, 4
      %s619 = scalar_lea.vmem %s20, %s618
      %p620 = scmp.lt.s32.totalorder %s31, 1
      %s621 = scalar_select %p620, %s31, 1
      %s622 = smul.addr %s621, 6
      %s623 = smul.addr %s622, 8
      %s624 = scalar_lea.vmem %s0, %s623
      %p625 = scmp.lt.s32.totalorder %s31, 1
      %s626 = scalar_select %p625, %s31, 1
      %s627 = smul.addr %s626, 8
      %s628 = smul.addr %s627, 4
      %s629 = scalar_lea.vmem %s20, %s628
      %v630 = vld [vmem:[%s624] sm:$0xff]
      %v631 = vld [vmem:[%s624 + $0x8] sm:$0xff]
      %v632 = vld [vmem:[%s624 + $0x10] sm:$0xff]
      %v633 = vld [vmem:[%s624 + $0x18] sm:$0xff]
      %v634 = vld [vmem:[%s624 + $0x20] sm:$0xff]
      %v635 = vld [vmem:[%s624 + $0x28] sm:$0xff]
      %v636 = vld [vmem:[%s1] sm:$0xff]
      %v637 = vld [vmem:[%s1 + $0x8] sm:$0xff]
      %v638 = vld [vmem:[%s1 + $0x10] sm:$0xff]
      %v639 = vld [vmem:[%s1 + $0x18] sm:$0xff]
      %v640 = vld [vmem:[%s1 + $0x20] sm:$0xff]
      %v641 = vld [vmem:[%s1 + $0x28] sm:$0xff]
      %v642 = vld [vmem:[%s1 + $0x30] sm:$0xff]
      %v643 = vld [vmem:[%s1 + $0x38] sm:$0xff]
      %v644 = vld [vmem:[%s1 + $0x40] sm:$0xff]
      %v645 = vld [vmem:[%s1 + $0x48] sm:$0xff]
      %v646 = vld [vmem:[%s1 + $0x50] sm:$0xff]
      %v647 = vld [vmem:[%s1 + $0x58] sm:$0xff]
      %v648 = vld [vmem:[%s1 + $0x60] sm:$0xff]
      %v649 = vld [vmem:[%s1 + $0x68] sm:$0xff]
      %v650 = vld [vmem:[%s1 + $0x70] sm:$0xff]
      %v651 = vld [vmem:[%s1 + $0x78] sm:$0xff]
      %v652 = vld [vmem:[%s1 + $0x80] sm:$0xff]
      %v653 = vld [vmem:[%s1 + $0x88] sm:$0xff]
      %v654 = vld [vmem:[%s1 + $0x90] sm:$0xff]
      %v655 = vld [vmem:[%s1 + $0x98] sm:$0xff]
      %v656 = vld [vmem:[%s1 + $0xa0] sm:$0xff]
      %v657 = vld [vmem:[%s1 + $0xa8] sm:$0xff]
      %v658 = vld [vmem:[%s1 + $0xb0] sm:$0xff]
      %v659 = vld [vmem:[%s1 + $0xb8] sm:$0xff]
      %v660 = vld [vmem:[%s2] sm:$0xff]
      %v661 = vld [vmem:[%s2 + $0x8] sm:$0xff]
      %v662 = vld [vmem:[%s2 + $0x10] sm:$0xff]
      %vm663 = vcmask 523264
      %v665 = vsel %vm663, %v631, 0
      %v668 = vsel %vm663, %v633, 0
      %v671 = vsel %vm663, %v635, 0
      %673 = vmatpush.msra.mxu0 %v651
      %674 = vmatpush.msra.mxu0 %v650
      %675 = vmatpush.msra.mxu0 %v649
      %676 = vmatpush.msra.mxu0 %v648
      %677 = vmatpush.msra.mxu0 %v647
      %678 = vmatpush.msra.mxu0 %v646
      %679 = vmatpush.msra.mxu0 %v645
      %680 = vmatpush.msra.mxu0 %v644
      %681 = vmatpush.msra.mxu0 %v643
      %682 = vmatpush.msra.mxu0 %v642
      %683 = vmatpush.msra.mxu0 %v641
      %684 = vmatpush.msra.mxu0 %v640
      %685 = vmatpush.msra.mxu0 %v639
      %686 = vmatpush.msra.mxu0 %v638
      %687 = vmatpush.msra.mxu0 %v637
      %688 = vmatpush.msra.mxu0 %v636
      %689 = vmatmul.f32.gmra.mxu0 %v630
      %v690 = vpop.f32.mrf.mxu0
      %v691 = vadd.f32 %v660, %v690
      %692 = vmatmul.f32.gmra.mxu0 %v632
      %v693 = vpop.f32.mrf.mxu0
      %v694 = vadd.f32 %v661, %v693
      %695 = vmatmul.f32.gmra.mxu0 %v634
      %v696 = vpop.f32.mrf.mxu0
      %v697 = vadd.f32 %v662, %v696
      %698 = vdwg.mxu0
      %699 = vmatpush.msra.mxu0 0.0
      %700 = vmatpush.msra.mxu0 0.0
      %701 = vmatpush.msra.mxu0 0.0
      %702 = vmatpush.msra.mxu0 0.0
      %703 = vmatpush.msra.mxu0 0.0
      %704 = vmatpush.msra.mxu0 0.0
      %705 = vmatpush.msra.mxu0 0.0
      %706 = vmatpush.msra.mxu0 0.0
      %707 = vmatpush.msra.mxu0 %v659
      %708 = vmatpush.msra.mxu0 %v658
      %709 = vmatpush.msra.mxu0 %v657
      %710 = vmatpush.msra.mxu0 %v656
      %711 = vmatpush.msra.mxu0 %v655
      %712 = vmatpush.msra.mxu0 %v654
      %713 = vmatpush.msra.mxu0 %v653
      %714 = vmatpush.msra.mxu0 %v652
      %715 = vmatmul.f32.gmra.mxu0 %v665
      %v716 = vpop.f32.mrf.mxu0
      %v717 = vadd.f32 %v691, %v716
      %718 = vmatmul.f32.gmra.mxu0 %v668
      %v719 = vpop.f32.mrf.mxu0
      %v720 = vadd.f32 %v694, %v719
      %721 = vmatmul.f32.gmra.mxu0 %v671
      %v722 = vpop.f32.mrf.mxu0
      %v723 = vadd.f32 %v697, %v722
      %724 = vdwg.mxu0
      %v725 = vlaneseq
      %v726 = vand.u32 %v725, 127
      %vm727 = vcmp.lt.s32.totalorder %v726, 17
      %v728 = vld [vmem:[%s3] sm:$0x1]
      %v729 = vld [vmem:[%s4] sm:$0x1]
      %vm730 = vcmask 261120
      %v731 = vsel %vm730, %v717, 0.0
      %732 = vadd.xlane.f32.xlu0 %v731
      %v733 = vpop.xlane.xlu0 %732
      %v734 = vsel %vm730, %v720, 0.0
      %735 = vadd.xlane.f32.xlu0 %v734
      %v736 = vpop.xlane.xlu0 %735
      %v737 = vsel %vm730, %v723, 0.0
      %738 = vadd.xlane.f32.xlu0 %v737
      %v739 = vpop.xlane.xlu0 %738
      %v740 = vrcp.pop 32.0
      %v741 = vmul.f32 32.0, %v740
      %v742 = vsub.f32 1.0, %v741
      %v743 = vmul.f32 %v740, %v742
      %v744 = vadd.f32 %v740, %v743
      %vm745 = vweird.f32 %v740
      %v746 = vsel %vm745, %v740, %v744
      %v747 = vmul.f32 %v733, %v746
      %v748 = vmul.f32 %v736, %v746
      %v749 = vmul.f32 %v739, %v746
      %v750 = vsub.f32 %v717, %v747
      %v751 = vsub.f32 %v720, %v748
      %v752 = vsub.f32 %v723, %v749
      %v753 = vmul.f32 %v750, %v750
      %v754 = vmul.f32 %v751, %v751
      %v755 = vmul.f32 %v752, %v752
      %v756 = vsel %vm730, %v753, 0.0
      %757 = vadd.xlane.f32.xlu0 %v756
      %v758 = vpop.xlane.xlu0 %757
      %v759 = vsel %vm730, %v754, 0.0
      %760 = vadd.xlane.f32.xlu0 %v759
      %v761 = vpop.xlane.xlu0 %760
      %v762 = vsel %vm730, %v755, 0.0
      %763 = vadd.xlane.f32.xlu0 %v762
      %v764 = vpop.xlane.xlu0 %763
      %v765 = vmul.f32 %v758, %v746
      %v766 = vmul.f32 %v761, %v746
      %v767 = vmul.f32 %v764, %v746
      %v768 = vadd.f32 %v765, 1e-06
      %v769 = vadd.f32 %v766, 1e-06
      %v770 = vadd.f32 %v767, 1e-06
      %v771 = vrsqrt.pop %v768
      %v772 = vmul.f32 %v771, %v768
      %v773 = vmul.f32 %v772, %v771
      %v774 = vmul.f32 0.5, %v773
      %v775 = vsub.f32 1.5, %v774
      %v776 = vmul.f32 %v771, %v775
      %vm777 = vweird.f32 %v768
      %vm778 = vweird.f32 %v771
      %vm779 = vmor %vm777, %vm778
      %v780 = vsel %vm779, %v771, %v776
      %v781 = vrsqrt.pop %v769
      %v782 = vmul.f32 %v781, %v769
      %v783 = vmul.f32 %v782, %v781
      %v784 = vmul.f32 0.5, %v783
      %v785 = vsub.f32 1.5, %v784
      %v786 = vmul.f32 %v781, %v785
      %vm787 = vweird.f32 %v769
      %vm788 = vweird.f32 %v781
      %vm789 = vmor %vm787, %vm788
      %v790 = vsel %vm789, %v781, %v786
      %v791 = vrsqrt.pop %v770
      %v792 = vmul.f32 %v791, %v770
      %v793 = vmul.f32 %v792, %v791
      %v794 = vmul.f32 0.5, %v793
      %v795 = vsub.f32 1.5, %v794
      %v796 = vmul.f32 %v791, %v795
      %vm797 = vweird.f32 %v770
      %vm798 = vweird.f32 %v791
      %vm799 = vmor %vm797, %vm798
      %v800 = vsel %vm799, %v791, %v796
      %v801 = vmul.f32 %v750, %v780
      %v802 = vmul.f32 %v751, %v790
      %v803 = vmul.f32 %v752, %v800
      %v805 = vperm.slane %v728, 0
      %v807 = vmul.f32 %v801, %v805
      %v808 = vmul.f32 %v802, %v805
      %v809 = vmul.f32 %v803, %v805
      %v811 = vperm.slane %v729, 0
      %v813 = vadd.f32 %v807, %v811
      %v814 = vadd.f32 %v808, %v811
      %v815 = vadd.f32 %v809, %v811
      %v816 = vld [vmem:[%s5] sm:$0xff]
      %v817 = vld [vmem:[%s5 + $0x8] sm:$0xff]
      %v818 = vld [vmem:[%s5 + $0x10] sm:$0xff]
      %v819 = vld [vmem:[%s5 + $0x18] sm:$0xff]
      %v820 = vld [vmem:[%s6] sm:$0x1]
      %v822 = vperm.slane %v820, 0
      %v825 = vsel %vm730, %v813, 0
      %v828 = vsel %vm730, %v814, 0
      %v831 = vsel %vm730, %v815, 0
      %833 = vmatpush.msra.mxu0 0.0
      %834 = vmatpush.msra.mxu0 0.0
      %835 = vmatpush.msra.mxu0 0.0
      %836 = vmatpush.msra.mxu0 0.0
      %837 = vmatpush.msra.mxu0 0.0
      %838 = vmatpush.msra.mxu0 0.0
      %839 = vmatpush.msra.mxu0 0.0
      %840 = vmatpush.msra.mxu0 0.0
      %841 = vmatpush.msra.mxu0 0.0
      %842 = vmatpush.msra.mxu0 0.0
      %843 = vmatpush.msra.mxu0 0.0
      %844 = vmatpush.msra.mxu0 0.0
      %845 = vmatpush.msra.mxu0 %v819
      %846 = vmatpush.msra.mxu0 %v818
      %847 = vmatpush.msra.mxu0 %v817
      %848 = vmatpush.msra.mxu0 %v816
      %849 = vmatmul.f32.gmra.mxu0 %v825
      %v850 = vpop.f32.mrf.mxu0
      %v851 = vadd.f32 %v822, %v850
      %852 = vmatmul.f32.gmra.mxu0 %v828
      %v853 = vpop.f32.mrf.mxu0
      %v854 = vadd.f32 %v822, %v853
      %855 = vmatmul.f32.gmra.mxu0 %v831
      %v856 = vpop.f32.mrf.mxu0
      %v857 = vadd.f32 %v822, %v856
      %858 = vdwg.mxu0
      %v859 = vld [vmem:[%s7] sm:$0xff]
      %v860 = vld [vmem:[%s7 + $0x8] sm:$0xff]
      %v861 = vld [vmem:[%s7 + $0x10] sm:$0xff]
      %v862 = vld [vmem:[%s7 + $0x18] sm:$0xff]
      %866 = vrot.lane.b32.xlu0 %v851, 96
      %v867 = vpop.permute.xlu0 %866
      %868 = vrot.lane.b32.xlu0 %v854, 96
      %v869 = vpop.permute.xlu0 %868
      %870 = vrot.lane.b32.xlu0 %v857, 96
      %v871 = vpop.permute.xlu0 %870
      %vm872 = vcmask 130048
      %v873 = vsel %vm872, %v851, 0
      %v875 = vsel %vm872, %v854, 0
      %v877 = vsel %vm872, %v857, 0
      %v879 = vsel %vm872, %v867, 0
      %v881 = vsel %vm872, %v869, 0
      %v883 = vsel %vm872, %v871, 0
      %885 = vmatpush.xpose.msra.mxu0 0.0
      %886 = vmatpush.xpose.msra.mxu0 0.0
      %887 = vmatpush.xpose.msra.mxu0 0.0
      %888 = vmatpush.xpose.msra.mxu0 0.0
      %889 = vmatpush.xpose.msra.mxu0 0.0
      %890 = vmatpush.xpose.msra.mxu0 0.0
      %891 = vmatpush.xpose.msra.mxu0 0.0
      %892 = vmatpush.xpose.msra.mxu0 0.0
      %893 = vmatpush.xpose.msra.mxu0 0.0
      %894 = vmatpush.xpose.msra.mxu0 0.0
      %895 = vmatpush.xpose.msra.mxu0 0.0
      %896 = vmatpush.xpose.msra.mxu0 0.0
      %897 = vmatpush.xpose.msra.mxu0 0.0
      %898 = vmatpush.xpose.msra.mxu0 %v883
      %899 = vmatpush.xpose.msra.mxu0 %v881
      %900 = vmatpush.xpose.msra.mxu0 %v879
      %901 = vmatmul.f32.gmra.mxu0 %v873
      %v902 = vpop.f32.mrf.mxu0
      %v903 = vadd.f32 0.0, %v902
      %904 = vmatmul.f32.gmra.mxu0 %v875
      %v905 = vpop.f32.mrf.mxu0
      %v906 = vadd.f32 0.0, %v905
      %907 = vmatmul.f32.gmra.mxu0 %v877
      %v908 = vpop.f32.mrf.mxu0
      %v909 = vadd.f32 0.0, %v908
      %910 = vdwg.mxu0
      %v911 = vmul.f32 %v903, 0.25
      %v912 = vmul.f32 %v906, 0.25
      %v913 = vmul.f32 %v909, 0.25
      %v914 = vsel %vm727, %v911, -1e+30
      %v915 = vsel %vm727, %v912, -1e+30
      %v916 = vsel %vm727, %v913, -1e+30
      %vm917 = vcmask 195584
      %v918 = vsel %vm917, %v914, -inf
      %919 = vmax.xlane.f32.xlu0 %v918
      %v920 = vpop.xlane.xlu0 %919
      %v921 = vsel %vm917, %v915, -inf
      %922 = vmax.xlane.f32.xlu0 %v921
      %v923 = vpop.xlane.xlu0 %922
      %v924 = vsel %vm917, %v916, -inf
      %925 = vmax.xlane.f32.xlu0 %v924
      %v926 = vpop.xlane.xlu0 %925
      %v927 = vsub.f32 %v914, %v920
      %v928 = vsub.f32 %v915, %v923
      %v929 = vsub.f32 %v916, %v926
      %v930 = vmul.f32 %v927, 1.442695
      %v931 = vpow.pop %v930
      %v932 = vmul.f32 %v928, 1.442695
      %v933 = vpow.pop %v932
      %v934 = vmul.f32 %v929, 1.442695
      %v935 = vpow.pop %v934
      %v936 = vsel %vm917, %v931, 0.0
      %937 = vadd.xlane.f32.xlu0 %v936
      %v938 = vpop.xlane.xlu0 %937
      %v939 = vsel %vm917, %v933, 0.0
      %940 = vadd.xlane.f32.xlu0 %v939
      %v941 = vpop.xlane.xlu0 %940
      %v942 = vsel %vm917, %v935, 0.0
      %943 = vadd.xlane.f32.xlu0 %v942
      %v944 = vpop.xlane.xlu0 %943
      %v945 = vrcp.pop %v938
      %v946 = vrcp.pop %v941
      %v947 = vrcp.pop %v944
      %v948 = vmul.f32 %v931, %v945
      %v949 = vmul.f32 %v933, %v946
      %v950 = vmul.f32 %v935, %v947
      %951 = vrot.lane.b32.xlu0 %v851, 64
      %v952 = vpop.permute.xlu0 %951
      %953 = vrot.lane.b32.xlu0 %v854, 64
      %v954 = vpop.permute.xlu0 %953
      %955 = vrot.lane.b32.xlu0 %v857, 64
      %v956 = vpop.permute.xlu0 %955
      %v961 = vsel %vm917, %v948, 0
      %v964 = vsel %vm917, %v949, 0
      %v967 = vsel %vm917, %v950, 0
      %969 = vmatpush.msra.mxu0 0.0
      %970 = vmatpush.msra.mxu0 0.0
      %971 = vmatpush.msra.mxu0 0.0
      %972 = vmatpush.msra.mxu0 0.0
      %973 = vmatpush.msra.mxu0 0.0
      %974 = vmatpush.msra.mxu0 0.0
      %975 = vmatpush.msra.mxu0 0.0
      %976 = vmatpush.msra.mxu0 0.0
      %977 = vmatpush.msra.mxu0 0.0
      %978 = vmatpush.msra.mxu0 0.0
      %979 = vmatpush.msra.mxu0 0.0
      %980 = vmatpush.msra.mxu0 0.0
      %981 = vmatpush.msra.mxu0 0.0
      %982 = vmatpush.msra.mxu0 %v956
      %983 = vmatpush.msra.mxu0 %v954
      %984 = vmatpush.msra.mxu0 %v952
      %985 = vmatmul.f32.gmra.mxu0 %v961
      %v986 = vpop.f32.mrf.mxu0
      %v987 = vadd.f32 0.0, %v986
      %988 = vmatmul.f32.gmra.mxu0 %v964
      %v989 = vpop.f32.mrf.mxu0
      %v990 = vadd.f32 0.0, %v989
      %991 = vmatmul.f32.gmra.mxu0 %v967
      %v992 = vpop.f32.mrf.mxu0
      %v993 = vadd.f32 0.0, %v992
      %994 = vdwg.mxu0
      %995 = vrot.lane.b32.xlu0 %v851, 112
      %v996 = vpop.permute.xlu0 %995
      %997 = vrot.lane.b32.xlu0 %v854, 112
      %v998 = vpop.permute.xlu0 %997
      %999 = vrot.lane.b32.xlu0 %v857, 112
      %v1000 = vpop.permute.xlu0 %999
      %1001 = vrot.lane.b32.xlu0 %v851, 80
      %v1002 = vpop.permute.xlu0 %1001
      %1003 = vrot.lane.b32.xlu0 %v854, 80
      %v1004 = vpop.permute.xlu0 %1003
      %1005 = vrot.lane.b32.xlu0 %v857, 80
      %v1006 = vpop.permute.xlu0 %1005
      %v1007 = vsel %vm872, %v996, 0
      %v1009 = vsel %vm872, %v998, 0
      %v1011 = vsel %vm872, %v1000, 0
      %v1013 = vsel %vm872, %v1002, 0
      %v1015 = vsel %vm872, %v1004, 0
      %v1017 = vsel %vm872, %v1006, 0
      %1019 = vmatpush.xpose.msra.mxu0 0.0
      %1020 = vmatpush.xpose.msra.mxu0 0.0
      %1021 = vmatpush.xpose.msra.mxu0 0.0
      %1022 = vmatpush.xpose.msra.mxu0 0.0
      %1023 = vmatpush.xpose.msra.mxu0 0.0
      %1024 = vmatpush.xpose.msra.mxu0 0.0
      %1025 = vmatpush.xpose.msra.mxu0 0.0
      %1026 = vmatpush.xpose.msra.mxu0 0.0
      %1027 = vmatpush.xpose.msra.mxu0 0.0
      %1028 = vmatpush.xpose.msra.mxu0 0.0
      %1029 = vmatpush.xpose.msra.mxu0 0.0
      %1030 = vmatpush.xpose.msra.mxu0 0.0
      %1031 = vmatpush.xpose.msra.mxu0 0.0
      %1032 = vmatpush.xpose.msra.mxu0 %v1017
      %1033 = vmatpush.xpose.msra.mxu0 %v1015
      %1034 = vmatpush.xpose.msra.mxu0 %v1013
      %1035 = vmatmul.f32.gmra.mxu0 %v1007
      %v1036 = vpop.f32.mrf.mxu0
      %v1037 = vadd.f32 0.0, %v1036
      %1038 = vmatmul.f32.gmra.mxu0 %v1009
      %v1039 = vpop.f32.mrf.mxu0
      %v1040 = vadd.f32 0.0, %v1039
      %1041 = vmatmul.f32.gmra.mxu0 %v1011
      %v1042 = vpop.f32.mrf.mxu0
      %v1043 = vadd.f32 0.0, %v1042
      %1044 = vdwg.mxu0
      %v1045 = vmul.f32 %v1037, 0.25
      %v1046 = vmul.f32 %v1040, 0.25
      %v1047 = vmul.f32 %v1043, 0.25
      %v1048 = vsel %vm727, %v1045, -1e+30
      %v1049 = vsel %vm727, %v1046, -1e+30
      %v1050 = vsel %vm727, %v1047, -1e+30
      %v1051 = vsel %vm917, %v1048, -inf
      %1052 = vmax.xlane.f32.xlu0 %v1051
      %v1053 = vpop.xlane.xlu0 %1052
      %v1054 = vsel %vm917, %v1049, -inf
      %1055 = vmax.xlane.f32.xlu0 %v1054
      %v1056 = vpop.xlane.xlu0 %1055
      %v1057 = vsel %vm917, %v1050, -inf
      %1058 = vmax.xlane.f32.xlu0 %v1057
      %v1059 = vpop.xlane.xlu0 %1058
      %v1060 = vsub.f32 %v1048, %v1053
      %v1061 = vsub.f32 %v1049, %v1056
      %v1062 = vsub.f32 %v1050, %v1059
      %v1063 = vmul.f32 %v1060, 1.442695
      %v1064 = vpow.pop %v1063
      %v1065 = vmul.f32 %v1061, 1.442695
      %v1066 = vpow.pop %v1065
      %v1067 = vmul.f32 %v1062, 1.442695
      %v1068 = vpow.pop %v1067
      %v1069 = vsel %vm917, %v1064, 0.0
      %1070 = vadd.xlane.f32.xlu0 %v1069
      %v1071 = vpop.xlane.xlu0 %1070
      %v1072 = vsel %vm917, %v1066, 0.0
      %1073 = vadd.xlane.f32.xlu0 %v1072
      %v1074 = vpop.xlane.xlu0 %1073
      %v1075 = vsel %vm917, %v1068, 0.0
      %1076 = vadd.xlane.f32.xlu0 %v1075
      %v1077 = vpop.xlane.xlu0 %1076
      %v1078 = vrcp.pop %v1071
      %v1079 = vrcp.pop %v1074
      %v1080 = vrcp.pop %v1077
      %v1081 = vmul.f32 %v1064, %v1078
      %v1082 = vmul.f32 %v1066, %v1079
      %v1083 = vmul.f32 %v1068, %v1080
      %1084 = vrot.lane.b32.xlu0 %v851, 48
      %v1085 = vpop.permute.xlu0 %1084
      %1086 = vrot.lane.b32.xlu0 %v854, 48
      %v1087 = vpop.permute.xlu0 %1086
      %1088 = vrot.lane.b32.xlu0 %v857, 48
      %v1089 = vpop.permute.xlu0 %1088
      %v1094 = vsel %vm917, %v1081, 0
      %v1097 = vsel %vm917, %v1082, 0
      %v1100 = vsel %vm917, %v1083, 0
      %1102 = vmatpush.msra.mxu0 0.0
      %1103 = vmatpush.msra.mxu0 0.0
      %1104 = vmatpush.msra.mxu0 0.0
      %1105 = vmatpush.msra.mxu0 0.0
      %1106 = vmatpush.msra.mxu0 0.0
      %1107 = vmatpush.msra.mxu0 0.0
      %1108 = vmatpush.msra.mxu0 0.0
      %1109 = vmatpush.msra.mxu0 0.0
      %1110 = vmatpush.msra.mxu0 0.0
      %1111 = vmatpush.msra.mxu0 0.0
      %1112 = vmatpush.msra.mxu0 0.0
      %1113 = vmatpush.msra.mxu0 0.0
      %1114 = vmatpush.msra.mxu0 0.0
      %1115 = vmatpush.msra.mxu0 %v1089
      %1116 = vmatpush.msra.mxu0 %v1087
      %1117 = vmatpush.msra.mxu0 %v1085
      %1118 = vmatmul.f32.gmra.mxu0 %v1094
      %v1119 = vpop.f32.mrf.mxu0
      %v1120 = vadd.f32 0.0, %v1119
      %1121 = vmatmul.f32.gmra.mxu0 %v1097
      %v1122 = vpop.f32.mrf.mxu0
      %v1123 = vadd.f32 0.0, %v1122
      %1124 = vmatmul.f32.gmra.mxu0 %v1100
      %v1125 = vpop.f32.mrf.mxu0
      %v1126 = vadd.f32 0.0, %v1125
      %1127 = vdwg.mxu0
      %v1129 = vsel %vm872, %v1120, 0
      %v1132 = vsel %vm872, %v1123, 0
      %v1135 = vsel %vm872, %v1126, 0
      %1137 = vmatpush.msra.mxu0 0.0
      %1138 = vmatpush.msra.mxu0 0.0
      %1139 = vmatpush.msra.mxu0 0.0
      %1140 = vmatpush.msra.mxu0 0.0
      %1141 = vmatpush.msra.mxu0 0.0
      %1142 = vmatpush.msra.mxu0 0.0
      %1143 = vmatpush.msra.mxu0 0.0
      %1144 = vmatpush.msra.mxu0 0.0
      %1145 = vmatpush.msra.mxu0 0.0
      %1146 = vmatpush.msra.mxu0 0.0
      %1147 = vmatpush.msra.mxu0 0.0
      %1148 = vmatpush.msra.mxu0 0.0
      %1149 = vmatpush.msra.mxu0 0.0
      %1150 = vmatpush.msra.mxu0 0.0
      %1151 = vmatpush.msra.mxu0 %v862
      %1152 = vmatpush.msra.mxu0 %v861
      %1153 = vmatmul.f32.gmra.mxu0 %v1129
      %v1154 = vpop.f32.mrf.mxu0
      %v1155 = vadd.f32 0.0, %v1154
      %1156 = vmatmul.f32.gmra.mxu0 %v1132
      %v1157 = vpop.f32.mrf.mxu0
      %v1158 = vadd.f32 0.0, %v1157
      %1159 = vmatmul.f32.gmra.mxu0 %v1135
      %v1160 = vpop.f32.mrf.mxu0
      %v1161 = vadd.f32 0.0, %v1160
      %1162 = vdwg.mxu0
      %v1164 = vsel %vm872, %v987, 0
      %v1167 = vsel %vm872, %v990, 0
      %v1170 = vsel %vm872, %v993, 0
      %1172 = vmatpush.msra.mxu0 0.0
      %1173 = vmatpush.msra.mxu0 0.0
      %1174 = vmatpush.msra.mxu0 0.0
      %1175 = vmatpush.msra.mxu0 0.0
      %1176 = vmatpush.msra.mxu0 0.0
      %1177 = vmatpush.msra.mxu0 0.0
      %1178 = vmatpush.msra.mxu0 0.0
      %1179 = vmatpush.msra.mxu0 0.0
      %1180 = vmatpush.msra.mxu0 0.0
      %1181 = vmatpush.msra.mxu0 0.0
      %1182 = vmatpush.msra.mxu0 0.0
      %1183 = vmatpush.msra.mxu0 0.0
      %1184 = vmatpush.msra.mxu0 0.0
      %1185 = vmatpush.msra.mxu0 0.0
      %1186 = vmatpush.msra.mxu0 %v860
      %1187 = vmatpush.msra.mxu0 %v859
      %1188 = vmatmul.f32.gmra.mxu0 %v1164
      %v1189 = vpop.f32.mrf.mxu0
      %v1190 = vadd.f32 %v1155, %v1189
      %1191 = vmatmul.f32.gmra.mxu0 %v1167
      %v1192 = vpop.f32.mrf.mxu0
      %v1193 = vadd.f32 %v1158, %v1192
      %1194 = vmatmul.f32.gmra.mxu0 %v1170
      %v1195 = vpop.f32.mrf.mxu0
      %v1196 = vadd.f32 %v1161, %v1195
      %1197 = vdwg.mxu0
      %v1198 = vadd.f32 %v717, %v1190
      %v1199 = vadd.f32 %v720, %v1193
      %v1200 = vadd.f32 %v723, %v1196
      %v1201 = vld [vmem:[%s8] sm:$0x1]
      %v1203 = vperm.slane %v1201, 0
      %v1205 = vadd.f32 %v1198, %v1203
      %v1206 = vadd.f32 %v1199, %v1203
      %v1207 = vadd.f32 %v1200, %v1203
      %v1208 = vld [vmem:[%s9] sm:$0x1]
      %v1209 = vld [vmem:[%s10] sm:$0x1]
      %v1210 = vsel %vm730, %v1205, 0.0
      %1211 = vadd.xlane.f32.xlu0 %v1210
      %v1212 = vpop.xlane.xlu0 %1211
      %v1213 = vsel %vm730, %v1206, 0.0
      %1214 = vadd.xlane.f32.xlu0 %v1213
      %v1215 = vpop.xlane.xlu0 %1214
      %v1216 = vsel %vm730, %v1207, 0.0
      %1217 = vadd.xlane.f32.xlu0 %v1216
      %v1218 = vpop.xlane.xlu0 %1217
      %v1219 = vmul.f32 %v1212, %v746
      %v1220 = vmul.f32 %v1215, %v746
      %v1221 = vmul.f32 %v1218, %v746
      %v1222 = vsub.f32 %v1205, %v1219
      %v1223 = vsub.f32 %v1206, %v1220
      %v1224 = vsub.f32 %v1207, %v1221
      %v1225 = vmul.f32 %v1222, %v1222
      %v1226 = vmul.f32 %v1223, %v1223
      %v1227 = vmul.f32 %v1224, %v1224
      %v1228 = vsel %vm730, %v1225, 0.0
      %1229 = vadd.xlane.f32.xlu0 %v1228
      %v1230 = vpop.xlane.xlu0 %1229
      %v1231 = vsel %vm730, %v1226, 0.0
      %1232 = vadd.xlane.f32.xlu0 %v1231
      %v1233 = vpop.xlane.xlu0 %1232
      %v1234 = vsel %vm730, %v1227, 0.0
      %1235 = vadd.xlane.f32.xlu0 %v1234
      %v1236 = vpop.xlane.xlu0 %1235
      %v1237 = vmul.f32 %v1230, %v746
      %v1238 = vmul.f32 %v1233, %v746
      %v1239 = vmul.f32 %v1236, %v746
      %v1240 = vadd.f32 %v1237, 1e-06
      %v1241 = vadd.f32 %v1238, 1e-06
      %v1242 = vadd.f32 %v1239, 1e-06
      %v1243 = vrsqrt.pop %v1240
      %v1244 = vmul.f32 %v1243, %v1240
      %v1245 = vmul.f32 %v1244, %v1243
      %v1246 = vmul.f32 0.5, %v1245
      %v1247 = vsub.f32 1.5, %v1246
      %v1248 = vmul.f32 %v1243, %v1247
      %vm1249 = vweird.f32 %v1240
      %vm1250 = vweird.f32 %v1243
      %vm1251 = vmor %vm1249, %vm1250
      %v1252 = vsel %vm1251, %v1243, %v1248
      %v1253 = vrsqrt.pop %v1241
      %v1254 = vmul.f32 %v1253, %v1241
      %v1255 = vmul.f32 %v1254, %v1253
      %v1256 = vmul.f32 0.5, %v1255
      %v1257 = vsub.f32 1.5, %v1256
      %v1258 = vmul.f32 %v1253, %v1257
      %vm1259 = vweird.f32 %v1241
      %vm1260 = vweird.f32 %v1253
      %vm1261 = vmor %vm1259, %vm1260
      %v1262 = vsel %vm1261, %v1253, %v1258
      %v1263 = vrsqrt.pop %v1242
      %v1264 = vmul.f32 %v1263, %v1242
      %v1265 = vmul.f32 %v1264, %v1263
      %v1266 = vmul.f32 0.5, %v1265
      %v1267 = vsub.f32 1.5, %v1266
      %v1268 = vmul.f32 %v1263, %v1267
      %vm1269 = vweird.f32 %v1242
      %vm1270 = vweird.f32 %v1263
      %vm1271 = vmor %vm1269, %vm1270
      %v1272 = vsel %vm1271, %v1263, %v1268
      %v1273 = vmul.f32 %v1222, %v1252
      %v1274 = vmul.f32 %v1223, %v1262
      %v1275 = vmul.f32 %v1224, %v1272
      %v1277 = vperm.slane %v1208, 0
      %v1279 = vmul.f32 %v1273, %v1277
      %v1280 = vmul.f32 %v1274, %v1277
      %v1281 = vmul.f32 %v1275, %v1277
      %v1283 = vperm.slane %v1209, 0
      %v1285 = vadd.f32 %v1279, %v1283
      %v1286 = vadd.f32 %v1280, %v1283
      %v1287 = vadd.f32 %v1281, %v1283
      %v1288 = vld [vmem:[%s11] sm:$0xff]
      %v1289 = vld [vmem:[%s11 + $0x8] sm:$0xff]
      %v1290 = vld [vmem:[%s11 + $0x10] sm:$0xff]
      %v1291 = vld [vmem:[%s11 + $0x18] sm:$0xff]
      %v1292 = vld [vmem:[%s12] sm:$0x1]
      %v1294 = vperm.slane %v1292, 0
      %v1297 = vsel %vm730, %v1285, 0
      %v1300 = vsel %vm730, %v1286, 0
      %v1303 = vsel %vm730, %v1287, 0
      %1305 = vmatpush.msra.mxu0 0.0
      %1306 = vmatpush.msra.mxu0 0.0
      %1307 = vmatpush.msra.mxu0 0.0
      %1308 = vmatpush.msra.mxu0 0.0
      %1309 = vmatpush.msra.mxu0 0.0
      %1310 = vmatpush.msra.mxu0 0.0
      %1311 = vmatpush.msra.mxu0 0.0
      %1312 = vmatpush.msra.mxu0 0.0
      %1313 = vmatpush.msra.mxu0 0.0
      %1314 = vmatpush.msra.mxu0 0.0
      %1315 = vmatpush.msra.mxu0 0.0
      %1316 = vmatpush.msra.mxu0 0.0
      %1317 = vmatpush.msra.mxu0 %v1291
      %1318 = vmatpush.msra.mxu0 %v1290
      %1319 = vmatpush.msra.mxu0 %v1289
      %1320 = vmatpush.msra.mxu0 %v1288
      %1321 = vmatmul.f32.gmra.mxu0 %v1297
      %v1322 = vpop.f32.mrf.mxu0
      %v1323 = vadd.f32 %v1294, %v1322
      %1324 = vmatmul.f32.gmra.mxu0 %v1300
      %v1325 = vpop.f32.mrf.mxu0
      %v1326 = vadd.f32 %v1294, %v1325
      %1327 = vmatmul.f32.gmra.mxu0 %v1303
      %v1328 = vpop.f32.mrf.mxu0
      %v1329 = vadd.f32 %v1294, %v1328
      %1330 = vdwg.mxu0
      %v1331 = vmul.f32 %v1323, 0.5
      %v1332 = vmul.f32 %v1326, 0.5
      %v1333 = vmul.f32 %v1329, 0.5
      %v1334 = vmul.f32 %v1323, 0.044715
      %v1335 = vmul.f32 %v1326, 0.044715
      %v1336 = vmul.f32 %v1329, 0.044715
      %v1337 = vmul.f32 %v1334, %v1323
      %v1338 = vmul.f32 %v1335, %v1326
      %v1339 = vmul.f32 %v1336, %v1329
      %v1340 = vmul.f32 %v1337, %v1323
      %v1341 = vmul.f32 %v1338, %v1326
      %v1342 = vmul.f32 %v1339, %v1329
      %v1343 = vadd.f32 %v1323, %v1340
      %v1344 = vadd.f32 %v1326, %v1341
      %v1345 = vadd.f32 %v1329, %v1342
      %v1346 = vmul.f32 %v1343, 0.7978846
      %v1347 = vmul.f32 %v1344, 0.7978846
      %v1348 = vmul.f32 %v1345, 0.7978846
      %v1349 = vtanh.pop %v1346
      %v1350 = vtanh.pop %v1347
      %v1351 = vtanh.pop %v1348
      %v1352 = vadd.f32 %v1349, 1.0
      %v1353 = vadd.f32 %v1350, 1.0
      %v1354 = vadd.f32 %v1351, 1.0
      %v1355 = vmul.f32 %v1331, %v1352
      %v1356 = vmul.f32 %v1332, %v1353
      %v1357 = vmul.f32 %v1333, %v1354
      %v1358 = vld [vmem:[%s13] sm:$0xff]
      %v1359 = vld [vmem:[%s13 + $0x8] sm:$0xff]
      %v1360 = vld [vmem:[%s13 + $0x10] sm:$0xff]
      %v1361 = vld [vmem:[%s13 + $0x18] sm:$0xff]
      %v1362 = vld [vmem:[%s13 + $0x20] sm:$0xff]
      %v1363 = vld [vmem:[%s13 + $0x28] sm:$0xff]
      %v1364 = vld [vmem:[%s13 + $0x30] sm:$0xff]
      %v1365 = vld [vmem:[%s13 + $0x38] sm:$0xff]
      %v1366 = vld [vmem:[%s13 + $0x40] sm:$0xff]
      %v1367 = vld [vmem:[%s13 + $0x48] sm:$0xff]
      %v1368 = vld [vmem:[%s13 + $0x50] sm:$0xff]
      %v1369 = vld [vmem:[%s13 + $0x58] sm:$0xff]
      %v1370 = vld [vmem:[%s13 + $0x60] sm:$0xff]
      %v1371 = vld [vmem:[%s13 + $0x68] sm:$0xff]
      %v1372 = vld [vmem:[%s13 + $0x70] sm:$0xff]
      %v1373 = vld [vmem:[%s13 + $0x78] sm:$0xff]
      %v1374 = vld [vmem:[%s14] sm:$0x1]
      %v1376 = vperm.slane %v1374, 0
      %1378 = vmatpush.msra.mxu0 %v1373
      %1379 = vmatpush.msra.mxu0 %v1372
      %1380 = vmatpush.msra.mxu0 %v1371
      %1381 = vmatpush.msra.mxu0 %v1370
      %1382 = vmatpush.msra.mxu0 %v1369
      %1383 = vmatpush.msra.mxu0 %v1368
      %1384 = vmatpush.msra.mxu0 %v1367
      %1385 = vmatpush.msra.mxu0 %v1366
      %1386 = vmatpush.msra.mxu0 %v1365
      %1387 = vmatpush.msra.mxu0 %v1364
      %1388 = vmatpush.msra.mxu0 %v1363
      %1389 = vmatpush.msra.mxu0 %v1362
      %1390 = vmatpush.msra.mxu0 %v1361
      %1391 = vmatpush.msra.mxu0 %v1360
      %1392 = vmatpush.msra.mxu0 %v1359
      %1393 = vmatpush.msra.mxu0 %v1358
      %1394 = vmatmul.f32.gmra.mxu0 %v1355
      %v1395 = vpop.f32.mrf.mxu0
      %v1396 = vadd.f32 %v1376, %v1395
      %1397 = vmatmul.f32.gmra.mxu0 %v1356
      %v1398 = vpop.f32.mrf.mxu0
      %v1399 = vadd.f32 %v1376, %v1398
      %1400 = vmatmul.f32.gmra.mxu0 %v1357
      %v1401 = vpop.f32.mrf.mxu0
      %v1402 = vadd.f32 %v1376, %v1401
      %1403 = vdwg.mxu0
      %v1404 = vadd.f32 %v1205, %v1396
      %v1405 = vadd.f32 %v1206, %v1399
      %v1406 = vadd.f32 %v1207, %v1402
      %s1407 = scalar_lea.vmem %s3, 1
      %v1408 = vld [vmem:[%s1407] sm:$0x1]
      %s1409 = scalar_lea.vmem %s4, 1
      %v1410 = vld [vmem:[%s1409] sm:$0x1]
      %v1411 = vsel %vm730, %v1404, 0.0
      %1412 = vadd.xlane.f32.xlu0 %v1411
      %v1413 = vpop.xlane.xlu0 %1412
      %v1414 = vsel %vm730, %v1405, 0.0
      %1415 = vadd.xlane.f32.xlu0 %v1414
      %v1416 = vpop.xlane.xlu0 %1415
      %v1417 = vsel %vm730, %v1406, 0.0
      %1418 = vadd.xlane.f32.xlu0 %v1417
      %v1419 = vpop.xlane.xlu0 %1418
      %v1420 = vmul.f32 %v1413, %v746
      %v1421 = vmul.f32 %v1416, %v746
      %v1422 = vmul.f32 %v1419, %v746
      %v1423 = vsub.f32 %v1404, %v1420
      %v1424 = vsub.f32 %v1405, %v1421
      %v1425 = vsub.f32 %v1406, %v1422
      %v1426 = vmul.f32 %v1423, %v1423
      %v1427 = vmul.f32 %v1424, %v1424
      %v1428 = vmul.f32 %v1425, %v1425
      %v1429 = vsel %vm730, %v1426, 0.0
      %1430 = vadd.xlane.f32.xlu0 %v1429
      %v1431 = vpop.xlane.xlu0 %1430
      %v1432 = vsel %vm730, %v1427, 0.0
      %1433 = vadd.xlane.f32.xlu0 %v1432
      %v1434 = vpop.xlane.xlu0 %1433
      %v1435 = vsel %vm730, %v1428, 0.0
      %1436 = vadd.xlane.f32.xlu0 %v1435
      %v1437 = vpop.xlane.xlu0 %1436
      %v1438 = vmul.f32 %v1431, %v746
      %v1439 = vmul.f32 %v1434, %v746
      %v1440 = vmul.f32 %v1437, %v746
      %v1441 = vadd.f32 %v1438, 1e-06
      %v1442 = vadd.f32 %v1439, 1e-06
      %v1443 = vadd.f32 %v1440, 1e-06
      %v1444 = vrsqrt.pop %v1441
      %v1445 = vmul.f32 %v1444, %v1441
      %v1446 = vmul.f32 %v1445, %v1444
      %v1447 = vmul.f32 0.5, %v1446
      %v1448 = vsub.f32 1.5, %v1447
      %v1449 = vmul.f32 %v1444, %v1448
      %vm1450 = vweird.f32 %v1441
      %vm1451 = vweird.f32 %v1444
      %vm1452 = vmor %vm1450, %vm1451
      %v1453 = vsel %vm1452, %v1444, %v1449
      %v1454 = vrsqrt.pop %v1442
      %v1455 = vmul.f32 %v1454, %v1442
      %v1456 = vmul.f32 %v1455, %v1454
      %v1457 = vmul.f32 0.5, %v1456
      %v1458 = vsub.f32 1.5, %v1457
      %v1459 = vmul.f32 %v1454, %v1458
      %vm1460 = vweird.f32 %v1442
      %vm1461 = vweird.f32 %v1454
      %vm1462 = vmor %vm1460, %vm1461
      %v1463 = vsel %vm1462, %v1454, %v1459
      %v1464 = vrsqrt.pop %v1443
      %v1465 = vmul.f32 %v1464, %v1443
      %v1466 = vmul.f32 %v1465, %v1464
      %v1467 = vmul.f32 0.5, %v1466
      %v1468 = vsub.f32 1.5, %v1467
      %v1469 = vmul.f32 %v1464, %v1468
      %vm1470 = vweird.f32 %v1443
      %vm1471 = vweird.f32 %v1464
      %vm1472 = vmor %vm1470, %vm1471
      %v1473 = vsel %vm1472, %v1464, %v1469
      %v1474 = vmul.f32 %v1423, %v1453
      %v1475 = vmul.f32 %v1424, %v1463
      %v1476 = vmul.f32 %v1425, %v1473
      %v1478 = vperm.slane %v1408, 0
      %v1480 = vmul.f32 %v1474, %v1478
      %v1481 = vmul.f32 %v1475, %v1478
      %v1482 = vmul.f32 %v1476, %v1478
      %v1484 = vperm.slane %v1410, 0
      %v1486 = vadd.f32 %v1480, %v1484
      %v1487 = vadd.f32 %v1481, %v1484
      %v1488 = vadd.f32 %v1482, %v1484
      %s1489 = scalar_lea.vmem %s5, 32
      %v1490 = vld [vmem:[%s1489] sm:$0xff]
      %v1491 = vld [vmem:[%s1489 + $0x8] sm:$0xff]
      %v1492 = vld [vmem:[%s1489 + $0x10] sm:$0xff]
      %v1493 = vld [vmem:[%s1489 + $0x18] sm:$0xff]
      %s1494 = scalar_lea.vmem %s6, 1
      %v1495 = vld [vmem:[%s1494] sm:$0x1]
      %v1497 = vperm.slane %v1495, 0
      %v1500 = vsel %vm730, %v1486, 0
      %v1503 = vsel %vm730, %v1487, 0
      %v1506 = vsel %vm730, %v1488, 0
      %1508 = vmatpush.msra.mxu0 0.0
      %1509 = vmatpush.msra.mxu0 0.0
      %1510 = vmatpush.msra.mxu0 0.0
      %1511 = vmatpush.msra.mxu0 0.0
      %1512 = vmatpush.msra.mxu0 0.0
      %1513 = vmatpush.msra.mxu0 0.0
      %1514 = vmatpush.msra.mxu0 0.0
      %1515 = vmatpush.msra.mxu0 0.0
      %1516 = vmatpush.msra.mxu0 0.0
      %1517 = vmatpush.msra.mxu0 0.0
      %1518 = vmatpush.msra.mxu0 0.0
      %1519 = vmatpush.msra.mxu0 0.0
      %1520 = vmatpush.msra.mxu0 %v1493
      %1521 = vmatpush.msra.mxu0 %v1492
      %1522 = vmatpush.msra.mxu0 %v1491
      %1523 = vmatpush.msra.mxu0 %v1490
      %1524 = vmatmul.f32.gmra.mxu0 %v1500
      %v1525 = vpop.f32.mrf.mxu0
      %v1526 = vadd.f32 %v1497, %v1525
      %1527 = vmatmul.f32.gmra.mxu0 %v1503
      %v1528 = vpop.f32.mrf.mxu0
      %v1529 = vadd.f32 %v1497, %v1528
      %1530 = vmatmul.f32.gmra.mxu0 %v1506
      %v1531 = vpop.f32.mrf.mxu0
      %v1532 = vadd.f32 %v1497, %v1531
      %1533 = vdwg.mxu0
      %s1534 = scalar_lea.vmem %s7, 32
      %v1535 = vld [vmem:[%s1534] sm:$0xff]
      %v1536 = vld [vmem:[%s1534 + $0x8] sm:$0xff]
      %v1537 = vld [vmem:[%s1534 + $0x10] sm:$0xff]
      %v1538 = vld [vmem:[%s1534 + $0x18] sm:$0xff]
      %1542 = vrot.lane.b32.xlu0 %v1526, 96
      %v1543 = vpop.permute.xlu0 %1542
      %1544 = vrot.lane.b32.xlu0 %v1529, 96
      %v1545 = vpop.permute.xlu0 %1544
      %1546 = vrot.lane.b32.xlu0 %v1532, 96
      %v1547 = vpop.permute.xlu0 %1546
      %v1548 = vsel %vm872, %v1526, 0
      %v1550 = vsel %vm872, %v1529, 0
      %v1552 = vsel %vm872, %v1532, 0
      %v1554 = vsel %vm872, %v1543, 0
      %v1556 = vsel %vm872, %v1545, 0
      %v1558 = vsel %vm872, %v1547, 0
      %1560 = vmatpush.xpose.msra.mxu0 0.0
      %1561 = vmatpush.xpose.msra.mxu0 0.0
      %1562 = vmatpush.xpose.msra.mxu0 0.0
      %1563 = vmatpush.xpose.msra.mxu0 0.0
      %1564 = vmatpush.xpose.msra.mxu0 0.0
      %1565 = vmatpush.xpose.msra.mxu0 0.0
      %1566 = vmatpush.xpose.msra.mxu0 0.0
      %1567 = vmatpush.xpose.msra.mxu0 0.0
      %1568 = vmatpush.xpose.msra.mxu0 0.0
      %1569 = vmatpush.xpose.msra.mxu0 0.0
      %1570 = vmatpush.xpose.msra.mxu0 0.0
      %1571 = vmatpush.xpose.msra.mxu0 0.0
      %1572 = vmatpush.xpose.msra.mxu0 0.0
      %1573 = vmatpush.xpose.msra.mxu0 %v1558
      %1574 = vmatpush.xpose.msra.mxu0 %v1556
      %1575 = vmatpush.xpose.msra.mxu0 %v1554
      %1576 = vmatmul.f32.gmra.mxu0 %v1548
      %v1577 = vpop.f32.mrf.mxu0
      %v1578 = vadd.f32 0.0, %v1577
      %1579 = vmatmul.f32.gmra.mxu0 %v1550
      %v1580 = vpop.f32.mrf.mxu0
      %v1581 = vadd.f32 0.0, %v1580
      %1582 = vmatmul.f32.gmra.mxu0 %v1552
      %v1583 = vpop.f32.mrf.mxu0
      %v1584 = vadd.f32 0.0, %v1583
      %1585 = vdwg.mxu0
      %v1586 = vmul.f32 %v1578, 0.25
      %v1587 = vmul.f32 %v1581, 0.25
      %v1588 = vmul.f32 %v1584, 0.25
      %v1589 = vsel %vm727, %v1586, -1e+30
      %v1590 = vsel %vm727, %v1587, -1e+30
      %v1591 = vsel %vm727, %v1588, -1e+30
      %v1592 = vsel %vm917, %v1589, -inf
      %1593 = vmax.xlane.f32.xlu0 %v1592
      %v1594 = vpop.xlane.xlu0 %1593
      %v1595 = vsel %vm917, %v1590, -inf
      %1596 = vmax.xlane.f32.xlu0 %v1595
      %v1597 = vpop.xlane.xlu0 %1596
      %v1598 = vsel %vm917, %v1591, -inf
      %1599 = vmax.xlane.f32.xlu0 %v1598
      %v1600 = vpop.xlane.xlu0 %1599
      %v1601 = vsub.f32 %v1589, %v1594
      %v1602 = vsub.f32 %v1590, %v1597
      %v1603 = vsub.f32 %v1591, %v1600
      %v1604 = vmul.f32 %v1601, 1.442695
      %v1605 = vpow.pop %v1604
      %v1606 = vmul.f32 %v1602, 1.442695
      %v1607 = vpow.pop %v1606
      %v1608 = vmul.f32 %v1603, 1.442695
      %v1609 = vpow.pop %v1608
      %v1610 = vsel %vm917, %v1605, 0.0
      %1611 = vadd.xlane.f32.xlu0 %v1610
      %v1612 = vpop.xlane.xlu0 %1611
      %v1613 = vsel %vm917, %v1607, 0.0
      %1614 = vadd.xlane.f32.xlu0 %v1613
      %v1615 = vpop.xlane.xlu0 %1614
      %v1616 = vsel %vm917, %v1609, 0.0
      %1617 = vadd.xlane.f32.xlu0 %v1616
      %v1618 = vpop.xlane.xlu0 %1617
      %v1619 = vrcp.pop %v1612
      %v1620 = vrcp.pop %v1615
      %v1621 = vrcp.pop %v1618
      %v1622 = vmul.f32 %v1605, %v1619
      %v1623 = vmul.f32 %v1607, %v1620
      %v1624 = vmul.f32 %v1609, %v1621
      %1625 = vrot.lane.b32.xlu0 %v1526, 64
      %v1626 = vpop.permute.xlu0 %1625
      %1627 = vrot.lane.b32.xlu0 %v1529, 64
      %v1628 = vpop.permute.xlu0 %1627
      %1629 = vrot.lane.b32.xlu0 %v1532, 64
      %v1630 = vpop.permute.xlu0 %1629
      %v1635 = vsel %vm917, %v1622, 0
      %v1638 = vsel %vm917, %v1623, 0
      %v1641 = vsel %vm917, %v1624, 0
      %1643 = vmatpush.msra.mxu0 0.0
      %1644 = vmatpush.msra.mxu0 0.0
      %1645 = vmatpush.msra.mxu0 0.0
      %1646 = vmatpush.msra.mxu0 0.0
      %1647 = vmatpush.msra.mxu0 0.0
      %1648 = vmatpush.msra.mxu0 0.0
      %1649 = vmatpush.msra.mxu0 0.0
      %1650 = vmatpush.msra.mxu0 0.0
      %1651 = vmatpush.msra.mxu0 0.0
      %1652 = vmatpush.msra.mxu0 0.0
      %1653 = vmatpush.msra.mxu0 0.0
      %1654 = vmatpush.msra.mxu0 0.0
      %1655 = vmatpush.msra.mxu0 0.0
      %1656 = vmatpush.msra.mxu0 %v1630
      %1657 = vmatpush.msra.mxu0 %v1628
      %1658 = vmatpush.msra.mxu0 %v1626
      %1659 = vmatmul.f32.gmra.mxu0 %v1635
      %v1660 = vpop.f32.mrf.mxu0
      %v1661 = vadd.f32 0.0, %v1660
      %1662 = vmatmul.f32.gmra.mxu0 %v1638
      %v1663 = vpop.f32.mrf.mxu0
      %v1664 = vadd.f32 0.0, %v1663
      %1665 = vmatmul.f32.gmra.mxu0 %v1641
      %v1666 = vpop.f32.mrf.mxu0
      %v1667 = vadd.f32 0.0, %v1666
      %1668 = vdwg.mxu0
      %1669 = vrot.lane.b32.xlu0 %v1526, 112
      %v1670 = vpop.permute.xlu0 %1669
      %1671 = vrot.lane.b32.xlu0 %v1529, 112
      %v1672 = vpop.permute.xlu0 %1671
      %1673 = vrot.lane.b32.xlu0 %v1532, 112
      %v1674 = vpop.permute.xlu0 %1673
      %1675 = vrot.lane.b32.xlu0 %v1526, 80
      %v1676 = vpop.permute.xlu0 %1675
      %1677 = vrot.lane.b32.xlu0 %v1529, 80
      %v1678 = vpop.permute.xlu0 %1677
      %1679 = vrot.lane.b32.xlu0 %v1532, 80
      %v1680 = vpop.permute.xlu0 %1679
      %v1681 = vsel %vm872, %v1670, 0
      %v1683 = vsel %vm872, %v1672, 0
      %v1685 = vsel %vm872, %v1674, 0
      %v1687 = vsel %vm872, %v1676, 0
      %v1689 = vsel %vm872, %v1678, 0
      %v1691 = vsel %vm872, %v1680, 0
      %1693 = vmatpush.xpose.msra.mxu0 0.0
      %1694 = vmatpush.xpose.msra.mxu0 0.0
      %1695 = vmatpush.xpose.msra.mxu0 0.0
      %1696 = vmatpush.xpose.msra.mxu0 0.0
      %1697 = vmatpush.xpose.msra.mxu0 0.0
      %1698 = vmatpush.xpose.msra.mxu0 0.0
      %1699 = vmatpush.xpose.msra.mxu0 0.0
      %1700 = vmatpush.xpose.msra.mxu0 0.0
      %1701 = vmatpush.xpose.msra.mxu0 0.0
      %1702 = vmatpush.xpose.msra.mxu0 0.0
      %1703 = vmatpush.xpose.msra.mxu0 0.0
      %1704 = vmatpush.xpose.msra.mxu0 0.0
      %1705 = vmatpush.xpose.msra.mxu0 0.0
      %1706 = vmatpush.xpose.msra.mxu0 %v1691
      %1707 = vmatpush.xpose.msra.mxu0 %v1689
      %1708 = vmatpush.xpose.msra.mxu0 %v1687
      %1709 = vmatmul.f32.gmra.mxu0 %v1681
      %v1710 = vpop.f32.mrf.mxu0
      %v1711 = vadd.f32 0.0, %v1710
      %1712 = vmatmul.f32.gmra.mxu0 %v1683
      %v1713 = vpop.f32.mrf.mxu0
      %v1714 = vadd.f32 0.0, %v1713
      %1715 = vmatmul.f32.gmra.mxu0 %v1685
      %v1716 = vpop.f32.mrf.mxu0
      %v1717 = vadd.f32 0.0, %v1716
      %1718 = vdwg.mxu0
      %v1719 = vmul.f32 %v1711, 0.25
      %v1720 = vmul.f32 %v1714, 0.25
      %v1721 = vmul.f32 %v1717, 0.25
      %v1722 = vsel %vm727, %v1719, -1e+30
      %v1723 = vsel %vm727, %v1720, -1e+30
      %v1724 = vsel %vm727, %v1721, -1e+30
      %v1725 = vsel %vm917, %v1722, -inf
      %1726 = vmax.xlane.f32.xlu0 %v1725
      %v1727 = vpop.xlane.xlu0 %1726
      %v1728 = vsel %vm917, %v1723, -inf
      %1729 = vmax.xlane.f32.xlu0 %v1728
      %v1730 = vpop.xlane.xlu0 %1729
      %v1731 = vsel %vm917, %v1724, -inf
      %1732 = vmax.xlane.f32.xlu0 %v1731
      %v1733 = vpop.xlane.xlu0 %1732
      %v1734 = vsub.f32 %v1722, %v1727
      %v1735 = vsub.f32 %v1723, %v1730
      %v1736 = vsub.f32 %v1724, %v1733
      %v1737 = vmul.f32 %v1734, 1.442695
      %v1738 = vpow.pop %v1737
      %v1739 = vmul.f32 %v1735, 1.442695
      %v1740 = vpow.pop %v1739
      %v1741 = vmul.f32 %v1736, 1.442695
      %v1742 = vpow.pop %v1741
      %v1743 = vsel %vm917, %v1738, 0.0
      %1744 = vadd.xlane.f32.xlu0 %v1743
      %v1745 = vpop.xlane.xlu0 %1744
      %v1746 = vsel %vm917, %v1740, 0.0
      %1747 = vadd.xlane.f32.xlu0 %v1746
      %v1748 = vpop.xlane.xlu0 %1747
      %v1749 = vsel %vm917, %v1742, 0.0
      %1750 = vadd.xlane.f32.xlu0 %v1749
      %v1751 = vpop.xlane.xlu0 %1750
      %v1752 = vrcp.pop %v1745
      %v1753 = vrcp.pop %v1748
      %v1754 = vrcp.pop %v1751
      %v1755 = vmul.f32 %v1738, %v1752
      %v1756 = vmul.f32 %v1740, %v1753
      %v1757 = vmul.f32 %v1742, %v1754
      %1758 = vrot.lane.b32.xlu0 %v1526, 48
      %v1759 = vpop.permute.xlu0 %1758
      %1760 = vrot.lane.b32.xlu0 %v1529, 48
      %v1761 = vpop.permute.xlu0 %1760
      %1762 = vrot.lane.b32.xlu0 %v1532, 48
      %v1763 = vpop.permute.xlu0 %1762
      %v1768 = vsel %vm917, %v1755, 0
      %v1771 = vsel %vm917, %v1756, 0
      %v1774 = vsel %vm917, %v1757, 0
      %1776 = vmatpush.msra.mxu0 0.0
      %1777 = vmatpush.msra.mxu0 0.0
      %1778 = vmatpush.msra.mxu0 0.0
      %1779 = vmatpush.msra.mxu0 0.0
      %1780 = vmatpush.msra.mxu0 0.0
      %1781 = vmatpush.msra.mxu0 0.0
      %1782 = vmatpush.msra.mxu0 0.0
      %1783 = vmatpush.msra.mxu0 0.0
      %1784 = vmatpush.msra.mxu0 0.0
      %1785 = vmatpush.msra.mxu0 0.0
      %1786 = vmatpush.msra.mxu0 0.0
      %1787 = vmatpush.msra.mxu0 0.0
      %1788 = vmatpush.msra.mxu0 0.0
      %1789 = vmatpush.msra.mxu0 %v1763
      %1790 = vmatpush.msra.mxu0 %v1761
      %1791 = vmatpush.msra.mxu0 %v1759
      %1792 = vmatmul.f32.gmra.mxu0 %v1768
      %v1793 = vpop.f32.mrf.mxu0
      %v1794 = vadd.f32 0.0, %v1793
      %1795 = vmatmul.f32.gmra.mxu0 %v1771
      %v1796 = vpop.f32.mrf.mxu0
      %v1797 = vadd.f32 0.0, %v1796
      %1798 = vmatmul.f32.gmra.mxu0 %v1774
      %v1799 = vpop.f32.mrf.mxu0
      %v1800 = vadd.f32 0.0, %v1799
      %1801 = vdwg.mxu0
      %v1803 = vsel %vm872, %v1794, 0
      %v1806 = vsel %vm872, %v1797, 0
      %v1809 = vsel %vm872, %v1800, 0
      %1811 = vmatpush.msra.mxu0 0.0
      %1812 = vmatpush.msra.mxu0 0.0
      %1813 = vmatpush.msra.mxu0 0.0
      %1814 = vmatpush.msra.mxu0 0.0
      %1815 = vmatpush.msra.mxu0 0.0
      %1816 = vmatpush.msra.mxu0 0.0
      %1817 = vmatpush.msra.mxu0 0.0
      %1818 = vmatpush.msra.mxu0 0.0
      %1819 = vmatpush.msra.mxu0 0.0
      %1820 = vmatpush.msra.mxu0 0.0
      %1821 = vmatpush.msra.mxu0 0.0
      %1822 = vmatpush.msra.mxu0 0.0
      %1823 = vmatpush.msra.mxu0 0.0
      %1824 = vmatpush.msra.mxu0 0.0
      %1825 = vmatpush.msra.mxu0 %v1538
      %1826 = vmatpush.msra.mxu0 %v1537
      %1827 = vmatmul.f32.gmra.mxu0 %v1803
      %v1828 = vpop.f32.mrf.mxu0
      %v1829 = vadd.f32 0.0, %v1828
      %1830 = vmatmul.f32.gmra.mxu0 %v1806
      %v1831 = vpop.f32.mrf.mxu0
      %v1832 = vadd.f32 0.0, %v1831
      %1833 = vmatmul.f32.gmra.mxu0 %v1809
      %v1834 = vpop.f32.mrf.mxu0
      %v1835 = vadd.f32 0.0, %v1834
      %1836 = vdwg.mxu0
      %v1838 = vsel %vm872, %v1661, 0
      %v1841 = vsel %vm872, %v1664, 0
      %v1844 = vsel %vm872, %v1667, 0
      %1846 = vmatpush.msra.mxu0 0.0
      %1847 = vmatpush.msra.mxu0 0.0
      %1848 = vmatpush.msra.mxu0 0.0
      %1849 = vmatpush.msra.mxu0 0.0
      %1850 = vmatpush.msra.mxu0 0.0
      %1851 = vmatpush.msra.mxu0 0.0
      %1852 = vmatpush.msra.mxu0 0.0
      %1853 = vmatpush.msra.mxu0 0.0
      %1854 = vmatpush.msra.mxu0 0.0
      %1855 = vmatpush.msra.mxu0 0.0
      %1856 = vmatpush.msra.mxu0 0.0
      %1857 = vmatpush.msra.mxu0 0.0
      %1858 = vmatpush.msra.mxu0 0.0
      %1859 = vmatpush.msra.mxu0 0.0
      %1860 = vmatpush.msra.mxu0 %v1536
      %1861 = vmatpush.msra.mxu0 %v1535
      %1862 = vmatmul.f32.gmra.mxu0 %v1838
      %v1863 = vpop.f32.mrf.mxu0
      %v1864 = vadd.f32 %v1829, %v1863
      %1865 = vmatmul.f32.gmra.mxu0 %v1841
      %v1866 = vpop.f32.mrf.mxu0
      %v1867 = vadd.f32 %v1832, %v1866
      %1868 = vmatmul.f32.gmra.mxu0 %v1844
      %v1869 = vpop.f32.mrf.mxu0
      %v1870 = vadd.f32 %v1835, %v1869
      %1871 = vdwg.mxu0
      %v1872 = vadd.f32 %v1404, %v1864
      %v1873 = vadd.f32 %v1405, %v1867
      %v1874 = vadd.f32 %v1406, %v1870
      %s1875 = scalar_lea.vmem %s8, 1
      %v1876 = vld [vmem:[%s1875] sm:$0x1]
      %v1878 = vperm.slane %v1876, 0
      %v1880 = vadd.f32 %v1872, %v1878
      %v1881 = vadd.f32 %v1873, %v1878
      %v1882 = vadd.f32 %v1874, %v1878
      %s1883 = scalar_lea.vmem %s9, 1
      %v1884 = vld [vmem:[%s1883] sm:$0x1]
      %s1885 = scalar_lea.vmem %s10, 1
      %v1886 = vld [vmem:[%s1885] sm:$0x1]
      %v1887 = vsel %vm730, %v1880, 0.0
      %1888 = vadd.xlane.f32.xlu0 %v1887
      %v1889 = vpop.xlane.xlu0 %1888
      %v1890 = vsel %vm730, %v1881, 0.0
      %1891 = vadd.xlane.f32.xlu0 %v1890
      %v1892 = vpop.xlane.xlu0 %1891
      %v1893 = vsel %vm730, %v1882, 0.0
      %1894 = vadd.xlane.f32.xlu0 %v1893
      %v1895 = vpop.xlane.xlu0 %1894
      %v1896 = vmul.f32 %v1889, %v746
      %v1897 = vmul.f32 %v1892, %v746
      %v1898 = vmul.f32 %v1895, %v746
      %v1899 = vsub.f32 %v1880, %v1896
      %v1900 = vsub.f32 %v1881, %v1897
      %v1901 = vsub.f32 %v1882, %v1898
      %v1902 = vmul.f32 %v1899, %v1899
      %v1903 = vmul.f32 %v1900, %v1900
      %v1904 = vmul.f32 %v1901, %v1901
      %v1905 = vsel %vm730, %v1902, 0.0
      %1906 = vadd.xlane.f32.xlu0 %v1905
      %v1907 = vpop.xlane.xlu0 %1906
      %v1908 = vsel %vm730, %v1903, 0.0
      %1909 = vadd.xlane.f32.xlu0 %v1908
      %v1910 = vpop.xlane.xlu0 %1909
      %v1911 = vsel %vm730, %v1904, 0.0
      %1912 = vadd.xlane.f32.xlu0 %v1911
      %v1913 = vpop.xlane.xlu0 %1912
      %v1914 = vmul.f32 %v1907, %v746
      %v1915 = vmul.f32 %v1910, %v746
      %v1916 = vmul.f32 %v1913, %v746
      %v1917 = vadd.f32 %v1914, 1e-06
      %v1918 = vadd.f32 %v1915, 1e-06
      %v1919 = vadd.f32 %v1916, 1e-06
      %v1920 = vrsqrt.pop %v1917
      %v1921 = vmul.f32 %v1920, %v1917
      %v1922 = vmul.f32 %v1921, %v1920
      %v1923 = vmul.f32 0.5, %v1922
      %v1924 = vsub.f32 1.5, %v1923
      %v1925 = vmul.f32 %v1920, %v1924
      %vm1926 = vweird.f32 %v1917
      %vm1927 = vweird.f32 %v1920
      %vm1928 = vmor %vm1926, %vm1927
      %v1929 = vsel %vm1928, %v1920, %v1925
      %v1930 = vrsqrt.pop %v1918
      %v1931 = vmul.f32 %v1930, %v1918
      %v1932 = vmul.f32 %v1931, %v1930
      %v1933 = vmul.f32 0.5, %v1932
      %v1934 = vsub.f32 1.5, %v1933
      %v1935 = vmul.f32 %v1930, %v1934
      %vm1936 = vweird.f32 %v1918
      %vm1937 = vweird.f32 %v1930
      %vm1938 = vmor %vm1936, %vm1937
      %v1939 = vsel %vm1938, %v1930, %v1935
      %v1940 = vrsqrt.pop %v1919
      %v1941 = vmul.f32 %v1940, %v1919
      %v1942 = vmul.f32 %v1941, %v1940
      %v1943 = vmul.f32 0.5, %v1942
      %v1944 = vsub.f32 1.5, %v1943
      %v1945 = vmul.f32 %v1940, %v1944
      %vm1946 = vweird.f32 %v1919
      %vm1947 = vweird.f32 %v1940
      %vm1948 = vmor %vm1946, %vm1947
      %v1949 = vsel %vm1948, %v1940, %v1945
      %v1950 = vmul.f32 %v1899, %v1929
      %v1951 = vmul.f32 %v1900, %v1939
      %v1952 = vmul.f32 %v1901, %v1949
      %v1954 = vperm.slane %v1884, 0
      %v1956 = vmul.f32 %v1950, %v1954
      %v1957 = vmul.f32 %v1951, %v1954
      %v1958 = vmul.f32 %v1952, %v1954
      %v1960 = vperm.slane %v1886, 0
      %v1962 = vadd.f32 %v1956, %v1960
      %v1963 = vadd.f32 %v1957, %v1960
      %v1964 = vadd.f32 %v1958, %v1960
      %s1965 = scalar_lea.vmem %s11, 32
      %v1966 = vld [vmem:[%s1965] sm:$0xff]
      %v1967 = vld [vmem:[%s1965 + $0x8] sm:$0xff]
      %v1968 = vld [vmem:[%s1965 + $0x10] sm:$0xff]
      %v1969 = vld [vmem:[%s1965 + $0x18] sm:$0xff]
      %s1970 = scalar_lea.vmem %s12, 1
      %v1971 = vld [vmem:[%s1970] sm:$0x1]
      %v1973 = vperm.slane %v1971, 0
      %v1976 = vsel %vm730, %v1962, 0
      %v1979 = vsel %vm730, %v1963, 0
      %v1982 = vsel %vm730, %v1964, 0
      %1984 = vmatpush.msra.mxu0 0.0
      %1985 = vmatpush.msra.mxu0 0.0
      %1986 = vmatpush.msra.mxu0 0.0
      %1987 = vmatpush.msra.mxu0 0.0
      %1988 = vmatpush.msra.mxu0 0.0
      %1989 = vmatpush.msra.mxu0 0.0
      %1990 = vmatpush.msra.mxu0 0.0
      %1991 = vmatpush.msra.mxu0 0.0
      %1992 = vmatpush.msra.mxu0 0.0
      %1993 = vmatpush.msra.mxu0 0.0
      %1994 = vmatpush.msra.mxu0 0.0
      %1995 = vmatpush.msra.mxu0 0.0
      %1996 = vmatpush.msra.mxu0 %v1969
      %1997 = vmatpush.msra.mxu0 %v1968
      %1998 = vmatpush.msra.mxu0 %v1967
      %1999 = vmatpush.msra.mxu0 %v1966
      %2000 = vmatmul.f32.gmra.mxu0 %v1976
      %v2001 = vpop.f32.mrf.mxu0
      %v2002 = vadd.f32 %v1973, %v2001
      %2003 = vmatmul.f32.gmra.mxu0 %v1979
      %v2004 = vpop.f32.mrf.mxu0
      %v2005 = vadd.f32 %v1973, %v2004
      %2006 = vmatmul.f32.gmra.mxu0 %v1982
      %v2007 = vpop.f32.mrf.mxu0
      %v2008 = vadd.f32 %v1973, %v2007
      %2009 = vdwg.mxu0
      %v2010 = vmul.f32 %v2002, 0.5
      %v2011 = vmul.f32 %v2005, 0.5
      %v2012 = vmul.f32 %v2008, 0.5
      %v2013 = vmul.f32 %v2002, 0.044715
      %v2014 = vmul.f32 %v2005, 0.044715
      %v2015 = vmul.f32 %v2008, 0.044715
      %v2016 = vmul.f32 %v2013, %v2002
      %v2017 = vmul.f32 %v2014, %v2005
      %v2018 = vmul.f32 %v2015, %v2008
      %v2019 = vmul.f32 %v2016, %v2002
      %v2020 = vmul.f32 %v2017, %v2005
      %v2021 = vmul.f32 %v2018, %v2008
      %v2022 = vadd.f32 %v2002, %v2019
      %v2023 = vadd.f32 %v2005, %v2020
      %v2024 = vadd.f32 %v2008, %v2021
      %v2025 = vmul.f32 %v2022, 0.7978846
      %v2026 = vmul.f32 %v2023, 0.7978846
      %v2027 = vmul.f32 %v2024, 0.7978846
      %v2028 = vtanh.pop %v2025
      %v2029 = vtanh.pop %v2026
      %v2030 = vtanh.pop %v2027
      %v2031 = vadd.f32 %v2028, 1.0
      %v2032 = vadd.f32 %v2029, 1.0
      %v2033 = vadd.f32 %v2030, 1.0
      %v2034 = vmul.f32 %v2010, %v2031
      %v2035 = vmul.f32 %v2011, %v2032
      %v2036 = vmul.f32 %v2012, %v2033
      %s2037 = scalar_lea.vmem %s13, 128
      %v2038 = vld [vmem:[%s2037] sm:$0xff]
      %v2039 = vld [vmem:[%s2037 + $0x8] sm:$0xff]
      %v2040 = vld [vmem:[%s2037 + $0x10] sm:$0xff]
      %v2041 = vld [vmem:[%s2037 + $0x18] sm:$0xff]
      %v2042 = vld [vmem:[%s2037 + $0x20] sm:$0xff]
      %v2043 = vld [vmem:[%s2037 + $0x28] sm:$0xff]
      %v2044 = vld [vmem:[%s2037 + $0x30] sm:$0xff]
      %v2045 = vld [vmem:[%s2037 + $0x38] sm:$0xff]
      %v2046 = vld [vmem:[%s2037 + $0x40] sm:$0xff]
      %v2047 = vld [vmem:[%s2037 + $0x48] sm:$0xff]
      %v2048 = vld [vmem:[%s2037 + $0x50] sm:$0xff]
      %v2049 = vld [vmem:[%s2037 + $0x58] sm:$0xff]
      %v2050 = vld [vmem:[%s2037 + $0x60] sm:$0xff]
      %v2051 = vld [vmem:[%s2037 + $0x68] sm:$0xff]
      %v2052 = vld [vmem:[%s2037 + $0x70] sm:$0xff]
      %v2053 = vld [vmem:[%s2037 + $0x78] sm:$0xff]
      %s2054 = scalar_lea.vmem %s14, 1
      %v2055 = vld [vmem:[%s2054] sm:$0x1]
      %v2057 = vperm.slane %v2055, 0
      %2059 = vmatpush.msra.mxu0 %v2053
      %2060 = vmatpush.msra.mxu0 %v2052
      %2061 = vmatpush.msra.mxu0 %v2051
      %2062 = vmatpush.msra.mxu0 %v2050
      %2063 = vmatpush.msra.mxu0 %v2049
      %2064 = vmatpush.msra.mxu0 %v2048
      %2065 = vmatpush.msra.mxu0 %v2047
      %2066 = vmatpush.msra.mxu0 %v2046
      %2067 = vmatpush.msra.mxu0 %v2045
      %2068 = vmatpush.msra.mxu0 %v2044
      %2069 = vmatpush.msra.mxu0 %v2043
      %2070 = vmatpush.msra.mxu0 %v2042
      %2071 = vmatpush.msra.mxu0 %v2041
      %2072 = vmatpush.msra.mxu0 %v2040
      %2073 = vmatpush.msra.mxu0 %v2039
      %2074 = vmatpush.msra.mxu0 %v2038
      %2075 = vmatmul.f32.gmra.mxu0 %v2034
      %v2076 = vpop.f32.mrf.mxu0
      %v2077 = vadd.f32 %v2057, %v2076
      %2078 = vmatmul.f32.gmra.mxu0 %v2035
      %v2079 = vpop.f32.mrf.mxu0
      %v2080 = vadd.f32 %v2057, %v2079
      %2081 = vmatmul.f32.gmra.mxu0 %v2036
      %v2082 = vpop.f32.mrf.mxu0
      %v2083 = vadd.f32 %v2057, %v2082
      %2084 = vdwg.mxu0
      %v2085 = vadd.f32 %v1880, %v2077
      %v2086 = vadd.f32 %v1881, %v2080
      %v2087 = vadd.f32 %v1882, %v2083
      %v2088 = vld [vmem:[%s15] sm:$0x1]
      %v2089 = vld [vmem:[%s16] sm:$0x1]
      %v2090 = vsel %vm730, %v2085, 0.0
      %2091 = vadd.xlane.f32.xlu0 %v2090
      %v2092 = vpop.xlane.xlu0 %2091
      %v2093 = vsel %vm730, %v2086, 0.0
      %2094 = vadd.xlane.f32.xlu0 %v2093
      %v2095 = vpop.xlane.xlu0 %2094
      %v2096 = vsel %vm730, %v2087, 0.0
      %2097 = vadd.xlane.f32.xlu0 %v2096
      %v2098 = vpop.xlane.xlu0 %2097
      %v2099 = vmul.f32 %v2092, %v746
      %v2100 = vmul.f32 %v2095, %v746
      %v2101 = vmul.f32 %v2098, %v746
      %v2102 = vsub.f32 %v2085, %v2099
      %v2103 = vsub.f32 %v2086, %v2100
      %v2104 = vsub.f32 %v2087, %v2101
      %v2105 = vmul.f32 %v2102, %v2102
      %v2106 = vmul.f32 %v2103, %v2103
      %v2107 = vmul.f32 %v2104, %v2104
      %v2108 = vsel %vm730, %v2105, 0.0
      %2109 = vadd.xlane.f32.xlu0 %v2108
      %v2110 = vpop.xlane.xlu0 %2109
      %v2111 = vsel %vm730, %v2106, 0.0
      %2112 = vadd.xlane.f32.xlu0 %v2111
      %v2113 = vpop.xlane.xlu0 %2112
      %v2114 = vsel %vm730, %v2107, 0.0
      %2115 = vadd.xlane.f32.xlu0 %v2114
      %v2116 = vpop.xlane.xlu0 %2115
      %v2117 = vmul.f32 %v2110, %v746
      %v2118 = vmul.f32 %v2113, %v746
      %v2119 = vmul.f32 %v2116, %v746
      %v2120 = vadd.f32 %v2117, 1e-06
      %v2121 = vadd.f32 %v2118, 1e-06
      %v2122 = vadd.f32 %v2119, 1e-06
      %v2123 = vrsqrt.pop %v2120
      %v2124 = vmul.f32 %v2123, %v2120
      %v2125 = vmul.f32 %v2124, %v2123
      %v2126 = vmul.f32 0.5, %v2125
      %v2127 = vsub.f32 1.5, %v2126
      %v2128 = vmul.f32 %v2123, %v2127
      %vm2129 = vweird.f32 %v2120
      %vm2130 = vweird.f32 %v2123
      %vm2131 = vmor %vm2129, %vm2130
      %v2132 = vsel %vm2131, %v2123, %v2128
      %v2133 = vrsqrt.pop %v2121
      %v2134 = vmul.f32 %v2133, %v2121
      %v2135 = vmul.f32 %v2134, %v2133
      %v2136 = vmul.f32 0.5, %v2135
      %v2137 = vsub.f32 1.5, %v2136
      %v2138 = vmul.f32 %v2133, %v2137
      %vm2139 = vweird.f32 %v2121
      %vm2140 = vweird.f32 %v2133
      %vm2141 = vmor %vm2139, %vm2140
      %v2142 = vsel %vm2141, %v2133, %v2138
      %v2143 = vrsqrt.pop %v2122
      %v2144 = vmul.f32 %v2143, %v2122
      %v2145 = vmul.f32 %v2144, %v2143
      %v2146 = vmul.f32 0.5, %v2145
      %v2147 = vsub.f32 1.5, %v2146
      %v2148 = vmul.f32 %v2143, %v2147
      %vm2149 = vweird.f32 %v2122
      %vm2150 = vweird.f32 %v2143
      %vm2151 = vmor %vm2149, %vm2150
      %v2152 = vsel %vm2151, %v2143, %v2148
      %v2153 = vmul.f32 %v2102, %v2132
      %v2154 = vmul.f32 %v2103, %v2142
      %v2155 = vmul.f32 %v2104, %v2152
      %v2157 = vperm.slane %v2088, 0
      %v2159 = vmul.f32 %v2153, %v2157
      %v2160 = vmul.f32 %v2154, %v2157
      %v2161 = vmul.f32 %v2155, %v2157
      %v2163 = vperm.slane %v2089, 0
      %v2165 = vadd.f32 %v2159, %v2163
      %v2166 = vadd.f32 %v2160, %v2163
      %v2167 = vadd.f32 %v2161, %v2163
      %v2168 = vld [vmem:[%s17] sm:$0xf]
      %v2169 = vld [vmem:[%s18] sm:$0xf]
      %2171 = vset.pattern.permute.xlu0 0
      %2172 = vperm.xlu0 %2171, %v2169
      %v2173 = vpop.permute.xlu0 %2172
      %vm2178 = vcmask 1046528
      %v2179 = vrot.slane %v2165, 1
      %v2180 = vrot.slane %v2166, 1
      %v2181 = vsel %vm2178, %v2179, %v2180
      %v2182 = vrot.slane %v2167, 1
      %v2183 = vsel %vm2178, %v2180, %v2182
      %v2185 = vsel %vm730, %v2168, 0
      %v2187 = vsel %vm730, %v2181, 0
      %v2189 = vsel %vm730, %v2183, 0
      %2191 = vmatpush.xpose.msra.mxu0 0.0
      %2192 = vmatpush.xpose.msra.mxu0 0.0
      %2193 = vmatpush.xpose.msra.mxu0 0.0
      %2194 = vmatpush.xpose.msra.mxu0 0.0
      %2195 = vmatpush.xpose.msra.mxu0 0.0
      %2196 = vmatpush.xpose.msra.mxu0 0.0
      %2197 = vmatpush.xpose.msra.mxu0 0.0
      %2198 = vmatpush.xpose.msra.mxu0 0.0
      %2199 = vmatpush.xpose.msra.mxu0 0.0
      %2200 = vmatpush.xpose.msra.mxu0 0.0
      %2201 = vmatpush.xpose.msra.mxu0 0.0
      %2202 = vmatpush.xpose.msra.mxu0 0.0
      %2203 = vmatpush.xpose.msra.mxu0 0.0
      %2204 = vmatpush.xpose.msra.mxu0 0.0
      %2205 = vmatpush.xpose.msra.mxu0 %v2189
      %2206 = vmatpush.xpose.msra.mxu0 %v2187
      %2207 = vmatmul.f32.gmra.mxu0 %v2185
      %v2208 = vpop.f32.mrf.mxu0
      %v2209 = vadd.f32 %v2173, %v2208
      %2210 = vdwg.mxu0
      %v2211 = vld [vmem:[%s19] sm:$0xff]
      %v2212 = vld [vmem:[%s19 + $0x8] sm:$0xff]
      %v2213 = vld [vmem:[%s19 + $0x10] sm:$0xff]
      %v2214 = vld [vmem:[%s19 + $0x18] sm:$0xff]
      %v2215 = vld [vmem:[%s19 + $0x20] sm:$0xff]
      %v2216 = vld [vmem:[%s19 + $0x28] sm:$0xff]
      %v2217 = vld [vmem:[%s19 + $0x30] sm:$0xff]
      %v2218 = vld [vmem:[%s19 + $0x38] sm:$0xff]
      %v2219 = vld [vmem:[%s19 + $0x40] sm:$0xff]
      %v2220 = vld [vmem:[%s19 + $0x48] sm:$0xff]
      %v2221 = vld [vmem:[%s19 + $0x50] sm:$0xff]
      %v2222 = vld [vmem:[%s19 + $0x58] sm:$0xff]
      %v2223 = vld [vmem:[%s19 + $0x60] sm:$0xff]
      %v2224 = vld [vmem:[%s19 + $0x68] sm:$0xff]
      %v2225 = vld [vmem:[%s19 + $0x70] sm:$0xff]
      %v2226 = vld [vmem:[%s19 + $0x78] sm:$0xff]
      %v2228 = vsel %vm872, %v2209, 0
      %2230 = vmatpush.msra.mxu0 0.0
      %2231 = vmatpush.msra.mxu0 0.0
      %2232 = vmatpush.msra.mxu0 0.0
      %2233 = vmatpush.msra.mxu0 0.0
      %2234 = vmatpush.msra.mxu0 0.0
      %2235 = vmatpush.msra.mxu0 0.0
      %2236 = vmatpush.msra.mxu0 0.0
      %2237 = vmatpush.msra.mxu0 0.0
      %2238 = vmatpush.msra.mxu0 0.0
      %2239 = vmatpush.msra.mxu0 0.0
      %2240 = vmatpush.msra.mxu0 0.0
      %2241 = vmatpush.msra.mxu0 0.0
      %2242 = vmatpush.msra.mxu0 0.0
      %2243 = vmatpush.msra.mxu0 0.0
      %2244 = vmatpush.msra.mxu0 %v2219
      %2245 = vmatpush.msra.mxu0 %v2211
      %2246 = vmatmul.f32.gmra.mxu0 %v2228
      %v2247 = vpop.f32.mrf.mxu0
      %v2248 = vadd.f32 0.0, %v2247
      %2249 = vdwg.mxu0
      %2250 = vmatpush.msra.mxu0 0.0
      %2251 = vmatpush.msra.mxu0 0.0
      %2252 = vmatpush.msra.mxu0 0.0
      %2253 = vmatpush.msra.mxu0 0.0
      %2254 = vmatpush.msra.mxu0 0.0
      %2255 = vmatpush.msra.mxu0 0.0
      %2256 = vmatpush.msra.mxu0 0.0
      %2257 = vmatpush.msra.mxu0 0.0
      %2258 = vmatpush.msra.mxu0 0.0
      %2259 = vmatpush.msra.mxu0 0.0
      %2260 = vmatpush.msra.mxu0 0.0
      %2261 = vmatpush.msra.mxu0 0.0
      %2262 = vmatpush.msra.mxu0 0.0
      %2263 = vmatpush.msra.mxu0 0.0
      %2264 = vmatpush.msra.mxu0 %v2220
      %2265 = vmatpush.msra.mxu0 %v2212
      %2266 = vmatmul.f32.gmra.mxu0 %v2228
      %v2267 = vpop.f32.mrf.mxu0
      %v2268 = vadd.f32 0.0, %v2267
      %2269 = vdwg.mxu0
      %2270 = vmatpush.msra.mxu0 0.0
      %2271 = vmatpush.msra.mxu0 0.0
      %2272 = vmatpush.msra.mxu0 0.0
      %2273 = vmatpush.msra.mxu0 0.0
      %2274 = vmatpush.msra.mxu0 0.0
      %2275 = vmatpush.msra.mxu0 0.0
      %2276 = vmatpush.msra.mxu0 0.0
      %2277 = vmatpush.msra.mxu0 0.0
      %2278 = vmatpush.msra.mxu0 0.0
      %2279 = vmatpush.msra.mxu0 0.0
      %2280 = vmatpush.msra.mxu0 0.0
      %2281 = vmatpush.msra.mxu0 0.0
      %2282 = vmatpush.msra.mxu0 0.0
      %2283 = vmatpush.msra.mxu0 0.0
      %2284 = vmatpush.msra.mxu0 %v2221
      %2285 = vmatpush.msra.mxu0 %v2213
      %2286 = vmatmul.f32.gmra.mxu0 %v2228
      %v2287 = vpop.f32.mrf.mxu0
      %v2288 = vadd.f32 0.0, %v2287
      %2289 = vdwg.mxu0
      %2290 = vmatpush.msra.mxu0 0.0
      %2291 = vmatpush.msra.mxu0 0.0
      %2292 = vmatpush.msra.mxu0 0.0
      %2293 = vmatpush.msra.mxu0 0.0
      %2294 = vmatpush.msra.mxu0 0.0
      %2295 = vmatpush.msra.mxu0 0.0
      %2296 = vmatpush.msra.mxu0 0.0
      %2297 = vmatpush.msra.mxu0 0.0
      %2298 = vmatpush.msra.mxu0 0.0
      %2299 = vmatpush.msra.mxu0 0.0
      %2300 = vmatpush.msra.mxu0 0.0
      %2301 = vmatpush.msra.mxu0 0.0
      %2302 = vmatpush.msra.mxu0 0.0
      %2303 = vmatpush.msra.mxu0 0.0
      %2304 = vmatpush.msra.mxu0 %v2222
      %2305 = vmatpush.msra.mxu0 %v2214
      %2306 = vmatmul.f32.gmra.mxu0 %v2228
      %v2307 = vpop.f32.mrf.mxu0
      %v2308 = vadd.f32 0.0, %v2307
      %2309 = vdwg.mxu0
      %2310 = vmatpush.msra.mxu0 0.0
      %2311 = vmatpush.msra.mxu0 0.0
      %2312 = vmatpush.msra.mxu0 0.0
      %2313 = vmatpush.msra.mxu0 0.0
      %2314 = vmatpush.msra.mxu0 0.0
      %2315 = vmatpush.msra.mxu0 0.0
      %2316 = vmatpush.msra.mxu0 0.0
      %2317 = vmatpush.msra.mxu0 0.0
      %2318 = vmatpush.msra.mxu0 0.0
      %2319 = vmatpush.msra.mxu0 0.0
      %2320 = vmatpush.msra.mxu0 0.0
      %2321 = vmatpush.msra.mxu0 0.0
      %2322 = vmatpush.msra.mxu0 0.0
      %2323 = vmatpush.msra.mxu0 0.0
      %2324 = vmatpush.msra.mxu0 %v2223
      %2325 = vmatpush.msra.mxu0 %v2215
      %2326 = vmatmul.f32.gmra.mxu0 %v2228
      %v2327 = vpop.f32.mrf.mxu0
      %v2328 = vadd.f32 0.0, %v2327
      %2329 = vdwg.mxu0
      %2330 = vmatpush.msra.mxu0 0.0
      %2331 = vmatpush.msra.mxu0 0.0
      %2332 = vmatpush.msra.mxu0 0.0
      %2333 = vmatpush.msra.mxu0 0.0
      %2334 = vmatpush.msra.mxu0 0.0
      %2335 = vmatpush.msra.mxu0 0.0
      %2336 = vmatpush.msra.mxu0 0.0
      %2337 = vmatpush.msra.mxu0 0.0
      %2338 = vmatpush.msra.mxu0 0.0
      %2339 = vmatpush.msra.mxu0 0.0
      %2340 = vmatpush.msra.mxu0 0.0
      %2341 = vmatpush.msra.mxu0 0.0
      %2342 = vmatpush.msra.mxu0 0.0
      %2343 = vmatpush.msra.mxu0 0.0
      %2344 = vmatpush.msra.mxu0 %v2224
      %2345 = vmatpush.msra.mxu0 %v2216
      %2346 = vmatmul.f32.gmra.mxu0 %v2228
      %v2347 = vpop.f32.mrf.mxu0
      %v2348 = vadd.f32 0.0, %v2347
      %2349 = vdwg.mxu0
      %2350 = vmatpush.msra.mxu0 0.0
      %2351 = vmatpush.msra.mxu0 0.0
      %2352 = vmatpush.msra.mxu0 0.0
      %2353 = vmatpush.msra.mxu0 0.0
      %2354 = vmatpush.msra.mxu0 0.0
      %2355 = vmatpush.msra.mxu0 0.0
      %2356 = vmatpush.msra.mxu0 0.0
      %2357 = vmatpush.msra.mxu0 0.0
      %2358 = vmatpush.msra.mxu0 0.0
      %2359 = vmatpush.msra.mxu0 0.0
      %2360 = vmatpush.msra.mxu0 0.0
      %2361 = vmatpush.msra.mxu0 0.0
      %2362 = vmatpush.msra.mxu0 0.0
      %2363 = vmatpush.msra.mxu0 0.0
      %2364 = vmatpush.msra.mxu0 %v2225
      %2365 = vmatpush.msra.mxu0 %v2217
      %2366 = vmatmul.f32.gmra.mxu0 %v2228
      %v2367 = vpop.f32.mrf.mxu0
      %v2368 = vadd.f32 0.0, %v2367
      %2369 = vdwg.mxu0
      %2370 = vmatpush.msra.mxu0 0.0
      %2371 = vmatpush.msra.mxu0 0.0
      %2372 = vmatpush.msra.mxu0 0.0
      %2373 = vmatpush.msra.mxu0 0.0
      %2374 = vmatpush.msra.mxu0 0.0
      %2375 = vmatpush.msra.mxu0 0.0
      %2376 = vmatpush.msra.mxu0 0.0
      %2377 = vmatpush.msra.mxu0 0.0
      %2378 = vmatpush.msra.mxu0 0.0
      %2379 = vmatpush.msra.mxu0 0.0
      %2380 = vmatpush.msra.mxu0 0.0
      %2381 = vmatpush.msra.mxu0 0.0
      %2382 = vmatpush.msra.mxu0 0.0
      %2383 = vmatpush.msra.mxu0 0.0
      %2384 = vmatpush.msra.mxu0 %v2226
      %2385 = vmatpush.msra.mxu0 %v2218
      %2386 = vmatmul.f32.gmra.mxu0 %v2228
      %v2387 = vpop.f32.mrf.mxu0
      %v2388 = vadd.f32 0.0, %v2387
      %2389 = vdwg.mxu0
      %v2398 = vrot.slane %v2268, 4
      %v2399 = vrot.slane %v2308, 4
      %v2400 = vrot.slane %v2348, 4
      %v2401 = vrot.slane %v2388, 4
      %vm2402 = vcmask 1043456
      %v2403 = vsel %vm2402, %v2248, %v2398
      %v2404 = vsel %vm2402, %v2288, %v2399
      %v2405 = vsel %vm2402, %v2328, %v2400
      %v2406 = vsel %vm2402, %v2368, %v2401
      %2411 = vst [vmem:[%s629] sm:$0xff] %v2403
      %2412 = vst [vmem:[%s629 + $0x8] sm:$0xff] %v2404
      %2413 = vst [vmem:[%s629 + $0x10] sm:$0xff] %v2405
      %2414 = vst [vmem:[%s629 + $0x18] sm:$0xff] %v2406
      %p2415 = scmp.lt.s32.totalorder %s31, 1
      %s2416 = scalar_select %p2415, %s31, 1
      %s2417 = smul.addr %s2416, 8
      %s2418 = smul.addr %s2417, 4
      %s2419 = scalar_lea.vmem %s20, %s2418
      // Predicated region
      $region101: #{segmenter_forward.1} parent=99 // pred_check
        %p2420 = pneg %p474
      $region102: #{segmenter_forward.1} parent=99 // pred_check_branch
        %2422 = sbr.rel (%p2420) target = $region104
      $region103: #{segmenter_forward.1} parent=99 // pred_region
        _
      $region104: #{segmenter_forward.1} parent=99 // pred_fallthru
        _
    $region100: #{segmenter_forward.1} parent=5 // pred_fallthru
      _
    %p2423 = scmp.le.s32.totalorder 2, %s26
    // Predicated region
    $region105: #{segmenter_forward.1} parent=5 // pred_check
      %p2424 = pneg %p2423
    $region106: #{segmenter_forward.1} parent=5 // pred_check_branch
      %2426 = sbr.rel (%p2424) target = $region108
    $region107: #{segmenter_forward.1} parent=5 // pred_region
      %s2427 = ssub.s32 %s26, 2
      // Predicated region
      $region109: #{segmenter_forward.1} parent=107 // pred_check
        %p2428 = pneg %p480
      $region110: #{segmenter_forward.1} parent=107 // pred_check_branch
        %2430 = sbr.rel (%p2428) target = $region112
      $region111: #{segmenter_forward.1} parent=107 // pred_region
        %p2431 = scmp.lt.s32.totalorder %s32, 1
        %s2432 = scalar_select %p2431, %s32, 1
        %s2433 = smul.addr %s2432, 8
        %s2434 = smul.addr %s2433, 4
        %s2435 = scalar_lea.vmem %s20, %s2434
      $region112: #{segmenter_forward.1} parent=107 // pred_fallthru
        _
    $region108: #{segmenter_forward.1} parent=5 // pred_fallthru
      _
  $region6: #{segmenter_forward.1} parent=0 // loop_footer
    %s30 = sadd.s32 1, %s26
  $region7: #{segmenter_forward.1} parent=0 // loop_footer_branch
    %25 = sbr.rel target = $region3
  $region8: #{segmenter_forward.1} parent=0 // loop_exit
    _

</llo_original>
